<compile_context>
chip_gen: v7x
topology: tpu7x:2x2x1
jax: 0.10.0
libtpu: 0.0.40
codegen_flags: <defaults>
</compile_context>

<pallas_src>
import functools

import jax
import jax.numpy as jnp
from jax import lax
from jax.experimental import pallas as pl
from jax.experimental.pallas import tpu as pltpu

KERNEL_SIZE = 3
BN_EPS = 1e-5


def se_res2block_kernel(x_ref, w_ref, b_ref, wse1t_ref, bse1_ref,
                        wse2_ref, bse2_ref, out_ref, acc_ref, *, res2, l_true):
    C, Lp = acc_ref.shape
    Cc = C // res2
    pad = Lp != l_true

    lane = lax.broadcasted_iota(jnp.int32, (Cc, Lp), 1)   # hoisted masks
    mask_prev = lane > 0                 # x[t-1] tap: zero at left boundary
    mask_next = lane < l_true - 1        # x[t+1] tap: zero at right TRUE boundary
    valid = lane < l_true                # only used for the SE time-sum

    prev = None
    sums = []
    for i in range(res2):
        # Per-chunk dequant: bf16 slice -> f32 (no whole-slab f32 live range).
        x_i = x_ref[0, pl.ds(i * Cc, Cc), :].astype(jnp.float32)
        xin = x_i if prev is None else x_i + prev            # Res2 chaining (f32)

        # Shifted taps via XLU roll + boundary masks (no zero-pad concats).
        # roll(shift=1)    -> y[t] = x[t-1] ; roll(shift=Lp-1) -> y[t] = x[t+1]
        x_prev = jnp.where(mask_prev, pltpu.roll(xin, 1, axis=1), 0.0)
        x_next = jnp.where(mask_next, pltpu.roll(xin, Lp - 1, axis=1), 0.0)

        # k=3 conv as three accumulating bf16 MXU dots (no (3Cc,Lp) stack).
        w_i = w_ref[i]                                        # (3, Cc, Cc) bf16
        acc = jnp.dot(w_i[1], xin.astype(jnp.bfloat16),
                      preferred_element_type=jnp.float32)
        acc += jnp.dot(w_i[0], x_prev.astype(jnp.bfloat16),
                       preferred_element_type=jnp.float32)
        acc += jnp.dot(w_i[2], x_next.astype(jnp.bfloat16),
                       preferred_element_type=jnp.float32)
        y = jnp.maximum(acc + b_ref[i], 0.0)                  # folded BN bias + ReLU

        # Chunk goes straight into the per-step f32 accumulator slab.
        acc_ref[pl.ds(i * Cc, Cc), :] = y
        # SE time-sum over the TRUE length only.  The padded tail of y may be
        # junk but (thanks to the tightened mask_next) it never feeds valid
        # columns, and it is excluded here and sliced off at the final store.
        y_sum = jnp.where(valid, y, 0.0) if pad else y
        sums.append(jnp.sum(y_sum, axis=1, keepdims=True))    # (Cc, 1)
        prev = y

    # Squeeze-Excitation, all on the VPU/XLU (no N=1 MXU passes).
    pooled = jnp.concatenate(sums, axis=0) * (1.0 / l_true)              # (C, 1)
    h = jnp.sum(wse1t_ref[...] * pooled, axis=0, keepdims=True)          # (1, SE)
    h = jnp.maximum(h + bse1_ref[...], 0.0)
    s = jnp.sum(wse2_ref[...] * h, axis=1, keepdims=True) + bse2_ref[...]  # (C, 1)
    s = jax.nn.sigmoid(s)

    # Epilogue: sigmoid scale + identity residual, single bf16 store of the
    # true-L columns (no wrapper-side slice round trip).
    out = acc_ref[...] * s + x_ref[0].astype(jnp.float32)
    if pad:
        out = out[:, :l_true]
    out_ref[0] = out.astype(out_ref.dtype)


def _grid_invariant(arr):
    """Full-array block, constant across the grid, single-buffered."""
    nd = arr.ndim

    def imap(b):
        return (0,) * nd

    return pl.BlockSpec(arr.shape, imap, pipeline_mode=pl.Buffered(1))


def _default_vmem_limit():
    # ~48 MiB on v7x (64 MiB physical), ~96 MiB on v5e/v6e (128 MiB physical).
    try:
        cap = int(pltpu.get_tpu_info().vmem_capacity_bytes)
        return min((cap * 3) // 4, 100 * 1024 * 1024)
    except Exception:
        return 48 * 1024 * 1024


def se_res2block(x, w_fold, b_fold, wse1, bse1, wse2, bse2, *, res2_scale):
    B, C, L = x.shape
    assert C % res2_scale == 0, "C must be divisible by res2_scale"
    Cc = C // res2_scale
    assert Cc % 8 == 0, "chunk width must be sublane aligned (multiple of 8)"
    # Cc % 16 == 0 is preferred so bf16 chunk loads stay pack-aligned.
    SE = wse1.shape[0]

    # Pad L to a multiple of 128 for lane-dense loads (single fused pad+cast).
    Lp = max(128, ((L + 127) // 128) * 128)
    x_bf = x.astype(jnp.bfloat16)
    if Lp != L:
        x_bf = jnp.pad(x_bf, ((0, 0), (0, 0), (0, Lp - L)))

    # Per-tap conv weights: (s, out, in, k) -> (s, k, out, in), bf16 for MXU.
    w_taps = jnp.transpose(w_fold, (0, 3, 1, 2)).astype(jnp.bfloat16)
    bconv = b_fold[..., None].astype(jnp.float32)             # (s, out, 1)
    wse1_t = wse1.T.astype(jnp.float32)                       # (C, SE)
    bse1_r = bse1.reshape(1, SE).astype(jnp.float32)          # (1, SE)
    wse2_m = wse2.astype(jnp.float32)                         # (C, SE)
    bse2_c = bse2.astype(jnp.float32)                         # (C, 1)

    kern = functools.partial(se_res2block_kernel, res2=res2_scale, l_true=L)

    flops = int(B * res2_scale * 3 * 2 * Cc * Cc * Lp          # tap dots
                + 2 * 2 * B * C * SE                           # SE reductions
                + 10 * B * C * Lp)                             # elementwise
    bytes_accessed = int(x_bf.size * 2 + B * C * L * 2
                         + w_taps.size * 2
                         + (bconv.size + wse1_t.size + bse1_r.size
                            + wse2_m.size + bse2_c.size) * 4)
    cost = pl.CostEstimate(flops=flops, transcendentals=int(B * C),
                           bytes_accessed=bytes_accessed)

    return pl.pallas_call(
        kern,
        out_shape=jax.ShapeDtypeStruct((B, C, L), jnp.bfloat16),
        grid_spec=pltpu.PrefetchScalarGridSpec(
            num_scalar_prefetch=0,
            grid=(B,),
            in_specs=[
                pl.BlockSpec((1, C, Lp), lambda b: (b, 0, 0)),
                _grid_invariant(w_taps),
                _grid_invariant(bconv),
                _grid_invariant(wse1_t),
                _grid_invariant(bse1_r),
                _grid_invariant(wse2_m),
                _grid_invariant(bse2_c),
            ],
            out_specs=pl.BlockSpec((1, C, L), lambda b: (b, 0, 0)),
            scratch_shapes=[pltpu.VMEM((C, Lp), jnp.float32)],
        ),
        compiler_params=pltpu.CompilerParams(
            dimension_semantics=("parallel",),
            vmem_limit_bytes=_default_vmem_limit(),
        ),
        cost_estimate=cost,
    )(x_bf, w_taps, bconv, wse1_t, bse1_r, wse2_m, bse2_c)


def ref_forward(x, w_fold, b_fold, wse1, bse1, wse2, bse2):
    """Pure-JAX reference matching PyTorch eval-mode semantics (BN folded),
    mirroring the kernel's bf16 quantization of x / conv weights."""
    q = lambda a: a.astype(jnp.bfloat16).astype(jnp.float32)
    x_q = q(x)
    res2 = w_fold.shape[0]
    residual = x_q
    xs = jnp.split(x_q, res2, axis=1)
    prev = None
    outs = []
    for i in range(res2):
        xin = xs[i] if prev is None else xs[i] + prev
        y = lax.conv_general_dilated(
            q(xin), q(w_fold[i]), window_strides=(1,), padding=((1, 1),),
            dimension_numbers=('NCH', 'OIH', 'NCH'))
        y = jnp.maximum(y + b_fold[i][None, :, None], 0.0)
        outs.append(y)
        prev = y
    out = jnp.concatenate(outs, axis=1)
    pooled = out.mean(axis=2, keepdims=True)                  # (B, C, 1)
    s = jnp.einsum('sc,bcl->bsl', wse1, pooled) + bse1[None]
    s = jnp.maximum(s, 0.0)
    s = jnp.einsum('cs,bsl->bcl', wse2, s) + bse2[None]
    s = jax.nn.sigmoid(s)
    return out * s + residual


def make_params(key, C, se_channels, res2_scale):
    """Deterministic params; BatchNorm (eval mode) folded into conv w/b."""
    Cc = C // res2_scale
    ks = jax.random.split(key, 10)
    w_raw = 0.3 * jax.random.normal(ks[0], (res2_scale, Cc, Cc, KERNEL_SIZE), jnp.float32)
    b_raw = 0.1 * jax.random.normal(ks[1], (res2_scale, Cc), jnp.float32)
    gamma = 1.0 + 0.1 * jax.random.normal(ks[2], (res2_scale, Cc), jnp.float32)
    beta = 0.1 * jax.random.normal(ks[3], (res2_scale, Cc), jnp.float32)
    rmean = 0.1 * jax.random.normal(ks[4], (res2_scale, Cc), jnp.float32)
    rvar = 0.5 + jnp.abs(jax.random.normal(ks[5], (res2_scale, Cc), jnp.float32))
    bn_scale = gamma / jnp.sqrt(rvar + BN_EPS)
    w_fold = w_raw * bn_scale[:, :, None, None]               # (s, out, in, k)
    b_fold = (b_raw - rmean) * bn_scale + beta                # (s, out)
    wse1 = 0.1 * jax.random.normal(ks[6], (se_channels, C), jnp.float32)
    bse1 = 0.1 * jax.random.normal(ks[7], (se_channels, 1), jnp.float32)
    wse2 = 0.1 * jax.random.normal(ks[8], (C, se_channels), jnp.float32)
    bse2 = 0.1 * jax.random.normal(ks[9], (C, 1), jnp.float32)
    return w_fold, b_fold, wse1, bse1, wse2, bse2


if __name__ == "__main__":
    B, C, L = 2, 128, 16      # in_channels == out_channels == 128
    RES2 = 8                  # module default res2_scale -> Cc = 16 (bf16 pack aligned)
    SE_CH = 32

    key = jax.random.PRNGKey(0)
    kx, kp = jax.random.split(key)
    x = jax.random.normal(kx, (B, C, L), jnp.float32)
    params = make_params(kp, C, SE_CH, RES2)

    out = jax.block_until_ready(se_res2block(x, *params, res2_scale=RES2))
    ref = jax.block_until_ready(ref_forward(x, *params))

    assert out.shape == (B, C, L)
    assert out.dtype == jnp.bfloat16
    out_f32 = out.astype(jnp.float32)
    err = jnp.max(jnp.abs(out_f32 - ref))
    # bf16 I/O tolerance (reference mirrors the same input/weight quantization;
    # the bf16 output adds <0.5% relative error, covered by rtol).
    assert jnp.allclose(out_f32, ref, atol=3e-2, rtol=3e-2), f"max abs err {err}"

    print("KERNEL_OK")
</pallas_src>

<mosaic_0001>
module attributes {stable_mosaic.version = 11 : i64} {
  func.func @se_res2block_kernel(%arg0: i32, %arg1: memref<1x128x128xbf16, #tpu.memory_space<vmem>>, %arg2: memref<8x3x16x16xbf16, #tpu.memory_space<vmem>>, %arg3: memref<8x16x1xf32, #tpu.memory_space<vmem>>, %arg4: memref<128x32xf32, #tpu.memory_space<vmem>>, %arg5: memref<1x32xf32, #tpu.memory_space<vmem>>, %arg6: memref<128x32xf32, #tpu.memory_space<vmem>>, %arg7: memref<128x1xf32, #tpu.memory_space<vmem>>, %arg8: memref<1x128x16xbf16, #tpu.memory_space<vmem>>, %arg9: memref<128x128xf32, #tpu.memory_space<vmem>>) attributes {dimension_semantics = [#tpu.dimension_semantics<parallel>], iteration_bounds = array<i64: 2>, scalar_prefetch = 0 : i64, scratch_operands = 1 : i64, tpu.core_type = #tpu.core_type<tc>, window_params = [{transform_indices = @transform_0, window_bounds = array<i64: 1, 128, 128>}, {pipeline_mode = #tpu.pipeline_mode<synchronous>, transform_indices = @transform_1, window_bounds = array<i64: 8, 3, 16, 16>}, {pipeline_mode = #tpu.pipeline_mode<synchronous>, transform_indices = @transform_2, window_bounds = array<i64: 8, 16, 1>}, {pipeline_mode = #tpu.pipeline_mode<synchronous>, transform_indices = @transform_3, window_bounds = array<i64: 128, 32>}, {pipeline_mode = #tpu.pipeline_mode<synchronous>, transform_indices = @transform_4, window_bounds = array<i64: 1, 32>}, {pipeline_mode = #tpu.pipeline_mode<synchronous>, transform_indices = @transform_5, window_bounds = array<i64: 128, 32>}, {pipeline_mode = #tpu.pipeline_mode<synchronous>, transform_indices = @transform_6, window_bounds = array<i64: 128, 1>}, {transform_indices = @transform_7, window_bounds = array<i64: 1, 128, 16>}]} {
    %0 = tpu.iota {dimensions = array<i32: 1>} : vector<16x128xi32>
    %c0_i32 = arith.constant 0 : i32
    %1 = vector.broadcast %c0_i32 : i32 to vector<16x128xi32>
    %2 = arith.cmpi sgt, %0, %1 : vector<16x128xi32>
    %c15_i32 = arith.constant 15 : i32
    %3 = vector.broadcast %c15_i32 : i32 to vector<16x128xi32>
    %4 = arith.cmpi slt, %0, %3 : vector<16x128xi32>
    %c16_i32 = arith.constant 16 : i32
    %5 = vector.broadcast %c16_i32 : i32 to vector<16x128xi32>
    %6 = arith.cmpi slt, %0, %5 : vector<16x128xi32>
    %c0 = arith.constant 0 : index
    %c0_0 = arith.constant 0 : index
    %c0_1 = arith.constant 0 : index
    %7 = vector.load %arg1[%c0, %c0_0, %c0_1] : memref<1x128x128xbf16, #tpu.memory_space<vmem>>, vector<1x16x128xbf16>
    %8 = vector.shape_cast %7 : vector<1x16x128xbf16> to vector<16x128xbf16>
    %9 = arith.extf %8 : vector<16x128xbf16> to vector<16x128xf32>
    %c1_i32 = arith.constant 1 : i32
    %10 = tpu.dynamic_rotate %9 by %c1_i32 dim 1 : vector<16x128xf32>, i32 -> vector<16x128xf32>
    %cst = arith.constant 0.000000e+00 : f32
    %11 = vector.broadcast %cst : f32 to vector<16x128xf32>
    %12 = arith.select %2, %10, %11 : vector<16x128xi1>, vector<16x128xf32>
    %c127_i32 = arith.constant 127 : i32
    %13 = tpu.dynamic_rotate %9 by %c127_i32 dim 1 : vector<16x128xf32>, i32 -> vector<16x128xf32>
    %cst_2 = arith.constant 0.000000e+00 : f32
    %14 = vector.broadcast %cst_2 : f32 to vector<16x128xf32>
    %15 = arith.select %4, %13, %14 : vector<16x128xi1>, vector<16x128xf32>
    %c0_3 = arith.constant 0 : index
    %c0_4 = arith.constant 0 : index
    %c0_5 = arith.constant 0 : index
    %c0_6 = arith.constant 0 : index
    %16 = vector.load %arg2[%c0_3, %c0_4, %c0_5, %c0_6] : memref<8x3x16x16xbf16, #tpu.memory_space<vmem>>, vector<1x3x16x16xbf16>
    %17 = vector.shape_cast %16 : vector<1x3x16x16xbf16> to vector<3x16x16xbf16>
    %18 = vector.extract_strided_slice %17 {offsets = [1, 0, 0], sizes = [1, 16, 16], strides = [1, 1, 1]} : vector<3x16x16xbf16> to vector<1x16x16xbf16>
    %19 = vector.shape_cast %18 : vector<1x16x16xbf16> to vector<16x16xbf16>
    %20 = arith.truncf %9 : vector<16x128xf32> to vector<16x128xbf16>
    %cst_7 = arith.constant dense<0.000000e+00> : vector<16x128xf32>
    %21 = tpu.matmul %19, %20, %cst_7 {dimension_numbers = #tpu.dot_dimension_numbers<[1], [0], [0], [1], [0, 0, 1, 1], [], []>} : vector<16x16xbf16>, vector<16x128xbf16>, vector<16x128xf32> -> vector<16x128xf32>
    %22 = vector.extract_strided_slice %17 {offsets = [0, 0, 0], sizes = [1, 16, 16], strides = [1, 1, 1]} : vector<3x16x16xbf16> to vector<1x16x16xbf16>
    %23 = vector.shape_cast %22 : vector<1x16x16xbf16> to vector<16x16xbf16>
    %24 = arith.truncf %12 : vector<16x128xf32> to vector<16x128xbf16>
    %cst_8 = arith.constant dense<0.000000e+00> : vector<16x128xf32>
    %25 = tpu.matmul %23, %24, %cst_8 {dimension_numbers = #tpu.dot_dimension_numbers<[1], [0], [0], [1], [0, 0, 1, 1], [], []>} : vector<16x16xbf16>, vector<16x128xbf16>, vector<16x128xf32> -> vector<16x128xf32>
    %26 = arith.addf %21, %25 : vector<16x128xf32>
    %27 = vector.extract_strided_slice %17 {offsets = [2, 0, 0], sizes = [1, 16, 16], strides = [1, 1, 1]} : vector<3x16x16xbf16> to vector<1x16x16xbf16>
    %28 = vector.shape_cast %27 : vector<1x16x16xbf16> to vector<16x16xbf16>
    %29 = arith.truncf %15 : vector<16x128xf32> to vector<16x128xbf16>
    %cst_9 = arith.constant dense<0.000000e+00> : vector<16x128xf32>
    %30 = tpu.matmul %28, %29, %cst_9 {dimension_numbers = #tpu.dot_dimension_numbers<[1], [0], [0], [1], [0, 0, 1, 1], [], []>} : vector<16x16xbf16>, vector<16x128xbf16>, vector<16x128xf32> -> vector<16x128xf32>
    %31 = arith.addf %26, %30 : vector<16x128xf32>
    %c0_10 = arith.constant 0 : index
    %c0_11 = arith.constant 0 : index
    %c0_12 = arith.constant 0 : index
    %32 = vector.load %arg3[%c0_10, %c0_11, %c0_12] : memref<8x16x1xf32, #tpu.memory_space<vmem>>, vector<1x16x1xf32>
    %33 = vector.shape_cast %32 : vector<1x16x1xf32> to vector<16x1xf32>
    %34 = vector.broadcast %33 : vector<16x1xf32> to vector<16x128xf32>
    %35 = arith.addf %31, %34 : vector<16x128xf32>
    %cst_13 = arith.constant 0.000000e+00 : f32
    %36 = vector.broadcast %cst_13 : f32 to vector<16x128xf32>
    %37 = arith.maximumf %35, %36 : vector<16x128xf32>
    %c0_14 = arith.constant 0 : index
    %c0_15 = arith.constant 0 : index
    %38 = vector.load %arg9[%c0_14, %c0_15] : memref<128x128xf32, #tpu.memory_space<vmem>>, vector<16x128xf32>
    tpu.vector_store %arg9[%c0_14, %c0_15], %37 {strides = array<i32>} : memref<128x128xf32, #tpu.memory_space<vmem>>, vector<16x128xf32>,
    %cst_16 = arith.constant 0.000000e+00 : f32
    %39 = vector.broadcast %cst_16 : f32 to vector<16x128xf32>
    %40 = arith.select %6, %37, %39 : vector<16x128xi1>, vector<16x128xf32>
    %cst_17 = arith.constant dense<0.000000e+00> : vector<16xf32>
    %41 = vector.multi_reduction <add>, %40, %cst_17 [1] : vector<16x128xf32> to vector<16xf32>
    %42 = vector.shape_cast %41 : vector<16xf32> to vector<16x1xf32>
    %c0_18 = arith.constant 0 : index
    %c16 = arith.constant 16 : index
    %c0_19 = arith.constant 0 : index
    %43 = vector.load %arg1[%c0_18, %c16, %c0_19] : memref<1x128x128xbf16, #tpu.memory_space<vmem>>, vector<1x16x128xbf16>
    %44 = vector.shape_cast %43 : vector<1x16x128xbf16> to vector<16x128xbf16>
    %45 = arith.extf %44 : vector<16x128xbf16> to vector<16x128xf32>
    %46 = arith.addf %45, %37 : vector<16x128xf32>
    %c1_i32_20 = arith.constant 1 : i32
    %47 = tpu.dynamic_rotate %46 by %c1_i32_20 dim 1 : vector<16x128xf32>, i32 -> vector<16x128xf32>
    %cst_21 = arith.constant 0.000000e+00 : f32
    %48 = vector.broadcast %cst_21 : f32 to vector<16x128xf32>
    %49 = arith.select %2, %47, %48 : vector<16x128xi1>, vector<16x128xf32>
    %c127_i32_22 = arith.constant 127 : i32
    %50 = tpu.dynamic_rotate %46 by %c127_i32_22 dim 1 : vector<16x128xf32>, i32 -> vector<16x128xf32>
    %cst_23 = arith.constant 0.000000e+00 : f32
    %51 = vector.broadcast %cst_23 : f32 to vector<16x128xf32>
    %52 = arith.select %4, %50, %51 : vector<16x128xi1>, vector<16x128xf32>
    %c1 = arith.constant 1 : index
    %c0_24 = arith.constant 0 : index
    %c0_25 = arith.constant 0 : index
    %c0_26 = arith.constant 0 : index
    %53 = vector.load %arg2[%c1, %c0_24, %c0_25, %c0_26] : memref<8x3x16x16xbf16, #tpu.memory_space<vmem>>, vector<1x3x16x16xbf16>
    %54 = vector.shape_cast %53 : vector<1x3x16x16xbf16> to vector<3x16x16xbf16>
    %55 = vector.extract_strided_slice %54 {offsets = [1, 0, 0], sizes = [1, 16, 16], strides = [1, 1, 1]} : vector<3x16x16xbf16> to vector<1x16x16xbf16>
    %56 = vector.shape_cast %55 : vector<1x16x16xbf16> to vector<16x16xbf16>
    %57 = arith.truncf %46 : vector<16x128xf32> to vector<16x128xbf16>
    %cst_27 = arith.constant dense<0.000000e+00> : vector<16x128xf32>
    %58 = tpu.matmul %56, %57, %cst_27 {dimension_numbers = #tpu.dot_dimension_numbers<[1], [0], [0], [1], [0, 0, 1, 1], [], []>} : vector<16x16xbf16>, vector<16x128xbf16>, vector<16x128xf32> -> vector<16x128xf32>
    %59 = vector.extract_strided_slice %54 {offsets = [0, 0, 0], sizes = [1, 16, 16], strides = [1, 1, 1]} : vector<3x16x16xbf16> to vector<1x16x16xbf16>
    %60 = vector.shape_cast %59 : vector<1x16x16xbf16> to vector<16x16xbf16>
    %61 = arith.truncf %49 : vector<16x128xf32> to vector<16x128xbf16>
    %cst_28 = arith.constant dense<0.000000e+00> : vector<16x128xf32>
    %62 = tpu.matmul %60, %61, %cst_28 {dimension_numbers = #tpu.dot_dimension_numbers<[1], [0], [0], [1], [0, 0, 1, 1], [], []>} : vector<16x16xbf16>, vector<16x128xbf16>, vector<16x128xf32> -> vector<16x128xf32>
    %63 = arith.addf %58, %62 : vector<16x128xf32>
    %64 = vector.extract_strided_slice %54 {offsets = [2, 0, 0], sizes = [1, 16, 16], strides = [1, 1, 1]} : vector<3x16x16xbf16> to vector<1x16x16xbf16>
    %65 = vector.shape_cast %64 : vector<1x16x16xbf16> to vector<16x16xbf16>
    %66 = arith.truncf %52 : vector<16x128xf32> to vector<16x128xbf16>
    %cst_29 = arith.constant dense<0.000000e+00> : vector<16x128xf32>
    %67 = tpu.matmul %65, %66, %cst_29 {dimension_numbers = #tpu.dot_dimension_numbers<[1], [0], [0], [1], [0, 0, 1, 1], [], []>} : vector<16x16xbf16>, vector<16x128xbf16>, vector<16x128xf32> -> vector<16x128xf32>
    %68 = arith.addf %63, %67 : vector<16x128xf32>
    %c1_30 = arith.constant 1 : index
    %c0_31 = arith.constant 0 : index
    %c0_32 = arith.constant 0 : index
    %69 = vector.load %arg3[%c1_30, %c0_31, %c0_32] : memref<8x16x1xf32, #tpu.memory_space<vmem>>, vector<1x16x1xf32>
    %70 = vector.shape_cast %69 : vector<1x16x1xf32> to vector<16x1xf32>
    %71 = vector.broadcast %70 : vector<16x1xf32> to vector<16x128xf32>
    %72 = arith.addf %68, %71 : vector<16x128xf32>
    %cst_33 = arith.constant 0.000000e+00 : f32
    %73 = vector.broadcast %cst_33 : f32 to vector<16x128xf32>
    %74 = arith.maximumf %72, %73 : vector<16x128xf32>
    %c16_34 = arith.constant 16 : index
    %c0_35 = arith.constant 0 : index
    %75 = vector.load %arg9[%c16_34, %c0_35] : memref<128x128xf32, #tpu.memory_space<vmem>>, vector<16x128xf32>
    tpu.vector_store %arg9[%c16_34, %c0_35], %74 {strides = array<i32>} : memref<128x128xf32, #tpu.memory_space<vmem>>, vector<16x128xf32>,
    %cst_36 = arith.constant 0.000000e+00 : f32
    %76 = vector.broadcast %cst_36 : f32 to vector<16x128xf32>
    %77 = arith.select %6, %74, %76 : vector<16x128xi1>, vector<16x128xf32>
    %cst_37 = arith.constant dense<0.000000e+00> : vector<16xf32>
    %78 = vector.multi_reduction <add>, %77, %cst_37 [1] : vector<16x128xf32> to vector<16xf32>
    %79 = vector.shape_cast %78 : vector<16xf32> to vector<16x1xf32>
    %c0_38 = arith.constant 0 : index
    %c32 = arith.constant 32 : index
    %c0_39 = arith.constant 0 : index
    %80 = vector.load %arg1[%c0_38, %c32, %c0_39] : memref<1x128x128xbf16, #tpu.memory_space<vmem>>, vector<1x16x128xbf16>
    %81 = vector.shape_cast %80 : vector<1x16x128xbf16> to vector<16x128xbf16>
    %82 = arith.extf %81 : vector<16x128xbf16> to vector<16x128xf32>
    %83 = arith.addf %82, %74 : vector<16x128xf32>
    %c1_i32_40 = arith.constant 1 : i32
    %84 = tpu.dynamic_rotate %83 by %c1_i32_40 dim 1 : vector<16x128xf32>, i32 -> vector<16x128xf32>
    %cst_41 = arith.constant 0.000000e+00 : f32
    %85 = vector.broadcast %cst_41 : f32 to vector<16x128xf32>
    %86 = arith.select %2, %84, %85 : vector<16x128xi1>, vector<16x128xf32>
    %c127_i32_42 = arith.constant 127 : i32
    %87 = tpu.dynamic_rotate %83 by %c127_i32_42 dim 1 : vector<16x128xf32>, i32 -> vector<16x128xf32>
    %cst_43 = arith.constant 0.000000e+00 : f32
    %88 = vector.broadcast %cst_43 : f32 to vector<16x128xf32>
    %89 = arith.select %4, %87, %88 : vector<16x128xi1>, vector<16x128xf32>
    %c2 = arith.constant 2 : index
    %c0_44 = arith.constant 0 : index
    %c0_45 = arith.constant 0 : index
    %c0_46 = arith.constant 0 : index
    %90 = vector.load %arg2[%c2, %c0_44, %c0_45, %c0_46] : memref<8x3x16x16xbf16, #tpu.memory_space<vmem>>, vector<1x3x16x16xbf16>
    %91 = vector.shape_cast %90 : vector<1x3x16x16xbf16> to vector<3x16x16xbf16>
    %92 = vector.extract_strided_slice %91 {offsets = [1, 0, 0], sizes = [1, 16, 16], strides = [1, 1, 1]} : vector<3x16x16xbf16> to vector<1x16x16xbf16>
    %93 = vector.shape_cast %92 : vector<1x16x16xbf16> to vector<16x16xbf16>
    %94 = arith.truncf %83 : vector<16x128xf32> to vector<16x128xbf16>
    %cst_47 = arith.constant dense<0.000000e+00> : vector<16x128xf32>
    %95 = tpu.matmul %93, %94, %cst_47 {dimension_numbers = #tpu.dot_dimension_numbers<[1], [0], [0], [1], [0, 0, 1, 1], [], []>} : vector<16x16xbf16>, vector<16x128xbf16>, vector<16x128xf32> -> vector<16x128xf32>
    %96 = vector.extract_strided_slice %91 {offsets = [0, 0, 0], sizes = [1, 16, 16], strides = [1, 1, 1]} : vector<3x16x16xbf16> to vector<1x16x16xbf16>
    %97 = vector.shape_cast %96 : vector<1x16x16xbf16> to vector<16x16xbf16>
    %98 = arith.truncf %86 : vector<16x128xf32> to vector<16x128xbf16>
    %cst_48 = arith.constant dense<0.000000e+00> : vector<16x128xf32>
    %99 = tpu.matmul %97, %98, %cst_48 {dimension_numbers = #tpu.dot_dimension_numbers<[1], [0], [0], [1], [0, 0, 1, 1], [], []>} : vector<16x16xbf16>, vector<16x128xbf16>, vector<16x128xf32> -> vector<16x128xf32>
    %100 = arith.addf %95, %99 : vector<16x128xf32>
    %101 = vector.extract_strided_slice %91 {offsets = [2, 0, 0], sizes = [1, 16, 16], strides = [1, 1, 1]} : vector<3x16x16xbf16> to vector<1x16x16xbf16>
    %102 = vector.shape_cast %101 : vector<1x16x16xbf16> to vector<16x16xbf16>
    %103 = arith.truncf %89 : vector<16x128xf32> to vector<16x128xbf16>
    %cst_49 = arith.constant dense<0.000000e+00> : vector<16x128xf32>
    %104 = tpu.matmul %102, %103, %cst_49 {dimension_numbers = #tpu.dot_dimension_numbers<[1], [0], [0], [1], [0, 0, 1, 1], [], []>} : vector<16x16xbf16>, vector<16x128xbf16>, vector<16x128xf32> -> vector<16x128xf32>
    %105 = arith.addf %100, %104 : vector<16x128xf32>
    %c2_50 = arith.constant 2 : index
    %c0_51 = arith.constant 0 : index
    %c0_52 = arith.constant 0 : index
    %106 = vector.load %arg3[%c2_50, %c0_51, %c0_52] : memref<8x16x1xf32, #tpu.memory_space<vmem>>, vector<1x16x1xf32>
    %107 = vector.shape_cast %106 : vector<1x16x1xf32> to vector<16x1xf32>
    %108 = vector.broadcast %107 : vector<16x1xf32> to vector<16x128xf32>
    %109 = arith.addf %105, %108 : vector<16x128xf32>
    %cst_53 = arith.constant 0.000000e+00 : f32
    %110 = vector.broadcast %cst_53 : f32 to vector<16x128xf32>
    %111 = arith.maximumf %109, %110 : vector<16x128xf32>
    %c32_54 = arith.constant 32 : index
    %c0_55 = arith.constant 0 : index
    %112 = vector.load %arg9[%c32_54, %c0_55] : memref<128x128xf32, #tpu.memory_space<vmem>>, vector<16x128xf32>
    tpu.vector_store %arg9[%c32_54, %c0_55], %111 {strides = array<i32>} : memref<128x128xf32, #tpu.memory_space<vmem>>, vector<16x128xf32>,
    %cst_56 = arith.constant 0.000000e+00 : f32
    %113 = vector.broadcast %cst_56 : f32 to vector<16x128xf32>
    %114 = arith.select %6, %111, %113 : vector<16x128xi1>, vector<16x128xf32>
    %cst_57 = arith.constant dense<0.000000e+00> : vector<16xf32>
    %115 = vector.multi_reduction <add>, %114, %cst_57 [1] : vector<16x128xf32> to vector<16xf32>
    %116 = vector.shape_cast %115 : vector<16xf32> to vector<16x1xf32>
    %c0_58 = arith.constant 0 : index
    %c48 = arith.constant 48 : index
    %c0_59 = arith.constant 0 : index
    %117 = vector.load %arg1[%c0_58, %c48, %c0_59] : memref<1x128x128xbf16, #tpu.memory_space<vmem>>, vector<1x16x128xbf16>
    %118 = vector.shape_cast %117 : vector<1x16x128xbf16> to vector<16x128xbf16>
    %119 = arith.extf %118 : vector<16x128xbf16> to vector<16x128xf32>
    %120 = arith.addf %119, %111 : vector<16x128xf32>
    %c1_i32_60 = arith.constant 1 : i32
    %121 = tpu.dynamic_rotate %120 by %c1_i32_60 dim 1 : vector<16x128xf32>, i32 -> vector<16x128xf32>
    %cst_61 = arith.constant 0.000000e+00 : f32
    %122 = vector.broadcast %cst_61 : f32 to vector<16x128xf32>
    %123 = arith.select %2, %121, %122 : vector<16x128xi1>, vector<16x128xf32>
    %c127_i32_62 = arith.constant 127 : i32
    %124 = tpu.dynamic_rotate %120 by %c127_i32_62 dim 1 : vector<16x128xf32>, i32 -> vector<16x128xf32>
    %cst_63 = arith.constant 0.000000e+00 : f32
    %125 = vector.broadcast %cst_63 : f32 to vector<16x128xf32>
    %126 = arith.select %4, %124, %125 : vector<16x128xi1>, vector<16x128xf32>
    %c3 = arith.constant 3 : index
    %c0_64 = arith.constant 0 : index
    %c0_65 = arith.constant 0 : index
    %c0_66 = arith.constant 0 : index
    %127 = vector.load %arg2[%c3, %c0_64, %c0_65, %c0_66] : memref<8x3x16x16xbf16, #tpu.memory_space<vmem>>, vector<1x3x16x16xbf16>
    %128 = vector.shape_cast %127 : vector<1x3x16x16xbf16> to vector<3x16x16xbf16>
    %129 = vector.extract_strided_slice %128 {offsets = [1, 0, 0], sizes = [1, 16, 16], strides = [1, 1, 1]} : vector<3x16x16xbf16> to vector<1x16x16xbf16>
    %130 = vector.shape_cast %129 : vector<1x16x16xbf16> to vector<16x16xbf16>
    %131 = arith.truncf %120 : vector<16x128xf32> to vector<16x128xbf16>
    %cst_67 = arith.constant dense<0.000000e+00> : vector<16x128xf32>
    %132 = tpu.matmul %130, %131, %cst_67 {dimension_numbers = #tpu.dot_dimension_numbers<[1], [0], [0], [1], [0, 0, 1, 1], [], []>} : vector<16x16xbf16>, vector<16x128xbf16>, vector<16x128xf32> -> vector<16x128xf32>
    %133 = vector.extract_strided_slice %128 {offsets = [0, 0, 0], sizes = [1, 16, 16], strides = [1, 1, 1]} : vector<3x16x16xbf16> to vector<1x16x16xbf16>
    %134 = vector.shape_cast %133 : vector<1x16x16xbf16> to vector<16x16xbf16>
    %135 = arith.truncf %123 : vector<16x128xf32> to vector<16x128xbf16>
    %cst_68 = arith.constant dense<0.000000e+00> : vector<16x128xf32>
    %136 = tpu.matmul %134, %135, %cst_68 {dimension_numbers = #tpu.dot_dimension_numbers<[1], [0], [0], [1], [0, 0, 1, 1], [], []>} : vector<16x16xbf16>, vector<16x128xbf16>, vector<16x128xf32> -> vector<16x128xf32>
    %137 = arith.addf %132, %136 : vector<16x128xf32>
    %138 = vector.extract_strided_slice %128 {offsets = [2, 0, 0], sizes = [1, 16, 16], strides = [1, 1, 1]} : vector<3x16x16xbf16> to vector<1x16x16xbf16>
    %139 = vector.shape_cast %138 : vector<1x16x16xbf16> to vector<16x16xbf16>
    %140 = arith.truncf %126 : vector<16x128xf32> to vector<16x128xbf16>
    %cst_69 = arith.constant dense<0.000000e+00> : vector<16x128xf32>
    %141 = tpu.matmul %139, %140, %cst_69 {dimension_numbers = #tpu.dot_dimension_numbers<[1], [0], [0], [1], [0, 0, 1, 1], [], []>} : vector<16x16xbf16>, vector<16x128xbf16>, vector<16x128xf32> -> vector<16x128xf32>
    %142 = arith.addf %137, %141 : vector<16x128xf32>
    %c3_70 = arith.constant 3 : index
    %c0_71 = arith.constant 0 : index
    %c0_72 = arith.constant 0 : index
    %143 = vector.load %arg3[%c3_70, %c0_71, %c0_72] : memref<8x16x1xf32, #tpu.memory_space<vmem>>, vector<1x16x1xf32>
    %144 = vector.shape_cast %143 : vector<1x16x1xf32> to vector<16x1xf32>
    %145 = vector.broadcast %144 : vector<16x1xf32> to vector<16x128xf32>
    %146 = arith.addf %142, %145 : vector<16x128xf32>
    %cst_73 = arith.constant 0.000000e+00 : f32
    %147 = vector.broadcast %cst_73 : f32 to vector<16x128xf32>
    %148 = arith.maximumf %146, %147 : vector<16x128xf32>
    %c48_74 = arith.constant 48 : index
    %c0_75 = arith.constant 0 : index
    %149 = vector.load %arg9[%c48_74, %c0_75] : memref<128x128xf32, #tpu.memory_space<vmem>>, vector<16x128xf32>
    tpu.vector_store %arg9[%c48_74, %c0_75], %148 {strides = array<i32>} : memref<128x128xf32, #tpu.memory_space<vmem>>, vector<16x128xf32>,
    %cst_76 = arith.constant 0.000000e+00 : f32
    %150 = vector.broadcast %cst_76 : f32 to vector<16x128xf32>
    %151 = arith.select %6, %148, %150 : vector<16x128xi1>, vector<16x128xf32>
    %cst_77 = arith.constant dense<0.000000e+00> : vector<16xf32>
    %152 = vector.multi_reduction <add>, %151, %cst_77 [1] : vector<16x128xf32> to vector<16xf32>
    %153 = vector.shape_cast %152 : vector<16xf32> to vector<16x1xf32>
    %c0_78 = arith.constant 0 : index
    %c64 = arith.constant 64 : index
    %c0_79 = arith.constant 0 : index
    %154 = vector.load %arg1[%c0_78, %c64, %c0_79] : memref<1x128x128xbf16, #tpu.memory_space<vmem>>, vector<1x16x128xbf16>
    %155 = vector.shape_cast %154 : vector<1x16x128xbf16> to vector<16x128xbf16>
    %156 = arith.extf %155 : vector<16x128xbf16> to vector<16x128xf32>
    %157 = arith.addf %156, %148 : vector<16x128xf32>
    %c1_i32_80 = arith.constant 1 : i32
    %158 = tpu.dynamic_rotate %157 by %c1_i32_80 dim 1 : vector<16x128xf32>, i32 -> vector<16x128xf32>
    %cst_81 = arith.constant 0.000000e+00 : f32
    %159 = vector.broadcast %cst_81 : f32 to vector<16x128xf32>
    %160 = arith.select %2, %158, %159 : vector<16x128xi1>, vector<16x128xf32>
    %c127_i32_82 = arith.constant 127 : i32
    %161 = tpu.dynamic_rotate %157 by %c127_i32_82 dim 1 : vector<16x128xf32>, i32 -> vector<16x128xf32>
    %cst_83 = arith.constant 0.000000e+00 : f32
    %162 = vector.broadcast %cst_83 : f32 to vector<16x128xf32>
    %163 = arith.select %4, %161, %162 : vector<16x128xi1>, vector<16x128xf32>
    %c4 = arith.constant 4 : index
    %c0_84 = arith.constant 0 : index
    %c0_85 = arith.constant 0 : index
    %c0_86 = arith.constant 0 : index
    %164 = vector.load %arg2[%c4, %c0_84, %c0_85, %c0_86] : memref<8x3x16x16xbf16, #tpu.memory_space<vmem>>, vector<1x3x16x16xbf16>
    %165 = vector.shape_cast %164 : vector<1x3x16x16xbf16> to vector<3x16x16xbf16>
    %166 = vector.extract_strided_slice %165 {offsets = [1, 0, 0], sizes = [1, 16, 16], strides = [1, 1, 1]} : vector<3x16x16xbf16> to vector<1x16x16xbf16>
    %167 = vector.shape_cast %166 : vector<1x16x16xbf16> to vector<16x16xbf16>
    %168 = arith.truncf %157 : vector<16x128xf32> to vector<16x128xbf16>
    %cst_87 = arith.constant dense<0.000000e+00> : vector<16x128xf32>
    %169 = tpu.matmul %167, %168, %cst_87 {dimension_numbers = #tpu.dot_dimension_numbers<[1], [0], [0], [1], [0, 0, 1, 1], [], []>} : vector<16x16xbf16>, vector<16x128xbf16>, vector<16x128xf32> -> vector<16x128xf32>
    %170 = vector.extract_strided_slice %165 {offsets = [0, 0, 0], sizes = [1, 16, 16], strides = [1, 1, 1]} : vector<3x16x16xbf16> to vector<1x16x16xbf16>
    %171 = vector.shape_cast %170 : vector<1x16x16xbf16> to vector<16x16xbf16>
    %172 = arith.truncf %160 : vector<16x128xf32> to vector<16x128xbf16>
    %cst_88 = arith.constant dense<0.000000e+00> : vector<16x128xf32>
    %173 = tpu.matmul %171, %172, %cst_88 {dimension_numbers = #tpu.dot_dimension_numbers<[1], [0], [0], [1], [0, 0, 1, 1], [], []>} : vector<16x16xbf16>, vector<16x128xbf16>, vector<16x128xf32> -> vector<16x128xf32>
    %174 = arith.addf %169, %173 : vector<16x128xf32>
    %175 = vector.extract_strided_slice %165 {offsets = [2, 0, 0], sizes = [1, 16, 16], strides = [1, 1, 1]} : vector<3x16x16xbf16> to vector<1x16x16xbf16>
    %176 = vector.shape_cast %175 : vector<1x16x16xbf16> to vector<16x16xbf16>
    %177 = arith.truncf %163 : vector<16x128xf32> to vector<16x128xbf16>
    %cst_89 = arith.constant dense<0.000000e+00> : vector<16x128xf32>
    %178 = tpu.matmul %176, %177, %cst_89 {dimension_numbers = #tpu.dot_dimension_numbers<[1], [0], [0], [1], [0, 0, 1, 1], [], []>} : vector<16x16xbf16>, vector<16x128xbf16>, vector<16x128xf32> -> vector<16x128xf32>
    %179 = arith.addf %174, %178 : vector<16x128xf32>
    %c4_90 = arith.constant 4 : index
    %c0_91 = arith.constant 0 : index
    %c0_92 = arith.constant 0 : index
    %180 = vector.load %arg3[%c4_90, %c0_91, %c0_92] : memref<8x16x1xf32, #tpu.memory_space<vmem>>, vector<1x16x1xf32>
    %181 = vector.shape_cast %180 : vector<1x16x1xf32> to vector<16x1xf32>
    %182 = vector.broadcast %181 : vector<16x1xf32> to vector<16x128xf32>
    %183 = arith.addf %179, %182 : vector<16x128xf32>
    %cst_93 = arith.constant 0.000000e+00 : f32
    %184 = vector.broadcast %cst_93 : f32 to vector<16x128xf32>
    %185 = arith.maximumf %183, %184 : vector<16x128xf32>
    %c64_94 = arith.constant 64 : index
    %c0_95 = arith.constant 0 : index
    %186 = vector.load %arg9[%c64_94, %c0_95] : memref<128x128xf32, #tpu.memory_space<vmem>>, vector<16x128xf32>
    tpu.vector_store %arg9[%c64_94, %c0_95], %185 {strides = array<i32>} : memref<128x128xf32, #tpu.memory_space<vmem>>, vector<16x128xf32>,
    %cst_96 = arith.constant 0.000000e+00 : f32
    %187 = vector.broadcast %cst_96 : f32 to vector<16x128xf32>
    %188 = arith.select %6, %185, %187 : vector<16x128xi1>, vector<16x128xf32>
    %cst_97 = arith.constant dense<0.000000e+00> : vector<16xf32>
    %189 = vector.multi_reduction <add>, %188, %cst_97 [1] : vector<16x128xf32> to vector<16xf32>
    %190 = vector.shape_cast %189 : vector<16xf32> to vector<16x1xf32>
    %c0_98 = arith.constant 0 : index
    %c80 = arith.constant 80 : index
    %c0_99 = arith.constant 0 : index
    %191 = vector.load %arg1[%c0_98, %c80, %c0_99] : memref<1x128x128xbf16, #tpu.memory_space<vmem>>, vector<1x16x128xbf16>
    %192 = vector.shape_cast %191 : vector<1x16x128xbf16> to vector<16x128xbf16>
    %193 = arith.extf %192 : vector<16x128xbf16> to vector<16x128xf32>
    %194 = arith.addf %193, %185 : vector<16x128xf32>
    %c1_i32_100 = arith.constant 1 : i32
    %195 = tpu.dynamic_rotate %194 by %c1_i32_100 dim 1 : vector<16x128xf32>, i32 -> vector<16x128xf32>
    %cst_101 = arith.constant 0.000000e+00 : f32
    %196 = vector.broadcast %cst_101 : f32 to vector<16x128xf32>
    %197 = arith.select %2, %195, %196 : vector<16x128xi1>, vector<16x128xf32>
    %c127_i32_102 = arith.constant 127 : i32
    %198 = tpu.dynamic_rotate %194 by %c127_i32_102 dim 1 : vector<16x128xf32>, i32 -> vector<16x128xf32>
    %cst_103 = arith.constant 0.000000e+00 : f32
    %199 = vector.broadcast %cst_103 : f32 to vector<16x128xf32>
    %200 = arith.select %4, %198, %199 : vector<16x128xi1>, vector<16x128xf32>
    %c5 = arith.constant 5 : index
    %c0_104 = arith.constant 0 : index
    %c0_105 = arith.constant 0 : index
    %c0_106 = arith.constant 0 : index
    %201 = vector.load %arg2[%c5, %c0_104, %c0_105, %c0_106] : memref<8x3x16x16xbf16, #tpu.memory_space<vmem>>, vector<1x3x16x16xbf16>
    %202 = vector.shape_cast %201 : vector<1x3x16x16xbf16> to vector<3x16x16xbf16>
    %203 = vector.extract_strided_slice %202 {offsets = [1, 0, 0], sizes = [1, 16, 16], strides = [1, 1, 1]} : vector<3x16x16xbf16> to vector<1x16x16xbf16>
    %204 = vector.shape_cast %203 : vector<1x16x16xbf16> to vector<16x16xbf16>
    %205 = arith.truncf %194 : vector<16x128xf32> to vector<16x128xbf16>
    %cst_107 = arith.constant dense<0.000000e+00> : vector<16x128xf32>
    %206 = tpu.matmul %204, %205, %cst_107 {dimension_numbers = #tpu.dot_dimension_numbers<[1], [0], [0], [1], [0, 0, 1, 1], [], []>} : vector<16x16xbf16>, vector<16x128xbf16>, vector<16x128xf32> -> vector<16x128xf32>
    %207 = vector.extract_strided_slice %202 {offsets = [0, 0, 0], sizes = [1, 16, 16], strides = [1, 1, 1]} : vector<3x16x16xbf16> to vector<1x16x16xbf16>
    %208 = vector.shape_cast %207 : vector<1x16x16xbf16> to vector<16x16xbf16>
    %209 = arith.truncf %197 : vector<16x128xf32> to vector<16x128xbf16>
    %cst_108 = arith.constant dense<0.000000e+00> : vector<16x128xf32>
    %210 = tpu.matmul %208, %209, %cst_108 {dimension_numbers = #tpu.dot_dimension_numbers<[1], [0], [0], [1], [0, 0, 1, 1], [], []>} : vector<16x16xbf16>, vector<16x128xbf16>, vector<16x128xf32> -> vector<16x128xf32>
    %211 = arith.addf %206, %210 : vector<16x128xf32>
    %212 = vector.extract_strided_slice %202 {offsets = [2, 0, 0], sizes = [1, 16, 16], strides = [1, 1, 1]} : vector<3x16x16xbf16> to vector<1x16x16xbf16>
    %213 = vector.shape_cast %212 : vector<1x16x16xbf16> to vector<16x16xbf16>
    %214 = arith.truncf %200 : vector<16x128xf32> to vector<16x128xbf16>
    %cst_109 = arith.constant dense<0.000000e+00> : vector<16x128xf32>
    %215 = tpu.matmul %213, %214, %cst_109 {dimension_numbers = #tpu.dot_dimension_numbers<[1], [0], [0], [1], [0, 0, 1, 1], [], []>} : vector<16x16xbf16>, vector<16x128xbf16>, vector<16x128xf32> -> vector<16x128xf32>
    %216 = arith.addf %211, %215 : vector<16x128xf32>
    %c5_110 = arith.constant 5 : index
    %c0_111 = arith.constant 0 : index
    %c0_112 = arith.constant 0 : index
    %217 = vector.load %arg3[%c5_110, %c0_111, %c0_112] : memref<8x16x1xf32, #tpu.memory_space<vmem>>, vector<1x16x1xf32>
    %218 = vector.shape_cast %217 : vector<1x16x1xf32> to vector<16x1xf32>
    %219 = vector.broadcast %218 : vector<16x1xf32> to vector<16x128xf32>
    %220 = arith.addf %216, %219 : vector<16x128xf32>
    %cst_113 = arith.constant 0.000000e+00 : f32
    %221 = vector.broadcast %cst_113 : f32 to vector<16x128xf32>
    %222 = arith.maximumf %220, %221 : vector<16x128xf32>
    %c80_114 = arith.constant 80 : index
    %c0_115 = arith.constant 0 : index
    %223 = vector.load %arg9[%c80_114, %c0_115] : memref<128x128xf32, #tpu.memory_space<vmem>>, vector<16x128xf32>
    tpu.vector_store %arg9[%c80_114, %c0_115], %222 {strides = array<i32>} : memref<128x128xf32, #tpu.memory_space<vmem>>, vector<16x128xf32>,
    %cst_116 = arith.constant 0.000000e+00 : f32
    %224 = vector.broadcast %cst_116 : f32 to vector<16x128xf32>
    %225 = arith.select %6, %222, %224 : vector<16x128xi1>, vector<16x128xf32>
    %cst_117 = arith.constant dense<0.000000e+00> : vector<16xf32>
    %226 = vector.multi_reduction <add>, %225, %cst_117 [1] : vector<16x128xf32> to vector<16xf32>
    %227 = vector.shape_cast %226 : vector<16xf32> to vector<16x1xf32>
    %c0_118 = arith.constant 0 : index
    %c96 = arith.constant 96 : index
    %c0_119 = arith.constant 0 : index
    %228 = vector.load %arg1[%c0_118, %c96, %c0_119] : memref<1x128x128xbf16, #tpu.memory_space<vmem>>, vector<1x16x128xbf16>
    %229 = vector.shape_cast %228 : vector<1x16x128xbf16> to vector<16x128xbf16>
    %230 = arith.extf %229 : vector<16x128xbf16> to vector<16x128xf32>
    %231 = arith.addf %230, %222 : vector<16x128xf32>
    %c1_i32_120 = arith.constant 1 : i32
    %232 = tpu.dynamic_rotate %231 by %c1_i32_120 dim 1 : vector<16x128xf32>, i32 -> vector<16x128xf32>
    %cst_121 = arith.constant 0.000000e+00 : f32
    %233 = vector.broadcast %cst_121 : f32 to vector<16x128xf32>
    %234 = arith.select %2, %232, %233 : vector<16x128xi1>, vector<16x128xf32>
    %c127_i32_122 = arith.constant 127 : i32
    %235 = tpu.dynamic_rotate %231 by %c127_i32_122 dim 1 : vector<16x128xf32>, i32 -> vector<16x128xf32>
    %cst_123 = arith.constant 0.000000e+00 : f32
    %236 = vector.broadcast %cst_123 : f32 to vector<16x128xf32>
    %237 = arith.select %4, %235, %236 : vector<16x128xi1>, vector<16x128xf32>
    %c6 = arith.constant 6 : index
    %c0_124 = arith.constant 0 : index
    %c0_125 = arith.constant 0 : index
    %c0_126 = arith.constant 0 : index
    %238 = vector.load %arg2[%c6, %c0_124, %c0_125, %c0_126] : memref<8x3x16x16xbf16, #tpu.memory_space<vmem>>, vector<1x3x16x16xbf16>
    %239 = vector.shape_cast %238 : vector<1x3x16x16xbf16> to vector<3x16x16xbf16>
    %240 = vector.extract_strided_slice %239 {offsets = [1, 0, 0], sizes = [1, 16, 16], strides = [1, 1, 1]} : vector<3x16x16xbf16> to vector<1x16x16xbf16>
    %241 = vector.shape_cast %240 : vector<1x16x16xbf16> to vector<16x16xbf16>
    %242 = arith.truncf %231 : vector<16x128xf32> to vector<16x128xbf16>
    %cst_127 = arith.constant dense<0.000000e+00> : vector<16x128xf32>
    %243 = tpu.matmul %241, %242, %cst_127 {dimension_numbers = #tpu.dot_dimension_numbers<[1], [0], [0], [1], [0, 0, 1, 1], [], []>} : vector<16x16xbf16>, vector<16x128xbf16>, vector<16x128xf32> -> vector<16x128xf32>
    %244 = vector.extract_strided_slice %239 {offsets = [0, 0, 0], sizes = [1, 16, 16], strides = [1, 1, 1]} : vector<3x16x16xbf16> to vector<1x16x16xbf16>
    %245 = vector.shape_cast %244 : vector<1x16x16xbf16> to vector<16x16xbf16>
    %246 = arith.truncf %234 : vector<16x128xf32> to vector<16x128xbf16>
    %cst_128 = arith.constant dense<0.000000e+00> : vector<16x128xf32>
    %247 = tpu.matmul %245, %246, %cst_128 {dimension_numbers = #tpu.dot_dimension_numbers<[1], [0], [0], [1], [0, 0, 1, 1], [], []>} : vector<16x16xbf16>, vector<16x128xbf16>, vector<16x128xf32> -> vector<16x128xf32>
    %248 = arith.addf %243, %247 : vector<16x128xf32>
    %249 = vector.extract_strided_slice %239 {offsets = [2, 0, 0], sizes = [1, 16, 16], strides = [1, 1, 1]} : vector<3x16x16xbf16> to vector<1x16x16xbf16>
    %250 = vector.shape_cast %249 : vector<1x16x16xbf16> to vector<16x16xbf16>
    %251 = arith.truncf %237 : vector<16x128xf32> to vector<16x128xbf16>
    %cst_129 = arith.constant dense<0.000000e+00> : vector<16x128xf32>
    %252 = tpu.matmul %250, %251, %cst_129 {dimension_numbers = #tpu.dot_dimension_numbers<[1], [0], [0], [1], [0, 0, 1, 1], [], []>} : vector<16x16xbf16>, vector<16x128xbf16>, vector<16x128xf32> -> vector<16x128xf32>
    %253 = arith.addf %248, %252 : vector<16x128xf32>
    %c6_130 = arith.constant 6 : index
    %c0_131 = arith.constant 0 : index
    %c0_132 = arith.constant 0 : index
    %254 = vector.load %arg3[%c6_130, %c0_131, %c0_132] : memref<8x16x1xf32, #tpu.memory_space<vmem>>, vector<1x16x1xf32>
    %255 = vector.shape_cast %254 : vector<1x16x1xf32> to vector<16x1xf32>
    %256 = vector.broadcast %255 : vector<16x1xf32> to vector<16x128xf32>
    %257 = arith.addf %253, %256 : vector<16x128xf32>
    %cst_133 = arith.constant 0.000000e+00 : f32
    %258 = vector.broadcast %cst_133 : f32 to vector<16x128xf32>
    %259 = arith.maximumf %257, %258 : vector<16x128xf32>
    %c96_134 = arith.constant 96 : index
    %c0_135 = arith.constant 0 : index
    %260 = vector.load %arg9[%c96_134, %c0_135] : memref<128x128xf32, #tpu.memory_space<vmem>>, vector<16x128xf32>
    tpu.vector_store %arg9[%c96_134, %c0_135], %259 {strides = array<i32>} : memref<128x128xf32, #tpu.memory_space<vmem>>, vector<16x128xf32>,
    %cst_136 = arith.constant 0.000000e+00 : f32
    %261 = vector.broadcast %cst_136 : f32 to vector<16x128xf32>
    %262 = arith.select %6, %259, %261 : vector<16x128xi1>, vector<16x128xf32>
    %cst_137 = arith.constant dense<0.000000e+00> : vector<16xf32>
    %263 = vector.multi_reduction <add>, %262, %cst_137 [1] : vector<16x128xf32> to vector<16xf32>
    %264 = vector.shape_cast %263 : vector<16xf32> to vector<16x1xf32>
    %c0_138 = arith.constant 0 : index
    %c112 = arith.constant 112 : index
    %c0_139 = arith.constant 0 : index
    %265 = vector.load %arg1[%c0_138, %c112, %c0_139] : memref<1x128x128xbf16, #tpu.memory_space<vmem>>, vector<1x16x128xbf16>
    %266 = vector.shape_cast %265 : vector<1x16x128xbf16> to vector<16x128xbf16>
    %267 = arith.extf %266 : vector<16x128xbf16> to vector<16x128xf32>
    %268 = arith.addf %267, %259 : vector<16x128xf32>
    %c1_i32_140 = arith.constant 1 : i32
    %269 = tpu.dynamic_rotate %268 by %c1_i32_140 dim 1 : vector<16x128xf32>, i32 -> vector<16x128xf32>
    %cst_141 = arith.constant 0.000000e+00 : f32
    %270 = vector.broadcast %cst_141 : f32 to vector<16x128xf32>
    %271 = arith.select %2, %269, %270 : vector<16x128xi1>, vector<16x128xf32>
    %c127_i32_142 = arith.constant 127 : i32
    %272 = tpu.dynamic_rotate %268 by %c127_i32_142 dim 1 : vector<16x128xf32>, i32 -> vector<16x128xf32>
    %cst_143 = arith.constant 0.000000e+00 : f32
    %273 = vector.broadcast %cst_143 : f32 to vector<16x128xf32>
    %274 = arith.select %4, %272, %273 : vector<16x128xi1>, vector<16x128xf32>
    %c7 = arith.constant 7 : index
    %c0_144 = arith.constant 0 : index
    %c0_145 = arith.constant 0 : index
    %c0_146 = arith.constant 0 : index
    %275 = vector.load %arg2[%c7, %c0_144, %c0_145, %c0_146] : memref<8x3x16x16xbf16, #tpu.memory_space<vmem>>, vector<1x3x16x16xbf16>
    %276 = vector.shape_cast %275 : vector<1x3x16x16xbf16> to vector<3x16x16xbf16>
    %277 = vector.extract_strided_slice %276 {offsets = [1, 0, 0], sizes = [1, 16, 16], strides = [1, 1, 1]} : vector<3x16x16xbf16> to vector<1x16x16xbf16>
    %278 = vector.shape_cast %277 : vector<1x16x16xbf16> to vector<16x16xbf16>
    %279 = arith.truncf %268 : vector<16x128xf32> to vector<16x128xbf16>
    %cst_147 = arith.constant dense<0.000000e+00> : vector<16x128xf32>
    %280 = tpu.matmul %278, %279, %cst_147 {dimension_numbers = #tpu.dot_dimension_numbers<[1], [0], [0], [1], [0, 0, 1, 1], [], []>} : vector<16x16xbf16>, vector<16x128xbf16>, vector<16x128xf32> -> vector<16x128xf32>
    %281 = vector.extract_strided_slice %276 {offsets = [0, 0, 0], sizes = [1, 16, 16], strides = [1, 1, 1]} : vector<3x16x16xbf16> to vector<1x16x16xbf16>
    %282 = vector.shape_cast %281 : vector<1x16x16xbf16> to vector<16x16xbf16>
    %283 = arith.truncf %271 : vector<16x128xf32> to vector<16x128xbf16>
    %cst_148 = arith.constant dense<0.000000e+00> : vector<16x128xf32>
    %284 = tpu.matmul %282, %283, %cst_148 {dimension_numbers = #tpu.dot_dimension_numbers<[1], [0], [0], [1], [0, 0, 1, 1], [], []>} : vector<16x16xbf16>, vector<16x128xbf16>, vector<16x128xf32> -> vector<16x128xf32>
    %285 = arith.addf %280, %284 : vector<16x128xf32>
    %286 = vector.extract_strided_slice %276 {offsets = [2, 0, 0], sizes = [1, 16, 16], strides = [1, 1, 1]} : vector<3x16x16xbf16> to vector<1x16x16xbf16>
    %287 = vector.shape_cast %286 : vector<1x16x16xbf16> to vector<16x16xbf16>
    %288 = arith.truncf %274 : vector<16x128xf32> to vector<16x128xbf16>
    %cst_149 = arith.constant dense<0.000000e+00> : vector<16x128xf32>
    %289 = tpu.matmul %287, %288, %cst_149 {dimension_numbers = #tpu.dot_dimension_numbers<[1], [0], [0], [1], [0, 0, 1, 1], [], []>} : vector<16x16xbf16>, vector<16x128xbf16>, vector<16x128xf32> -> vector<16x128xf32>
    %290 = arith.addf %285, %289 : vector<16x128xf32>
    %c7_150 = arith.constant 7 : index
    %c0_151 = arith.constant 0 : index
    %c0_152 = arith.constant 0 : index
    %291 = vector.load %arg3[%c7_150, %c0_151, %c0_152] : memref<8x16x1xf32, #tpu.memory_space<vmem>>, vector<1x16x1xf32>
    %292 = vector.shape_cast %291 : vector<1x16x1xf32> to vector<16x1xf32>
    %293 = vector.broadcast %292 : vector<16x1xf32> to vector<16x128xf32>
    %294 = arith.addf %290, %293 : vector<16x128xf32>
    %cst_153 = arith.constant 0.000000e+00 : f32
    %295 = vector.broadcast %cst_153 : f32 to vector<16x128xf32>
    %296 = arith.maximumf %294, %295 : vector<16x128xf32>
    %c112_154 = arith.constant 112 : index
    %c0_155 = arith.constant 0 : index
    %297 = vector.load %arg9[%c112_154, %c0_155] : memref<128x128xf32, #tpu.memory_space<vmem>>, vector<16x128xf32>
    tpu.vector_store %arg9[%c112_154, %c0_155], %296 {strides = array<i32>} : memref<128x128xf32, #tpu.memory_space<vmem>>, vector<16x128xf32>,
    %cst_156 = arith.constant 0.000000e+00 : f32
    %298 = vector.broadcast %cst_156 : f32 to vector<16x128xf32>
    %299 = arith.select %6, %296, %298 : vector<16x128xi1>, vector<16x128xf32>
    %cst_157 = arith.constant dense<0.000000e+00> : vector<16xf32>
    %300 = vector.multi_reduction <add>, %299, %cst_157 [1] : vector<16x128xf32> to vector<16xf32>
    %301 = vector.shape_cast %300 : vector<16xf32> to vector<16x1xf32>
    %302 = tpu.concatenate %42, %79, %116, %153, %190, %227, %264, %301 in 0 : vector<16x1xf32>, vector<16x1xf32>, vector<16x1xf32>, vector<16x1xf32>, vector<16x1xf32>, vector<16x1xf32>, vector<16x1xf32>, vector<16x1xf32> -> vector<128x1xf32>
    %cst_158 = arith.constant 6.250000e-02 : f32
    %303 = vector.broadcast %cst_158 : f32 to vector<128x1xf32>
    %304 = arith.mulf %302, %303 : vector<128x1xf32>
    %c0_159 = arith.constant 0 : index
    %c0_160 = arith.constant 0 : index
    %305 = vector.load %arg4[%c0_159, %c0_160] : memref<128x32xf32, #tpu.memory_space<vmem>>, vector<128x32xf32>
    %306 = vector.broadcast %304 : vector<128x1xf32> to vector<128x32xf32>
    %307 = arith.mulf %305, %306 : vector<128x32xf32>
    %cst_161 = arith.constant dense<0.000000e+00> : vector<32xf32>
    %308 = vector.multi_reduction <add>, %307, %cst_161 [0] : vector<128x32xf32> to vector<32xf32>
    %309 = vector.shape_cast %308 : vector<32xf32> to vector<1x32xf32>
    %c0_162 = arith.constant 0 : index
    %c0_163 = arith.constant 0 : index
    %310 = vector.load %arg5[%c0_162, %c0_163] : memref<1x32xf32, #tpu.memory_space<vmem>>, vector<1x32xf32>
    %311 = arith.addf %309, %310 : vector<1x32xf32>
    %cst_164 = arith.constant 0.000000e+00 : f32
    %312 = vector.broadcast %cst_164 : f32 to vector<1x32xf32>
    %313 = arith.maximumf %311, %312 : vector<1x32xf32>
    %c0_165 = arith.constant 0 : index
    %c0_166 = arith.constant 0 : index
    %314 = vector.load %arg6[%c0_165, %c0_166] : memref<128x32xf32, #tpu.memory_space<vmem>>, vector<128x32xf32>
    %315 = vector.broadcast %313 : vector<1x32xf32> to vector<128x32xf32>
    %316 = arith.mulf %314, %315 : vector<128x32xf32>
    %cst_167 = arith.constant dense<0.000000e+00> : vector<128xf32>
    %317 = vector.multi_reduction <add>, %316, %cst_167 [1] : vector<128x32xf32> to vector<128xf32>
    %318 = vector.shape_cast %317 : vector<128xf32> to vector<128x1xf32>
    %c0_168 = arith.constant 0 : index
    %c0_169 = arith.constant 0 : index
    %319 = vector.load %arg7[%c0_168, %c0_169] : memref<128x1xf32, #tpu.memory_space<vmem>>, vector<128x1xf32>
    %320 = arith.addf %318, %319 : vector<128x1xf32>
    %321 = arith.negf %320 : vector<128x1xf32>
    %322 = math.exp %321 : vector<128x1xf32>
    %cst_170 = arith.constant 1.000000e+00 : f32
    %323 = vector.broadcast %cst_170 : f32 to vector<128x1xf32>
    %324 = arith.addf %323, %322 : vector<128x1xf32>
    %325 = arith.divf %323, %324 : vector<128x1xf32>
    %c0_171 = arith.constant 0 : index
    %c0_172 = arith.constant 0 : index
    %326 = vector.load %arg9[%c0_171, %c0_172] : memref<128x128xf32, #tpu.memory_space<vmem>>, vector<128x128xf32>
    %327 = vector.broadcast %325 : vector<128x1xf32> to vector<128x128xf32>
    %328 = arith.mulf %326, %327 : vector<128x128xf32>
    %c0_173 = arith.constant 0 : index
    %c0_174 = arith.constant 0 : index
    %c0_175 = arith.constant 0 : index
    %329 = vector.load %arg1[%c0_173, %c0_174, %c0_175] : memref<1x128x128xbf16, #tpu.memory_space<vmem>>, vector<1x128x128xbf16>
    %330 = vector.shape_cast %329 : vector<1x128x128xbf16> to vector<128x128xbf16>
    %331 = arith.extf %330 : vector<128x128xbf16> to vector<128x128xf32>
    %332 = arith.addf %328, %331 : vector<128x128xf32>
    %333 = vector.extract_strided_slice %332 {offsets = [0, 0], sizes = [128, 16], strides = [1, 1]} : vector<128x128xf32> to vector<128x16xf32>
    %334 = arith.truncf %333 : vector<128x16xf32> to vector<128x16xbf16>
    %c0_176 = arith.constant 0 : index
    %c0_177 = arith.constant 0 : index
    %c0_178 = arith.constant 0 : index
    %335 = vector.load %arg8[%c0_176, %c0_177, %c0_178] : memref<1x128x16xbf16, #tpu.memory_space<vmem>>, vector<1x128x16xbf16>
    %336 = vector.shape_cast %335 : vector<1x128x16xbf16> to vector<128x16xbf16>
    %337 = vector.shape_cast %334 : vector<128x16xbf16> to vector<1x128x16xbf16>
    tpu.vector_store %arg8[%c0_176, %c0_177, %c0_178], %337 {strides = array<i32>} : memref<1x128x16xbf16, #tpu.memory_space<vmem>>, vector<1x128x16xbf16>,
    return
  }
  func.func @transform_0(%arg0: i32) -> (i32, i32, i32) {
    %c0_i32 = arith.constant 0 : i32
    %c0_i32_0 = arith.constant 0 : i32
    %c0_i32_1 = arith.constant 0 : i32
    return %arg0, %c0_i32, %c0_i32_0 : i32, i32, i32
  }
  func.func @transform_1(%arg0: i32) -> (i32, i32, i32, i32) {
    %c0_i32 = arith.constant 0 : i32
    %c0_i32_0 = arith.constant 0 : i32
    %c0_i32_1 = arith.constant 0 : i32
    %c0_i32_2 = arith.constant 0 : i32
    %c0_i32_3 = arith.constant 0 : i32
    return %c0_i32, %c0_i32_0, %c0_i32_1, %c0_i32_2 : i32, i32, i32, i32
  }
  func.func @transform_2(%arg0: i32) -> (i32, i32, i32) {
    %c0_i32 = arith.constant 0 : i32
    %c0_i32_0 = arith.constant 0 : i32
    %c0_i32_1 = arith.constant 0 : i32
    %c0_i32_2 = arith.constant 0 : i32
    return %c0_i32, %c0_i32_0, %c0_i32_1 : i32, i32, i32
  }
  func.func @transform_3(%arg0: i32) -> (i32, i32) {
    %c0_i32 = arith.constant 0 : i32
    %c0_i32_0 = arith.constant 0 : i32
    %c0_i32_1 = arith.constant 0 : i32
    return %c0_i32, %c0_i32_0 : i32, i32
  }
  func.func @transform_4(%arg0: i32) -> (i32, i32) {
    %c0_i32 = arith.constant 0 : i32
    %c0_i32_0 = arith.constant 0 : i32
    %c0_i32_1 = arith.constant 0 : i32
    return %c0_i32, %c0_i32_0 : i32, i32
  }
  func.func @transform_5(%arg0: i32) -> (i32, i32) {
    %c0_i32 = arith.constant 0 : i32
    %c0_i32_0 = arith.constant 0 : i32
    %c0_i32_1 = arith.constant 0 : i32
    return %c0_i32, %c0_i32_0 : i32, i32
  }
  func.func @transform_6(%arg0: i32) -> (i32, i32) {
    %c0_i32 = arith.constant 0 : i32
    %c0_i32_0 = arith.constant 0 : i32
    %c0_i32_1 = arith.constant 0 : i32
    return %c0_i32, %c0_i32_0 : i32, i32
  }
  func.func @transform_7(%arg0: i32) -> (i32, i32, i32) {
    %c0_i32 = arith.constant 0 : i32
    %c0_i32_0 = arith.constant 0 : i32
    %c0_i32_1 = arith.constant 0 : i32
    return %arg0, %c0_i32, %c0_i32_0 : i32, i32, i32
  }
}

</mosaic_0001>

<llo_original>
// kernel: tpu_custom_call.1
$region0: #{tpu_custom_call.1}
  #allocation0 [shape = 'u32[]', space=smem, size = 0x4, offset = 0x4, fixed_abs, tag = 'smem constant byte address 0x4 - core index']
  #allocation1 [shape = 'u32[144,128]{1,0:T(1,128)}', space=vmem, size = 0x12000, scoped, tag = 'internal scratch']
  #allocation2 [shape = 'f32[128,128]{1,0:T(8,128)}', space=vmem, size = 0x10000, scoped, tag = 'scratch operand']
  %s0 = inlined_call_operand.vmem [shape: bf16[2,128,128], index: 0, kind: input, shape index: {}]
  %s1 = inlined_call_operand.vmem [shape: bf16[8,3,16,16], index: 1, kind: input, shape index: {}]
  %s2 = inlined_call_operand.vmem [shape: f32[8,16,1], index: 2, kind: input, shape index: {}]
  %s3 = inlined_call_operand.vmem [shape: f32[128,32], index: 3, kind: input, shape index: {}]
  %s4 = inlined_call_operand.vmem [shape: f32[1,32], index: 4, kind: input, shape index: {}]
  %s5 = inlined_call_operand.vmem [shape: f32[128,32], index: 5, kind: input, shape index: {}]
  %s6 = inlined_call_operand.vmem [shape: f32[128,1], index: 6, kind: input, shape index: {}]
  %s7 = inlined_call_operand.vmem [shape: bf16[2,128,16], index: 7, kind: output, shape index: {}]
  %s8 = sld [smem:[#allocation0]]
  $region61: #{tpu_custom_call.1} parent=0
    _
  %s10 = ssub.s32 1, %s8
  %s11 = scalar_select 0, %s10, %s8
  loop: start=0, step=1, limit=4
  $region2: #{tpu_custom_call.1} parent=0 // loop_pre_header
    _
  $region3: #{tpu_custom_call.1} parent=0 // loop_header
    %s13 = sphi 0, %s17
    %p14 = scmp.ge.s32.totalorder %s13, 4
    %s23 = sphi 0, %s25
    %s26 = sphi 0, %s23
    %s27 = sphi 0, %s26
    %s43 = sphi 0, %s27
    %s47 = sphi 0, %s47
    %s49 = sphi 0, %s47
    %s50 = sphi 0, %s49
    %s64 = sphi 0, %s50
    %s68 = sphi 0, %s68
    %s70 = sphi 0, %s68
    %s71 = sphi 0, %s70
    %s85 = sphi 0, %s71
    %s89 = sphi 0, %s89
    %s91 = sphi 0, %s89
    %s92 = sphi 0, %s91
    %s106 = sphi 0, %s92
    %s110 = sphi 0, %s110
    %s112 = sphi 0, %s110
    %s113 = sphi 0, %s112
    %s127 = sphi 0, %s113
    %s131 = sphi 0, %s131
    %s133 = sphi 0, %s131
    %s134 = sphi 0, %s133
    %s148 = sphi 0, %s134
    %s152 = sphi 0, %s152
    %s154 = sphi 0, %s152
    %s155 = sphi 0, %s154
    %s169 = sphi 0, %s155
    %s175 = sphi 0, %s177
    %s178 = sphi 0, %s175
    %s179 = sphi 0, %s178
    %s195 = sphi 0, %s179
  $region4: #{tpu_custom_call.1} parent=0 // loop_header_branch
    %16 = sbr.rel (%p14) target = $region8
  $region5: #{tpu_custom_call.1} parent=0 // loop_body
    %s18 = ssub.s32 %s13, 1
    %s19 = ssub.s32 %s13, 2
    %s20 = sadd.s32 %s13, 1
    %s21 = ssub.s32 %s13, %s20
    %p22 = scmp.eq.s32.totalorder %s21, 0
    %s24 = sadd.s32 %s23, 1
    %s25 = scalar_select %p22, %s23, %s24
    %p28 = pneg %p22
    %p29 = scmp.eq.s32.totalorder %s13, 1
    %p30 = por %p28, %p29
    %p31 = scmp.ne.s32.totalorder %s23, %s26
    %p32 = scmp.eq.s32.totalorder %s13, 0
    %p33 = por %p31, %p32
    %p34 = scmp.ne.s32.totalorder %s23, %s26
    %p35 = scmp.eq.s32.totalorder %s18, 1
    %p36 = por %p34, %p35
    %p37 = scmp.ne.s32.totalorder %s26, %s27
    %p38 = scmp.eq.s32.totalorder %s18, 0
    %p39 = por %p37, %p38
    %p40 = scmp.ne.s32.totalorder %s26, %s27
    %p41 = scmp.eq.s32.totalorder %s19, 1
    %p42 = por %p40, %p41
    %p44 = scmp.ne.s32.totalorder %s27, %s43
    %p45 = scmp.eq.s32.totalorder %s19, 0
    %p46 = por %p44, %p45
    %s48 = sadd.s32 %s47, 1
    %p51 = scmp.eq.s32.totalorder %s13, 1
    %p52 = scmp.ne.s32.totalorder %s47, %s49
    %p53 = scmp.eq.s32.totalorder %s13, 0
    %p54 = por %p52, %p53
    %p55 = scmp.ne.s32.totalorder %s47, %s49
    %p56 = scmp.eq.s32.totalorder %s18, 1
    %p57 = por %p55, %p56
    %p58 = scmp.ne.s32.totalorder %s49, %s50
    %p59 = scmp.eq.s32.totalorder %s18, 0
    %p60 = por %p58, %p59
    %p61 = scmp.ne.s32.totalorder %s49, %s50
    %p62 = scmp.eq.s32.totalorder %s19, 1
    %p63 = por %p61, %p62
    %p65 = scmp.ne.s32.totalorder %s50, %s64
    %p66 = scmp.eq.s32.totalorder %s19, 0
    %p67 = por %p65, %p66
    %s69 = sadd.s32 %s68, 1
    %p72 = scmp.eq.s32.totalorder %s13, 1
    %p73 = scmp.ne.s32.totalorder %s68, %s70
    %p74 = scmp.eq.s32.totalorder %s13, 0
    %p75 = por %p73, %p74
    %p76 = scmp.ne.s32.totalorder %s68, %s70
    %p77 = scmp.eq.s32.totalorder %s18, 1
    %p78 = por %p76, %p77
    %p79 = scmp.ne.s32.totalorder %s70, %s71
    %p80 = scmp.eq.s32.totalorder %s18, 0
    %p81 = por %p79, %p80
    %p82 = scmp.ne.s32.totalorder %s70, %s71
    %p83 = scmp.eq.s32.totalorder %s19, 1
    %p84 = por %p82, %p83
    %p86 = scmp.ne.s32.totalorder %s71, %s85
    %p87 = scmp.eq.s32.totalorder %s19, 0
    %p88 = por %p86, %p87
    %s90 = sadd.s32 %s89, 1
    %p93 = scmp.eq.s32.totalorder %s13, 1
    %p94 = scmp.ne.s32.totalorder %s89, %s91
    %p95 = scmp.eq.s32.totalorder %s13, 0
    %p96 = por %p94, %p95
    %p97 = scmp.ne.s32.totalorder %s89, %s91
    %p98 = scmp.eq.s32.totalorder %s18, 1
    %p99 = por %p97, %p98
    %p100 = scmp.ne.s32.totalorder %s91, %s92
    %p101 = scmp.eq.s32.totalorder %s18, 0
    %p102 = por %p100, %p101
    %p103 = scmp.ne.s32.totalorder %s91, %s92
    %p104 = scmp.eq.s32.totalorder %s19, 1
    %p105 = por %p103, %p104
    %p107 = scmp.ne.s32.totalorder %s92, %s106
    %p108 = scmp.eq.s32.totalorder %s19, 0
    %p109 = por %p107, %p108
    %s111 = sadd.s32 %s110, 1
    %p114 = scmp.eq.s32.totalorder %s13, 1
    %p115 = scmp.ne.s32.totalorder %s110, %s112
    %p116 = scmp.eq.s32.totalorder %s13, 0
    %p117 = por %p115, %p116
    %p118 = scmp.ne.s32.totalorder %s110, %s112
    %p119 = scmp.eq.s32.totalorder %s18, 1
    %p120 = por %p118, %p119
    %p121 = scmp.ne.s32.totalorder %s112, %s113
    %p122 = scmp.eq.s32.totalorder %s18, 0
    %p123 = por %p121, %p122
    %p124 = scmp.ne.s32.totalorder %s112, %s113
    %p125 = scmp.eq.s32.totalorder %s19, 1
    %p126 = por %p124, %p125
    %p128 = scmp.ne.s32.totalorder %s113, %s127
    %p129 = scmp.eq.s32.totalorder %s19, 0
    %p130 = por %p128, %p129
    %s132 = sadd.s32 %s131, 1
    %p135 = scmp.eq.s32.totalorder %s13, 1
    %p136 = scmp.ne.s32.totalorder %s131, %s133
    %p137 = scmp.eq.s32.totalorder %s13, 0
    %p138 = por %p136, %p137
    %p139 = scmp.ne.s32.totalorder %s131, %s133
    %p140 = scmp.eq.s32.totalorder %s18, 1
    %p141 = por %p139, %p140
    %p142 = scmp.ne.s32.totalorder %s133, %s134
    %p143 = scmp.eq.s32.totalorder %s18, 0
    %p144 = por %p142, %p143
    %p145 = scmp.ne.s32.totalorder %s133, %s134
    %p146 = scmp.eq.s32.totalorder %s19, 1
    %p147 = por %p145, %p146
    %p149 = scmp.ne.s32.totalorder %s134, %s148
    %p150 = scmp.eq.s32.totalorder %s19, 0
    %p151 = por %p149, %p150
    %s153 = sadd.s32 %s152, 1
    %p156 = scmp.eq.s32.totalorder %s13, 1
    %p157 = scmp.ne.s32.totalorder %s152, %s154
    %p158 = scmp.eq.s32.totalorder %s13, 0
    %p159 = por %p157, %p158
    %p160 = scmp.ne.s32.totalorder %s152, %s154
    %p161 = scmp.eq.s32.totalorder %s18, 1
    %p162 = por %p160, %p161
    %p163 = scmp.ne.s32.totalorder %s154, %s155
    %p164 = scmp.eq.s32.totalorder %s18, 0
    %p165 = por %p163, %p164
    %p166 = scmp.ne.s32.totalorder %s154, %s155
    %p167 = scmp.eq.s32.totalorder %s19, 1
    %p168 = por %p166, %p167
    %p170 = scmp.ne.s32.totalorder %s155, %s169
    %p171 = scmp.eq.s32.totalorder %s19, 0
    %p172 = por %p170, %p171
    %s173 = ssub.s32 %s13, %s20
    %p174 = scmp.eq.s32.totalorder %s173, 0
    %s176 = sadd.s32 %s175, 1
    %s177 = scalar_select %p174, %s175, %s176
    %p180 = pneg %p174
    %p181 = scmp.eq.s32.totalorder %s13, 1
    %p182 = por %p180, %p181
    %p183 = scmp.ne.s32.totalorder %s175, %s178
    %p184 = scmp.eq.s32.totalorder %s13, 0
    %p185 = por %p183, %p184
    %p186 = scmp.ne.s32.totalorder %s175, %s178
    %p187 = scmp.eq.s32.totalorder %s18, 1
    %p188 = por %p186, %p187
    %p189 = scmp.ne.s32.totalorder %s178, %s179
    %p190 = scmp.eq.s32.totalorder %s18, 0
    %p191 = por %p189, %p190
    %p192 = scmp.ne.s32.totalorder %s178, %s179
    %p193 = scmp.eq.s32.totalorder %s19, 1
    %p194 = por %p192, %p193
    %p196 = scmp.ne.s32.totalorder %s179, %s195
    %p197 = scmp.eq.s32.totalorder %s19, 0
    %p198 = por %p196, %p197
    %p199 = scmp.le.s32.totalorder 1, %s13
    %p200 = scmp.lt.s32.totalorder %s13, 3
    %p201 = pnand %p199, %p200
    %p202 = pneg %p201
    // Predicated region
    $region9: #{tpu_custom_call.1} parent=5 // pred_check
      _
    $region10: #{tpu_custom_call.1} parent=5 // pred_check_branch
      %204 = sbr.rel (%p201) target = $region12
    $region11: #{tpu_custom_call.1} parent=5 // pred_region
      %s205 = ssub.s32 %s13, 1
      // Predicated region
      $region13: #{tpu_custom_call.1} parent=11 // pred_check
        %p206 = pneg %p60
      $region14: #{tpu_custom_call.1} parent=11 // pred_check_branch
        %208 = sbr.rel (%p206) target = $region16
      $region15: #{tpu_custom_call.1} parent=11 // pred_region
        _
      $region16: #{tpu_custom_call.1} parent=11 // pred_fallthru
        _
      // Predicated region
      $region17: #{tpu_custom_call.1} parent=11 // pred_check
        %p209 = pneg %p81
      $region18: #{tpu_custom_call.1} parent=11 // pred_check_branch
        %211 = sbr.rel (%p209) target = $region20
      $region19: #{tpu_custom_call.1} parent=11 // pred_region
        _
      $region20: #{tpu_custom_call.1} parent=11 // pred_fallthru
        _
      // Predicated region
      $region21: #{tpu_custom_call.1} parent=11 // pred_check
        %p212 = pneg %p102
      $region22: #{tpu_custom_call.1} parent=11 // pred_check_branch
        %214 = sbr.rel (%p212) target = $region24
      $region23: #{tpu_custom_call.1} parent=11 // pred_region
        _
      $region24: #{tpu_custom_call.1} parent=11 // pred_fallthru
        _
      // Predicated region
      $region25: #{tpu_custom_call.1} parent=11 // pred_check
        %p215 = pneg %p123
      $region26: #{tpu_custom_call.1} parent=11 // pred_check_branch
        %217 = sbr.rel (%p215) target = $region28
      $region27: #{tpu_custom_call.1} parent=11 // pred_region
        _
      $region28: #{tpu_custom_call.1} parent=11 // pred_fallthru
        _
      // Predicated region
      $region29: #{tpu_custom_call.1} parent=11 // pred_check
        %p218 = pneg %p144
      $region30: #{tpu_custom_call.1} parent=11 // pred_check_branch
        %220 = sbr.rel (%p218) target = $region32
      $region31: #{tpu_custom_call.1} parent=11 // pred_region
        _
      $region32: #{tpu_custom_call.1} parent=11 // pred_fallthru
        _
      // Predicated region
      $region33: #{tpu_custom_call.1} parent=11 // pred_check
        %p221 = pneg %p165
      $region34: #{tpu_custom_call.1} parent=11 // pred_check_branch
        %223 = sbr.rel (%p221) target = $region36
      $region35: #{tpu_custom_call.1} parent=11 // pred_region
        _
      $region36: #{tpu_custom_call.1} parent=11 // pred_fallthru
        _
    $region12: #{tpu_custom_call.1} parent=5 // pred_fallthru
      _
    %p224 = scmp.lt.s32.totalorder %s13, 2
    // Predicated region
    $region37: #{tpu_custom_call.1} parent=5 // pred_check
      %p225 = pneg %p224
    $region38: #{tpu_custom_call.1} parent=5 // pred_check_branch
      %227 = sbr.rel (%p225) target = $region40
    $region39: #{tpu_custom_call.1} parent=5 // pred_region
      // Predicated region
      $region41: #{tpu_custom_call.1} parent=39 // pred_check
        %p228 = pneg %p33
      $region42: #{tpu_custom_call.1} parent=39 // pred_check_branch
        %230 = sbr.rel (%p228) target = $region44
      $region43: #{tpu_custom_call.1} parent=39 // pred_region
        %p231 = scmp.lt.s32.totalorder %s13, 1
        %s232 = scalar_select %p231, %s13, 1
        %s233 = smul.addr %s232, 16
        %s234 = smul.addr %s233, 4
        %s235 = scalar_lea.vmem %s0, %s234
      $region44: #{tpu_custom_call.1} parent=39 // pred_fallthru
        _
    $region40: #{tpu_custom_call.1} parent=5 // pred_fallthru
      _
    %p236 = scmp.le.s32.totalorder 1, %s13
    %p237 = scmp.lt.s32.totalorder %s13, 3
    %p238 = pnand %p236, %p237
    %p239 = pneg %p238
    // Predicated region
    $region45: #{tpu_custom_call.1} parent=5 // pred_check
      _
    $region46: #{tpu_custom_call.1} parent=5 // pred_check_branch
      %241 = sbr.rel (%p238) target = $region48
    $region47: #{tpu_custom_call.1} parent=5 // pred_region
      %s242 = ssub.s32 %s13, 1
      %p243 = scmp.lt.s32.totalorder %s18, 1
      %s244 = scalar_select %p243, %s18, 1
      %s245 = smul.addr %s244, 16
      %s246 = smul.addr %s245, 4
      %s247 = scalar_lea.vmem %s0, %s246
      %p248 = pneg %p39
      %p249 = pneg %p36
      %p250 = pneg %p60
      %p251 = pneg %p57
      %p252 = pneg %p81
      %p253 = pneg %p78
      %p254 = pneg %p102
      %p255 = pneg %p99
      %p256 = pneg %p123
      %p257 = pneg %p120
      %p258 = pneg %p144
      %p259 = pneg %p141
      %p260 = pneg %p165
      %p261 = pneg %p162
      %p262 = pneg %p191
      %p263 = pneg %p188
      %p264 = scmp.lt.s32.totalorder %s18, 1
      %s265 = scalar_select %p264, %s18, 1
      %s266 = smul.addr %s265, 16
      %s267 = smul.addr %s266, 4
      %s268 = scalar_lea.vmem %s7, %s267
      %p269 = scmp.lt.s32.totalorder %s18, 1
      %s270 = scalar_select %p269, %s18, 1
      %s271 = smul.addr %s270, 16
      %s272 = smul.addr %s271, 4
      %s273 = scalar_lea.vmem %s0, %s272
      %p274 = scmp.lt.s32.totalorder %s18, 1
      %s275 = scalar_select %p274, %s18, 1
      %s276 = smul.addr %s275, 16
      %s277 = smul.addr %s276, 4
      %s278 = scalar_lea.vmem %s7, %s277
      %v280 = vlaneseq
      %v281 = vand.u32 %v280, 127
      %vm282 = vcmp.gt.s32.totalorder %v281, 0
      %vm283 = vcmp.lt.s32.totalorder %v281, 15
      %vm284 = vcmp.lt.s32.totalorder %v281, 16
      %v285 = vld [vmem:[%s273] sm:$0xf]
      %v286 = vld [vmem:[%s273 + $0x4] sm:$0xf]
      %v287 = vunpack.c.l.bf16 %v285
      %v288 = vunpack.c.l.bf16 %v286
      %289 = vrot.lane.b32.xlu0 %v287, 1
      %v290 = vpop.permute.xlu0 %289
      %291 = vrot.lane.b32.xlu0 %v288, 1
      %v292 = vpop.permute.xlu0 %291
      %v293 = vsel %vm282, %v290, 0.0
      %v294 = vsel %vm282, %v292, 0.0
      %295 = vrot.lane.b32.xlu0 %v287, 127
      %v296 = vpop.permute.xlu0 %295
      %297 = vrot.lane.b32.xlu0 %v288, 127
      %v298 = vpop.permute.xlu0 %297
      %v299 = vsel %vm283, %v296, 0.0
      %v300 = vsel %vm283, %v298, 0.0
      %v301 = vld [vmem:[%s1] sm:$0xf]
      %v302 = vld [vmem:[%s1 + $0x4] sm:$0xf]
      %v303 = vld [vmem:[%s1 + $0x8] sm:$0xf]
      %v304 = vld [vmem:[%s1 + $0xc] sm:$0xf]
      %v305 = vld [vmem:[%s1 + $0x10] sm:$0xf]
      %v306 = vld [vmem:[%s1 + $0x14] sm:$0xf]
      %v307 = vpack.c.bf16 %v294, %v293
      %v310 = vunpack.c.l.b16 %v301
      %v311 = vunpack.c.l.b16 %v302
      %v312 = vpack.c.b16 %v311, %v310
      %vm313 = vcmask 130048
      %v315 = vsel %vm313, %v312, 0
      %317 = vmatprep.subr.bf16.mxu0 0
      %318 = vmatpush1.bf16.msra.mxu0 %v307
      %319 = vmatprep.subr.bf16.mxu0 0
      %320 = vmatpush1.bf16.msra.mxu0 0
      %321 = vmatprep.subr.bf16.mxu0 0
      %322 = vmatpush1.bf16.msra.mxu0 0
      %323 = vmatprep.subr.bf16.mxu0 0
      %324 = vmatpush1.bf16.msra.mxu0 0
      %325 = vmatprep.subr.bf16.mxu0 0
      %326 = vmatpush1.bf16.msra.mxu0 0
      %327 = vmatprep.subr.bf16.mxu0 0
      %328 = vmatpush1.bf16.msra.mxu0 0
      %329 = vmatprep.subr.bf16.mxu0 0
      %330 = vmatpush1.bf16.msra.mxu0 0
      %331 = vmatprep.subr.bf16.mxu0 0
      %332 = vmatpush1.bf16.msra.mxu0 0
      %333 = vmatprep.subr.bf16.mxu0 0
      %334 = vmatpush1.bf16.msra.mxu0 0
      %335 = vmatprep.subr.bf16.mxu0 0
      %336 = vmatpush1.bf16.msra.mxu0 0
      %337 = vmatprep.subr.bf16.mxu0 0
      %338 = vmatpush1.bf16.msra.mxu0 0
      %339 = vmatprep.subr.bf16.mxu0 0
      %340 = vmatpush1.bf16.msra.mxu0 0
      %341 = vmatprep.subr.bf16.mxu0 0
      %342 = vmatpush1.bf16.msra.mxu0 0
      %343 = vmatprep.subr.bf16.mxu0 0
      %344 = vmatpush1.bf16.msra.mxu0 0
      %345 = vmatprep.subr.bf16.mxu0 0
      %346 = vmatpush1.bf16.msra.mxu0 0
      %347 = vmatprep.subr.bf16.mxu0 0
      %348 = vmatpush1.bf16.msra.mxu0 0
      %349 = vmatprep.mubr.bf16.mxu0 0
      %350 = vmatmul.mubr.bf16.gmra.mrb[0].mxu0 %v315
      %v351 = vpop.f32.mrb[0].mxu0
      %v352 = vadd.f32 0.0, %v351
      %v353 = vpop.f32.mrb[0].mxu0
      %v354 = vpop.f32.mrb[0].mxu0
      %v355 = vadd.f32 0.0, %v354
      %v356 = vpop.f32.mrb[0].mxu0
      %357 = vdwg.mxu0
      %v360 = vunpack.c.l.b16 %v303
      %v361 = vunpack.c.l.b16 %v304
      %v362 = vpack.c.b16 %v361, %v360
      %v365 = vunpack.c.l.b16 %v285
      %v366 = vunpack.c.l.b16 %v286
      %v367 = vpack.c.b16 %v366, %v365
      %v370 = vsel %vm313, %v362, 0
      %372 = vmatprep.subr.bf16.mxu0 0
      %373 = vmatpush1.bf16.msra.mxu0 %v367
      %374 = vmatprep.subr.bf16.mxu0 0
      %375 = vmatpush1.bf16.msra.mxu0 0
      %376 = vmatprep.subr.bf16.mxu0 0
      %377 = vmatpush1.bf16.msra.mxu0 0
      %378 = vmatprep.subr.bf16.mxu0 0
      %379 = vmatpush1.bf16.msra.mxu0 0
      %380 = vmatprep.subr.bf16.mxu0 0
      %381 = vmatpush1.bf16.msra.mxu0 0
      %382 = vmatprep.subr.bf16.mxu0 0
      %383 = vmatpush1.bf16.msra.mxu0 0
      %384 = vmatprep.subr.bf16.mxu0 0
      %385 = vmatpush1.bf16.msra.mxu0 0
      %386 = vmatprep.subr.bf16.mxu0 0
      %387 = vmatpush1.bf16.msra.mxu0 0
      %388 = vmatprep.subr.bf16.mxu0 0
      %389 = vmatpush1.bf16.msra.mxu0 0
      %390 = vmatprep.subr.bf16.mxu0 0
      %391 = vmatpush1.bf16.msra.mxu0 0
      %392 = vmatprep.subr.bf16.mxu0 0
      %393 = vmatpush1.bf16.msra.mxu0 0
      %394 = vmatprep.subr.bf16.mxu0 0
      %395 = vmatpush1.bf16.msra.mxu0 0
      %396 = vmatprep.subr.bf16.mxu0 0
      %397 = vmatpush1.bf16.msra.mxu0 0
      %398 = vmatprep.subr.bf16.mxu0 0
      %399 = vmatpush1.bf16.msra.mxu0 0
      %400 = vmatprep.subr.bf16.mxu0 0
      %401 = vmatpush1.bf16.msra.mxu0 0
      %402 = vmatprep.subr.bf16.mxu0 0
      %403 = vmatpush1.bf16.msra.mxu0 0
      %404 = vmatprep.mubr.bf16.mxu0 0
      %405 = vmatmul.mubr.bf16.gmra.mrb[0].mxu0 %v370
      %v406 = vpop.f32.mrb[0].mxu0
      %v407 = vadd.f32 %v352, %v406
      %v408 = vpop.f32.mrb[0].mxu0
      %v409 = vpop.f32.mrb[0].mxu0
      %v410 = vadd.f32 %v355, %v409
      %v411 = vpop.f32.mrb[0].mxu0
      %412 = vdwg.mxu0
      %v413 = vpack.c.bf16 %v300, %v299
      %v416 = vunpack.c.l.b16 %v305
      %v417 = vunpack.c.l.b16 %v306
      %v418 = vpack.c.b16 %v417, %v416
      %v420 = vsel %vm313, %v418, 0
      %422 = vmatprep.subr.bf16.mxu0 0
      %423 = vmatpush1.bf16.msra.mxu0 %v413
      %424 = vmatprep.subr.bf16.mxu0 0
      %425 = vmatpush1.bf16.msra.mxu0 0
      %426 = vmatprep.subr.bf16.mxu0 0
      %427 = vmatpush1.bf16.msra.mxu0 0
      %428 = vmatprep.subr.bf16.mxu0 0
      %429 = vmatpush1.bf16.msra.mxu0 0
      %430 = vmatprep.subr.bf16.mxu0 0
      %431 = vmatpush1.bf16.msra.mxu0 0
      %432 = vmatprep.subr.bf16.mxu0 0
      %433 = vmatpush1.bf16.msra.mxu0 0
      %434 = vmatprep.subr.bf16.mxu0 0
      %435 = vmatpush1.bf16.msra.mxu0 0
      %436 = vmatprep.subr.bf16.mxu0 0
      %437 = vmatpush1.bf16.msra.mxu0 0
      %438 = vmatprep.subr.bf16.mxu0 0
      %439 = vmatpush1.bf16.msra.mxu0 0
      %440 = vmatprep.subr.bf16.mxu0 0
      %441 = vmatpush1.bf16.msra.mxu0 0
      %442 = vmatprep.subr.bf16.mxu0 0
      %443 = vmatpush1.bf16.msra.mxu0 0
      %444 = vmatprep.subr.bf16.mxu0 0
      %445 = vmatpush1.bf16.msra.mxu0 0
      %446 = vmatprep.subr.bf16.mxu0 0
      %447 = vmatpush1.bf16.msra.mxu0 0
      %448 = vmatprep.subr.bf16.mxu0 0
      %449 = vmatpush1.bf16.msra.mxu0 0
      %450 = vmatprep.subr.bf16.mxu0 0
      %451 = vmatpush1.bf16.msra.mxu0 0
      %452 = vmatprep.subr.bf16.mxu0 0
      %453 = vmatpush1.bf16.msra.mxu0 0
      %454 = vmatprep.mubr.bf16.mxu0 0
      %455 = vmatmul.mubr.bf16.gmra.mrb[0].mxu0 %v420
      %v456 = vpop.f32.mrb[0].mxu0
      %v457 = vadd.f32 0.0, %v456
      %v458 = vpop.f32.mrb[0].mxu0
      %v459 = vpop.f32.mrb[0].mxu0
      %v460 = vadd.f32 0.0, %v459
      %v461 = vpop.f32.mrb[0].mxu0
      %462 = vdwg.mxu0
      %v463 = vadd.f32 %v407, %v457
      %v464 = vadd.f32 %v410, %v460
      %v465 = vld [vmem:[%s2] sm:$0xff]
      %v466 = vld [vmem:[%s2 + $0x8] sm:$0xff]
      %468 = vset.pattern.permute.xlu0 0
      %469 = vperm.xlu0 %468, %v465
      %v470 = vpop.permute.xlu0 %469
      %473 = vset.pattern.permute.xlu0 0
      %474 = vperm.xlu0 %473, %v466
      %v475 = vpop.permute.xlu0 %474
      %v477 = vadd.f32 %v463, %v470
      %v478 = vadd.f32 %v464, %v475
      %v479 = vmax.f32 %v477, 0.0
      %v480 = vmax.f32 %v478, 0.0
      %481 = vst [vmem:[#allocation2] sm:$0xff] %v479
      %482 = vst [vmem:[#allocation2 + $0x8] sm:$0xff] %v480
      %v483 = vsel %vm284, %v479, 0.0
      %v484 = vsel %vm284, %v480, 0.0
      %485 = vadd.xlane.f32.xlu0 %v483
      %v486 = vpop.xlane.xlu0 %485
      %487 = vadd.xlane.f32.xlu0 %v484
      %v488 = vpop.xlane.xlu0 %487
      %v489 = vld [vmem:[%s273 + $0x8] sm:$0xf]
      %v490 = vld [vmem:[%s273 + $0xc] sm:$0xf]
      %v491 = vunpack.c.l.bf16 %v489
      %v492 = vunpack.c.l.bf16 %v490
      %v493 = vadd.f32 %v491, %v479
      %v494 = vadd.f32 %v492, %v480
      %495 = vrot.lane.b32.xlu0 %v493, 1
      %v496 = vpop.permute.xlu0 %495
      %497 = vrot.lane.b32.xlu0 %v494, 1
      %v498 = vpop.permute.xlu0 %497
      %v499 = vsel %vm282, %v496, 0.0
      %v500 = vsel %vm282, %v498, 0.0
      %501 = vrot.lane.b32.xlu0 %v493, 127
      %v502 = vpop.permute.xlu0 %501
      %503 = vrot.lane.b32.xlu0 %v494, 127
      %v504 = vpop.permute.xlu0 %503
      %v505 = vsel %vm283, %v502, 0.0
      %v506 = vsel %vm283, %v504, 0.0
      %s507 = scalar_lea.vmem %s1, 24
      %v508 = vld [vmem:[%s507] sm:$0xf]
      %v509 = vld [vmem:[%s507 + $0x4] sm:$0xf]
      %v510 = vld [vmem:[%s507 + $0x8] sm:$0xf]
      %v511 = vld [vmem:[%s507 + $0xc] sm:$0xf]
      %v512 = vld [vmem:[%s507 + $0x10] sm:$0xf]
      %v513 = vld [vmem:[%s507 + $0x14] sm:$0xf]
      %v514 = vpack.c.bf16 %v494, %v493
      %v515 = vpack.c.bf16 %v500, %v499
      %v518 = vunpack.c.l.b16 %v508
      %v519 = vunpack.c.l.b16 %v509
      %v520 = vpack.c.b16 %v519, %v518
      %v522 = vsel %vm313, %v520, 0
      %524 = vmatprep.subr.bf16.mxu0 0
      %525 = vmatpush1.bf16.msra.mxu0 %v515
      %526 = vmatprep.subr.bf16.mxu0 0
      %527 = vmatpush1.bf16.msra.mxu0 0
      %528 = vmatprep.subr.bf16.mxu0 0
      %529 = vmatpush1.bf16.msra.mxu0 0
      %530 = vmatprep.subr.bf16.mxu0 0
      %531 = vmatpush1.bf16.msra.mxu0 0
      %532 = vmatprep.subr.bf16.mxu0 0
      %533 = vmatpush1.bf16.msra.mxu0 0
      %534 = vmatprep.subr.bf16.mxu0 0
      %535 = vmatpush1.bf16.msra.mxu0 0
      %536 = vmatprep.subr.bf16.mxu0 0
      %537 = vmatpush1.bf16.msra.mxu0 0
      %538 = vmatprep.subr.bf16.mxu0 0
      %539 = vmatpush1.bf16.msra.mxu0 0
      %540 = vmatprep.subr.bf16.mxu0 0
      %541 = vmatpush1.bf16.msra.mxu0 0
      %542 = vmatprep.subr.bf16.mxu0 0
      %543 = vmatpush1.bf16.msra.mxu0 0
      %544 = vmatprep.subr.bf16.mxu0 0
      %545 = vmatpush1.bf16.msra.mxu0 0
      %546 = vmatprep.subr.bf16.mxu0 0
      %547 = vmatpush1.bf16.msra.mxu0 0
      %548 = vmatprep.subr.bf16.mxu0 0
      %549 = vmatpush1.bf16.msra.mxu0 0
      %550 = vmatprep.subr.bf16.mxu0 0
      %551 = vmatpush1.bf16.msra.mxu0 0
      %552 = vmatprep.subr.bf16.mxu0 0
      %553 = vmatpush1.bf16.msra.mxu0 0
      %554 = vmatprep.subr.bf16.mxu0 0
      %555 = vmatpush1.bf16.msra.mxu0 0
      %556 = vmatprep.mubr.bf16.mxu0 0
      %557 = vmatmul.mubr.bf16.gmra.mrb[0].mxu0 %v522
      %v558 = vpop.f32.mrb[0].mxu0
      %v559 = vadd.f32 0.0, %v558
      %v560 = vpop.f32.mrb[0].mxu0
      %v561 = vpop.f32.mrb[0].mxu0
      %v562 = vadd.f32 0.0, %v561
      %v563 = vpop.f32.mrb[0].mxu0
      %564 = vdwg.mxu0
      %v567 = vunpack.c.l.b16 %v510
      %v568 = vunpack.c.l.b16 %v511
      %v569 = vpack.c.b16 %v568, %v567
      %v571 = vsel %vm313, %v569, 0
      %573 = vmatprep.subr.bf16.mxu0 0
      %574 = vmatpush1.bf16.msra.mxu0 %v514
      %575 = vmatprep.subr.bf16.mxu0 0
      %576 = vmatpush1.bf16.msra.mxu0 0
      %577 = vmatprep.subr.bf16.mxu0 0
      %578 = vmatpush1.bf16.msra.mxu0 0
      %579 = vmatprep.subr.bf16.mxu0 0
      %580 = vmatpush1.bf16.msra.mxu0 0
      %581 = vmatprep.subr.bf16.mxu0 0
      %582 = vmatpush1.bf16.msra.mxu0 0
      %583 = vmatprep.subr.bf16.mxu0 0
      %584 = vmatpush1.bf16.msra.mxu0 0
      %585 = vmatprep.subr.bf16.mxu0 0
      %586 = vmatpush1.bf16.msra.mxu0 0
      %587 = vmatprep.subr.bf16.mxu0 0
      %588 = vmatpush1.bf16.msra.mxu0 0
      %589 = vmatprep.subr.bf16.mxu0 0
      %590 = vmatpush1.bf16.msra.mxu0 0
      %591 = vmatprep.subr.bf16.mxu0 0
      %592 = vmatpush1.bf16.msra.mxu0 0
      %593 = vmatprep.subr.bf16.mxu0 0
      %594 = vmatpush1.bf16.msra.mxu0 0
      %595 = vmatprep.subr.bf16.mxu0 0
      %596 = vmatpush1.bf16.msra.mxu0 0
      %597 = vmatprep.subr.bf16.mxu0 0
      %598 = vmatpush1.bf16.msra.mxu0 0
      %599 = vmatprep.subr.bf16.mxu0 0
      %600 = vmatpush1.bf16.msra.mxu0 0
      %601 = vmatprep.subr.bf16.mxu0 0
      %602 = vmatpush1.bf16.msra.mxu0 0
      %603 = vmatprep.subr.bf16.mxu0 0
      %604 = vmatpush1.bf16.msra.mxu0 0
      %605 = vmatprep.mubr.bf16.mxu0 0
      %606 = vmatmul.mubr.bf16.gmra.mrb[0].mxu0 %v571
      %v607 = vpop.f32.mrb[0].mxu0
      %v608 = vadd.f32 %v559, %v607
      %v609 = vpop.f32.mrb[0].mxu0
      %v610 = vpop.f32.mrb[0].mxu0
      %v611 = vadd.f32 %v562, %v610
      %v612 = vpop.f32.mrb[0].mxu0
      %613 = vdwg.mxu0
      %v614 = vpack.c.bf16 %v506, %v505
      %v617 = vunpack.c.l.b16 %v512
      %v618 = vunpack.c.l.b16 %v513
      %v619 = vpack.c.b16 %v618, %v617
      %v621 = vsel %vm313, %v619, 0
      %623 = vmatprep.subr.bf16.mxu0 0
      %624 = vmatpush1.bf16.msra.mxu0 %v614
      %625 = vmatprep.subr.bf16.mxu0 0
      %626 = vmatpush1.bf16.msra.mxu0 0
      %627 = vmatprep.subr.bf16.mxu0 0
      %628 = vmatpush1.bf16.msra.mxu0 0
      %629 = vmatprep.subr.bf16.mxu0 0
      %630 = vmatpush1.bf16.msra.mxu0 0
      %631 = vmatprep.subr.bf16.mxu0 0
      %632 = vmatpush1.bf16.msra.mxu0 0
      %633 = vmatprep.subr.bf16.mxu0 0
      %634 = vmatpush1.bf16.msra.mxu0 0
      %635 = vmatprep.subr.bf16.mxu0 0
      %636 = vmatpush1.bf16.msra.mxu0 0
      %637 = vmatprep.subr.bf16.mxu0 0
      %638 = vmatpush1.bf16.msra.mxu0 0
      %639 = vmatprep.subr.bf16.mxu0 0
      %640 = vmatpush1.bf16.msra.mxu0 0
      %641 = vmatprep.subr.bf16.mxu0 0
      %642 = vmatpush1.bf16.msra.mxu0 0
      %643 = vmatprep.subr.bf16.mxu0 0
      %644 = vmatpush1.bf16.msra.mxu0 0
      %645 = vmatprep.subr.bf16.mxu0 0
      %646 = vmatpush1.bf16.msra.mxu0 0
      %647 = vmatprep.subr.bf16.mxu0 0
      %648 = vmatpush1.bf16.msra.mxu0 0
      %649 = vmatprep.subr.bf16.mxu0 0
      %650 = vmatpush1.bf16.msra.mxu0 0
      %651 = vmatprep.subr.bf16.mxu0 0
      %652 = vmatpush1.bf16.msra.mxu0 0
      %653 = vmatprep.subr.bf16.mxu0 0
      %654 = vmatpush1.bf16.msra.mxu0 0
      %655 = vmatprep.mubr.bf16.mxu0 0
      %656 = vmatmul.mubr.bf16.gmra.mrb[0].mxu0 %v621
      %v657 = vpop.f32.mrb[0].mxu0
      %v658 = vadd.f32 0.0, %v657
      %v659 = vpop.f32.mrb[0].mxu0
      %v660 = vpop.f32.mrb[0].mxu0
      %v661 = vadd.f32 0.0, %v660
      %v662 = vpop.f32.mrb[0].mxu0
      %663 = vdwg.mxu0
      %v664 = vadd.f32 %v608, %v658
      %v665 = vadd.f32 %v611, %v661
      %s666 = scalar_lea.vmem %s2, 16
      %v667 = vld [vmem:[%s666] sm:$0xff]
      %v668 = vld [vmem:[%s666 + $0x8] sm:$0xff]
      %670 = vset.pattern.permute.xlu0 0
      %671 = vperm.xlu0 %670, %v667
      %v672 = vpop.permute.xlu0 %671
      %675 = vset.pattern.permute.xlu0 0
      %676 = vperm.xlu0 %675, %v668
      %v677 = vpop.permute.xlu0 %676
      %v679 = vadd.f32 %v664, %v672
      %v680 = vadd.f32 %v665, %v677
      %v681 = vmax.f32 %v679, 0.0
      %v682 = vmax.f32 %v680, 0.0
      %683 = vst [vmem:[#allocation2 + $0x10] sm:$0xff] %v681
      %684 = vst [vmem:[#allocation2 + $0x18] sm:$0xff] %v682
      %v685 = vsel %vm284, %v681, 0.0
      %v686 = vsel %vm284, %v682, 0.0
      %687 = vadd.xlane.f32.xlu0 %v685
      %v688 = vpop.xlane.xlu0 %687
      %689 = vadd.xlane.f32.xlu0 %v686
      %v690 = vpop.xlane.xlu0 %689
      %v691 = vld [vmem:[%s273 + $0x10] sm:$0xf]
      %v692 = vld [vmem:[%s273 + $0x14] sm:$0xf]
      %v693 = vunpack.c.l.bf16 %v691
      %v694 = vunpack.c.l.bf16 %v692
      %v695 = vadd.f32 %v693, %v681
      %v696 = vadd.f32 %v694, %v682
      %697 = vrot.lane.b32.xlu0 %v695, 1
      %v698 = vpop.permute.xlu0 %697
      %699 = vrot.lane.b32.xlu0 %v696, 1
      %v700 = vpop.permute.xlu0 %699
      %v701 = vsel %vm282, %v698, 0.0
      %v702 = vsel %vm282, %v700, 0.0
      %703 = vrot.lane.b32.xlu0 %v695, 127
      %v704 = vpop.permute.xlu0 %703
      %705 = vrot.lane.b32.xlu0 %v696, 127
      %v706 = vpop.permute.xlu0 %705
      %v707 = vsel %vm283, %v704, 0.0
      %v708 = vsel %vm283, %v706, 0.0
      %s709 = scalar_lea.vmem %s1, 48
      %v710 = vld [vmem:[%s709] sm:$0xf]
      %v711 = vld [vmem:[%s709 + $0x4] sm:$0xf]
      %v712 = vld [vmem:[%s709 + $0x8] sm:$0xf]
      %v713 = vld [vmem:[%s709 + $0xc] sm:$0xf]
      %v714 = vld [vmem:[%s709 + $0x10] sm:$0xf]
      %v715 = vld [vmem:[%s709 + $0x14] sm:$0xf]
      %v716 = vpack.c.bf16 %v696, %v695
      %v717 = vpack.c.bf16 %v702, %v701
      %v720 = vunpack.c.l.b16 %v710
      %v721 = vunpack.c.l.b16 %v711
      %v722 = vpack.c.b16 %v721, %v720
      %v724 = vsel %vm313, %v722, 0
      %726 = vmatprep.subr.bf16.mxu0 0
      %727 = vmatpush1.bf16.msra.mxu0 %v717
      %728 = vmatprep.subr.bf16.mxu0 0
      %729 = vmatpush1.bf16.msra.mxu0 0
      %730 = vmatprep.subr.bf16.mxu0 0
      %731 = vmatpush1.bf16.msra.mxu0 0
      %732 = vmatprep.subr.bf16.mxu0 0
      %733 = vmatpush1.bf16.msra.mxu0 0
      %734 = vmatprep.subr.bf16.mxu0 0
      %735 = vmatpush1.bf16.msra.mxu0 0
      %736 = vmatprep.subr.bf16.mxu0 0
      %737 = vmatpush1.bf16.msra.mxu0 0
      %738 = vmatprep.subr.bf16.mxu0 0
      %739 = vmatpush1.bf16.msra.mxu0 0
      %740 = vmatprep.subr.bf16.mxu0 0
      %741 = vmatpush1.bf16.msra.mxu0 0
      %742 = vmatprep.subr.bf16.mxu0 0
      %743 = vmatpush1.bf16.msra.mxu0 0
      %744 = vmatprep.subr.bf16.mxu0 0
      %745 = vmatpush1.bf16.msra.mxu0 0
      %746 = vmatprep.subr.bf16.mxu0 0
      %747 = vmatpush1.bf16.msra.mxu0 0
      %748 = vmatprep.subr.bf16.mxu0 0
      %749 = vmatpush1.bf16.msra.mxu0 0
      %750 = vmatprep.subr.bf16.mxu0 0
      %751 = vmatpush1.bf16.msra.mxu0 0
      %752 = vmatprep.subr.bf16.mxu0 0
      %753 = vmatpush1.bf16.msra.mxu0 0
      %754 = vmatprep.subr.bf16.mxu0 0
      %755 = vmatpush1.bf16.msra.mxu0 0
      %756 = vmatprep.subr.bf16.mxu0 0
      %757 = vmatpush1.bf16.msra.mxu0 0
      %758 = vmatprep.mubr.bf16.mxu0 0
      %759 = vmatmul.mubr.bf16.gmra.mrb[0].mxu0 %v724
      %v760 = vpop.f32.mrb[0].mxu0
      %v761 = vadd.f32 0.0, %v760
      %v762 = vpop.f32.mrb[0].mxu0
      %v763 = vpop.f32.mrb[0].mxu0
      %v764 = vadd.f32 0.0, %v763
      %v765 = vpop.f32.mrb[0].mxu0
      %766 = vdwg.mxu0
      %v769 = vunpack.c.l.b16 %v712
      %v770 = vunpack.c.l.b16 %v713
      %v771 = vpack.c.b16 %v770, %v769
      %v773 = vsel %vm313, %v771, 0
      %775 = vmatprep.subr.bf16.mxu0 0
      %776 = vmatpush1.bf16.msra.mxu0 %v716
      %777 = vmatprep.subr.bf16.mxu0 0
      %778 = vmatpush1.bf16.msra.mxu0 0
      %779 = vmatprep.subr.bf16.mxu0 0
      %780 = vmatpush1.bf16.msra.mxu0 0
      %781 = vmatprep.subr.bf16.mxu0 0
      %782 = vmatpush1.bf16.msra.mxu0 0
      %783 = vmatprep.subr.bf16.mxu0 0
      %784 = vmatpush1.bf16.msra.mxu0 0
      %785 = vmatprep.subr.bf16.mxu0 0
      %786 = vmatpush1.bf16.msra.mxu0 0
      %787 = vmatprep.subr.bf16.mxu0 0
      %788 = vmatpush1.bf16.msra.mxu0 0
      %789 = vmatprep.subr.bf16.mxu0 0
      %790 = vmatpush1.bf16.msra.mxu0 0
      %791 = vmatprep.subr.bf16.mxu0 0
      %792 = vmatpush1.bf16.msra.mxu0 0
      %793 = vmatprep.subr.bf16.mxu0 0
      %794 = vmatpush1.bf16.msra.mxu0 0
      %795 = vmatprep.subr.bf16.mxu0 0
      %796 = vmatpush1.bf16.msra.mxu0 0
      %797 = vmatprep.subr.bf16.mxu0 0
      %798 = vmatpush1.bf16.msra.mxu0 0
      %799 = vmatprep.subr.bf16.mxu0 0
      %800 = vmatpush1.bf16.msra.mxu0 0
      %801 = vmatprep.subr.bf16.mxu0 0
      %802 = vmatpush1.bf16.msra.mxu0 0
      %803 = vmatprep.subr.bf16.mxu0 0
      %804 = vmatpush1.bf16.msra.mxu0 0
      %805 = vmatprep.subr.bf16.mxu0 0
      %806 = vmatpush1.bf16.msra.mxu0 0
      %807 = vmatprep.mubr.bf16.mxu0 0
      %808 = vmatmul.mubr.bf16.gmra.mrb[0].mxu0 %v773
      %v809 = vpop.f32.mrb[0].mxu0
      %v810 = vadd.f32 %v761, %v809
      %v811 = vpop.f32.mrb[0].mxu0
      %v812 = vpop.f32.mrb[0].mxu0
      %v813 = vadd.f32 %v764, %v812
      %v814 = vpop.f32.mrb[0].mxu0
      %815 = vdwg.mxu0
      %v816 = vpack.c.bf16 %v708, %v707
      %v819 = vunpack.c.l.b16 %v714
      %v820 = vunpack.c.l.b16 %v715
      %v821 = vpack.c.b16 %v820, %v819
      %v823 = vsel %vm313, %v821, 0
      %825 = vmatprep.subr.bf16.mxu0 0
      %826 = vmatpush1.bf16.msra.mxu0 %v816
      %827 = vmatprep.subr.bf16.mxu0 0
      %828 = vmatpush1.bf16.msra.mxu0 0
      %829 = vmatprep.subr.bf16.mxu0 0
      %830 = vmatpush1.bf16.msra.mxu0 0
      %831 = vmatprep.subr.bf16.mxu0 0
      %832 = vmatpush1.bf16.msra.mxu0 0
      %833 = vmatprep.subr.bf16.mxu0 0
      %834 = vmatpush1.bf16.msra.mxu0 0
      %835 = vmatprep.subr.bf16.mxu0 0
      %836 = vmatpush1.bf16.msra.mxu0 0
      %837 = vmatprep.subr.bf16.mxu0 0
      %838 = vmatpush1.bf16.msra.mxu0 0
      %839 = vmatprep.subr.bf16.mxu0 0
      %840 = vmatpush1.bf16.msra.mxu0 0
      %841 = vmatprep.subr.bf16.mxu0 0
      %842 = vmatpush1.bf16.msra.mxu0 0
      %843 = vmatprep.subr.bf16.mxu0 0
      %844 = vmatpush1.bf16.msra.mxu0 0
      %845 = vmatprep.subr.bf16.mxu0 0
      %846 = vmatpush1.bf16.msra.mxu0 0
      %847 = vmatprep.subr.bf16.mxu0 0
      %848 = vmatpush1.bf16.msra.mxu0 0
      %849 = vmatprep.subr.bf16.mxu0 0
      %850 = vmatpush1.bf16.msra.mxu0 0
      %851 = vmatprep.subr.bf16.mxu0 0
      %852 = vmatpush1.bf16.msra.mxu0 0
      %853 = vmatprep.subr.bf16.mxu0 0
      %854 = vmatpush1.bf16.msra.mxu0 0
      %855 = vmatprep.subr.bf16.mxu0 0
      %856 = vmatpush1.bf16.msra.mxu0 0
      %857 = vmatprep.mubr.bf16.mxu0 0
      %858 = vmatmul.mubr.bf16.gmra.mrb[0].mxu0 %v823
      %v859 = vpop.f32.mrb[0].mxu0
      %v860 = vadd.f32 0.0, %v859
      %v861 = vpop.f32.mrb[0].mxu0
      %v862 = vpop.f32.mrb[0].mxu0
      %v863 = vadd.f32 0.0, %v862
      %v864 = vpop.f32.mrb[0].mxu0
      %865 = vdwg.mxu0
      %v866 = vadd.f32 %v810, %v860
      %v867 = vadd.f32 %v813, %v863
      %s868 = scalar_lea.vmem %s2, 32
      %v869 = vld [vmem:[%s868] sm:$0xff]
      %v870 = vld [vmem:[%s868 + $0x8] sm:$0xff]
      %872 = vset.pattern.permute.xlu0 0
      %873 = vperm.xlu0 %872, %v869
      %v874 = vpop.permute.xlu0 %873
      %877 = vset.pattern.permute.xlu0 0
      %878 = vperm.xlu0 %877, %v870
      %v879 = vpop.permute.xlu0 %878
      %v881 = vadd.f32 %v866, %v874
      %v882 = vadd.f32 %v867, %v879
      %v883 = vmax.f32 %v881, 0.0
      %v884 = vmax.f32 %v882, 0.0
      %885 = vst [vmem:[#allocation2 + $0x20] sm:$0xff] %v883
      %886 = vst [vmem:[#allocation2 + $0x28] sm:$0xff] %v884
      %v887 = vsel %vm284, %v883, 0.0
      %v888 = vsel %vm284, %v884, 0.0
      %889 = vadd.xlane.f32.xlu0 %v887
      %v890 = vpop.xlane.xlu0 %889
      %891 = vadd.xlane.f32.xlu0 %v888
      %v892 = vpop.xlane.xlu0 %891
      %v893 = vld [vmem:[%s273 + $0x18] sm:$0xf]
      %v894 = vld [vmem:[%s273 + $0x1c] sm:$0xf]
      %v895 = vunpack.c.l.bf16 %v893
      %v896 = vunpack.c.l.bf16 %v894
      %v897 = vadd.f32 %v895, %v883
      %v898 = vadd.f32 %v896, %v884
      %899 = vrot.lane.b32.xlu0 %v897, 1
      %v900 = vpop.permute.xlu0 %899
      %901 = vrot.lane.b32.xlu0 %v898, 1
      %v902 = vpop.permute.xlu0 %901
      %v903 = vsel %vm282, %v900, 0.0
      %v904 = vsel %vm282, %v902, 0.0
      %905 = vrot.lane.b32.xlu0 %v897, 127
      %v906 = vpop.permute.xlu0 %905
      %907 = vrot.lane.b32.xlu0 %v898, 127
      %v908 = vpop.permute.xlu0 %907
      %v909 = vsel %vm283, %v906, 0.0
      %v910 = vsel %vm283, %v908, 0.0
      %s911 = scalar_lea.vmem %s1, 72
      %v912 = vld [vmem:[%s911] sm:$0xf]
      %v913 = vld [vmem:[%s911 + $0x4] sm:$0xf]
      %v914 = vld [vmem:[%s911 + $0x8] sm:$0xf]
      %v915 = vld [vmem:[%s911 + $0xc] sm:$0xf]
      %v916 = vld [vmem:[%s911 + $0x10] sm:$0xf]
      %v917 = vld [vmem:[%s911 + $0x14] sm:$0xf]
      %v918 = vpack.c.bf16 %v898, %v897
      %v919 = vpack.c.bf16 %v904, %v903
      %v922 = vunpack.c.l.b16 %v912
      %v923 = vunpack.c.l.b16 %v913
      %v924 = vpack.c.b16 %v923, %v922
      %v926 = vsel %vm313, %v924, 0
      %928 = vmatprep.subr.bf16.mxu0 0
      %929 = vmatpush1.bf16.msra.mxu0 %v919
      %930 = vmatprep.subr.bf16.mxu0 0
      %931 = vmatpush1.bf16.msra.mxu0 0
      %932 = vmatprep.subr.bf16.mxu0 0
      %933 = vmatpush1.bf16.msra.mxu0 0
      %934 = vmatprep.subr.bf16.mxu0 0
      %935 = vmatpush1.bf16.msra.mxu0 0
      %936 = vmatprep.subr.bf16.mxu0 0
      %937 = vmatpush1.bf16.msra.mxu0 0
      %938 = vmatprep.subr.bf16.mxu0 0
      %939 = vmatpush1.bf16.msra.mxu0 0
      %940 = vmatprep.subr.bf16.mxu0 0
      %941 = vmatpush1.bf16.msra.mxu0 0
      %942 = vmatprep.subr.bf16.mxu0 0
      %943 = vmatpush1.bf16.msra.mxu0 0
      %944 = vmatprep.subr.bf16.mxu0 0
      %945 = vmatpush1.bf16.msra.mxu0 0
      %946 = vmatprep.subr.bf16.mxu0 0
      %947 = vmatpush1.bf16.msra.mxu0 0
      %948 = vmatprep.subr.bf16.mxu0 0
      %949 = vmatpush1.bf16.msra.mxu0 0
      %950 = vmatprep.subr.bf16.mxu0 0
      %951 = vmatpush1.bf16.msra.mxu0 0
      %952 = vmatprep.subr.bf16.mxu0 0
      %953 = vmatpush1.bf16.msra.mxu0 0
      %954 = vmatprep.subr.bf16.mxu0 0
      %955 = vmatpush1.bf16.msra.mxu0 0
      %956 = vmatprep.subr.bf16.mxu0 0
      %957 = vmatpush1.bf16.msra.mxu0 0
      %958 = vmatprep.subr.bf16.mxu0 0
      %959 = vmatpush1.bf16.msra.mxu0 0
      %960 = vmatprep.mubr.bf16.mxu0 0
      %961 = vmatmul.mubr.bf16.gmra.mrb[0].mxu0 %v926
      %v962 = vpop.f32.mrb[0].mxu0
      %v963 = vadd.f32 0.0, %v962
      %v964 = vpop.f32.mrb[0].mxu0
      %v965 = vpop.f32.mrb[0].mxu0
      %v966 = vadd.f32 0.0, %v965
      %v967 = vpop.f32.mrb[0].mxu0
      %968 = vdwg.mxu0
      %v971 = vunpack.c.l.b16 %v914
      %v972 = vunpack.c.l.b16 %v915
      %v973 = vpack.c.b16 %v972, %v971
      %v975 = vsel %vm313, %v973, 0
      %977 = vmatprep.subr.bf16.mxu0 0
      %978 = vmatpush1.bf16.msra.mxu0 %v918
      %979 = vmatprep.subr.bf16.mxu0 0
      %980 = vmatpush1.bf16.msra.mxu0 0
      %981 = vmatprep.subr.bf16.mxu0 0
      %982 = vmatpush1.bf16.msra.mxu0 0
      %983 = vmatprep.subr.bf16.mxu0 0
      %984 = vmatpush1.bf16.msra.mxu0 0
      %985 = vmatprep.subr.bf16.mxu0 0
      %986 = vmatpush1.bf16.msra.mxu0 0
      %987 = vmatprep.subr.bf16.mxu0 0
      %988 = vmatpush1.bf16.msra.mxu0 0
      %989 = vmatprep.subr.bf16.mxu0 0
      %990 = vmatpush1.bf16.msra.mxu0 0
      %991 = vmatprep.subr.bf16.mxu0 0
      %992 = vmatpush1.bf16.msra.mxu0 0
      %993 = vmatprep.subr.bf16.mxu0 0
      %994 = vmatpush1.bf16.msra.mxu0 0
      %995 = vmatprep.subr.bf16.mxu0 0
      %996 = vmatpush1.bf16.msra.mxu0 0
      %997 = vmatprep.subr.bf16.mxu0 0
      %998 = vmatpush1.bf16.msra.mxu0 0
      %999 = vmatprep.subr.bf16.mxu0 0
      %1000 = vmatpush1.bf16.msra.mxu0 0
      %1001 = vmatprep.subr.bf16.mxu0 0
      %1002 = vmatpush1.bf16.msra.mxu0 0
      %1003 = vmatprep.subr.bf16.mxu0 0
      %1004 = vmatpush1.bf16.msra.mxu0 0
      %1005 = vmatprep.subr.bf16.mxu0 0
      %1006 = vmatpush1.bf16.msra.mxu0 0
      %1007 = vmatprep.subr.bf16.mxu0 0
      %1008 = vmatpush1.bf16.msra.mxu0 0
      %1009 = vmatprep.mubr.bf16.mxu0 0
      %1010 = vmatmul.mubr.bf16.gmra.mrb[0].mxu0 %v975
      %v1011 = vpop.f32.mrb[0].mxu0
      %v1012 = vadd.f32 %v963, %v1011
      %v1013 = vpop.f32.mrb[0].mxu0
      %v1014 = vpop.f32.mrb[0].mxu0
      %v1015 = vadd.f32 %v966, %v1014
      %v1016 = vpop.f32.mrb[0].mxu0
      %1017 = vdwg.mxu0
      %v1018 = vpack.c.bf16 %v910, %v909
      %v1021 = vunpack.c.l.b16 %v916
      %v1022 = vunpack.c.l.b16 %v917
      %v1023 = vpack.c.b16 %v1022, %v1021
      %v1025 = vsel %vm313, %v1023, 0
      %1027 = vmatprep.subr.bf16.mxu0 0
      %1028 = vmatpush1.bf16.msra.mxu0 %v1018
      %1029 = vmatprep.subr.bf16.mxu0 0
      %1030 = vmatpush1.bf16.msra.mxu0 0
      %1031 = vmatprep.subr.bf16.mxu0 0
      %1032 = vmatpush1.bf16.msra.mxu0 0
      %1033 = vmatprep.subr.bf16.mxu0 0
      %1034 = vmatpush1.bf16.msra.mxu0 0
      %1035 = vmatprep.subr.bf16.mxu0 0
      %1036 = vmatpush1.bf16.msra.mxu0 0
      %1037 = vmatprep.subr.bf16.mxu0 0
      %1038 = vmatpush1.bf16.msra.mxu0 0
      %1039 = vmatprep.subr.bf16.mxu0 0
      %1040 = vmatpush1.bf16.msra.mxu0 0
      %1041 = vmatprep.subr.bf16.mxu0 0
      %1042 = vmatpush1.bf16.msra.mxu0 0
      %1043 = vmatprep.subr.bf16.mxu0 0
      %1044 = vmatpush1.bf16.msra.mxu0 0
      %1045 = vmatprep.subr.bf16.mxu0 0
      %1046 = vmatpush1.bf16.msra.mxu0 0
      %1047 = vmatprep.subr.bf16.mxu0 0
      %1048 = vmatpush1.bf16.msra.mxu0 0
      %1049 = vmatprep.subr.bf16.mxu0 0
      %1050 = vmatpush1.bf16.msra.mxu0 0
      %1051 = vmatprep.subr.bf16.mxu0 0
      %1052 = vmatpush1.bf16.msra.mxu0 0
      %1053 = vmatprep.subr.bf16.mxu0 0
      %1054 = vmatpush1.bf16.msra.mxu0 0
      %1055 = vmatprep.subr.bf16.mxu0 0
      %1056 = vmatpush1.bf16.msra.mxu0 0
      %1057 = vmatprep.subr.bf16.mxu0 0
      %1058 = vmatpush1.bf16.msra.mxu0 0
      %1059 = vmatprep.mubr.bf16.mxu0 0
      %1060 = vmatmul.mubr.bf16.gmra.mrb[0].mxu0 %v1025
      %v1061 = vpop.f32.mrb[0].mxu0
      %v1062 = vadd.f32 0.0, %v1061
      %v1063 = vpop.f32.mrb[0].mxu0
      %v1064 = vpop.f32.mrb[0].mxu0
      %v1065 = vadd.f32 0.0, %v1064
      %v1066 = vpop.f32.mrb[0].mxu0
      %1067 = vdwg.mxu0
      %v1068 = vadd.f32 %v1012, %v1062
      %v1069 = vadd.f32 %v1015, %v1065
      %s1070 = scalar_lea.vmem %s2, 48
      %v1071 = vld [vmem:[%s1070] sm:$0xff]
      %v1072 = vld [vmem:[%s1070 + $0x8] sm:$0xff]
      %1074 = vset.pattern.permute.xlu0 0
      %1075 = vperm.xlu0 %1074, %v1071
      %v1076 = vpop.permute.xlu0 %1075
      %1079 = vset.pattern.permute.xlu0 0
      %1080 = vperm.xlu0 %1079, %v1072
      %v1081 = vpop.permute.xlu0 %1080
      %v1083 = vadd.f32 %v1068, %v1076
      %v1084 = vadd.f32 %v1069, %v1081
      %v1085 = vmax.f32 %v1083, 0.0
      %v1086 = vmax.f32 %v1084, 0.0
      %1087 = vst [vmem:[#allocation2 + $0x30] sm:$0xff] %v1085
      %1088 = vst [vmem:[#allocation2 + $0x38] sm:$0xff] %v1086
      %v1089 = vsel %vm284, %v1085, 0.0
      %v1090 = vsel %vm284, %v1086, 0.0
      %1091 = vadd.xlane.f32.xlu0 %v1089
      %v1092 = vpop.xlane.xlu0 %1091
      %1093 = vadd.xlane.f32.xlu0 %v1090
      %v1094 = vpop.xlane.xlu0 %1093
      %v1095 = vld [vmem:[%s273 + $0x20] sm:$0xf]
      %v1096 = vld [vmem:[%s273 + $0x24] sm:$0xf]
      %v1097 = vunpack.c.l.bf16 %v1095
      %v1098 = vunpack.c.l.bf16 %v1096
      %v1099 = vadd.f32 %v1097, %v1085
      %v1100 = vadd.f32 %v1098, %v1086
      %1101 = vrot.lane.b32.xlu0 %v1099, 1
      %v1102 = vpop.permute.xlu0 %1101
      %1103 = vrot.lane.b32.xlu0 %v1100, 1
      %v1104 = vpop.permute.xlu0 %1103
      %v1105 = vsel %vm282, %v1102, 0.0
      %v1106 = vsel %vm282, %v1104, 0.0
      %1107 = vrot.lane.b32.xlu0 %v1099, 127
      %v1108 = vpop.permute.xlu0 %1107
      %1109 = vrot.lane.b32.xlu0 %v1100, 127
      %v1110 = vpop.permute.xlu0 %1109
      %v1111 = vsel %vm283, %v1108, 0.0
      %v1112 = vsel %vm283, %v1110, 0.0
      %s1113 = scalar_lea.vmem %s1, 96
      %v1114 = vld [vmem:[%s1113] sm:$0xf]
      %v1115 = vld [vmem:[%s1113 + $0x4] sm:$0xf]
      %v1116 = vld [vmem:[%s1113 + $0x8] sm:$0xf]
      %v1117 = vld [vmem:[%s1113 + $0xc] sm:$0xf]
      %v1118 = vld [vmem:[%s1113 + $0x10] sm:$0xf]
      %v1119 = vld [vmem:[%s1113 + $0x14] sm:$0xf]
      %v1120 = vpack.c.bf16 %v1100, %v1099
      %v1121 = vpack.c.bf16 %v1106, %v1105
      %v1124 = vunpack.c.l.b16 %v1114
      %v1125 = vunpack.c.l.b16 %v1115
      %v1126 = vpack.c.b16 %v1125, %v1124
      %v1128 = vsel %vm313, %v1126, 0
      %1130 = vmatprep.subr.bf16.mxu0 0
      %1131 = vmatpush1.bf16.msra.mxu0 %v1121
      %1132 = vmatprep.subr.bf16.mxu0 0
      %1133 = vmatpush1.bf16.msra.mxu0 0
      %1134 = vmatprep.subr.bf16.mxu0 0
      %1135 = vmatpush1.bf16.msra.mxu0 0
      %1136 = vmatprep.subr.bf16.mxu0 0
      %1137 = vmatpush1.bf16.msra.mxu0 0
      %1138 = vmatprep.subr.bf16.mxu0 0
      %1139 = vmatpush1.bf16.msra.mxu0 0
      %1140 = vmatprep.subr.bf16.mxu0 0
      %1141 = vmatpush1.bf16.msra.mxu0 0
      %1142 = vmatprep.subr.bf16.mxu0 0
      %1143 = vmatpush1.bf16.msra.mxu0 0
      %1144 = vmatprep.subr.bf16.mxu0 0
      %1145 = vmatpush1.bf16.msra.mxu0 0
      %1146 = vmatprep.subr.bf16.mxu0 0
      %1147 = vmatpush1.bf16.msra.mxu0 0
      %1148 = vmatprep.subr.bf16.mxu0 0
      %1149 = vmatpush1.bf16.msra.mxu0 0
      %1150 = vmatprep.subr.bf16.mxu0 0
      %1151 = vmatpush1.bf16.msra.mxu0 0
      %1152 = vmatprep.subr.bf16.mxu0 0
      %1153 = vmatpush1.bf16.msra.mxu0 0
      %1154 = vmatprep.subr.bf16.mxu0 0
      %1155 = vmatpush1.bf16.msra.mxu0 0
      %1156 = vmatprep.subr.bf16.mxu0 0
      %1157 = vmatpush1.bf16.msra.mxu0 0
      %1158 = vmatprep.subr.bf16.mxu0 0
      %1159 = vmatpush1.bf16.msra.mxu0 0
      %1160 = vmatprep.subr.bf16.mxu0 0
      %1161 = vmatpush1.bf16.msra.mxu0 0
      %1162 = vmatprep.mubr.bf16.mxu0 0
      %1163 = vmatmul.mubr.bf16.gmra.mrb[0].mxu0 %v1128
      %v1164 = vpop.f32.mrb[0].mxu0
      %v1165 = vadd.f32 0.0, %v1164
      %v1166 = vpop.f32.mrb[0].mxu0
      %v1167 = vpop.f32.mrb[0].mxu0
      %v1168 = vadd.f32 0.0, %v1167
      %v1169 = vpop.f32.mrb[0].mxu0
      %1170 = vdwg.mxu0
      %v1173 = vunpack.c.l.b16 %v1116
      %v1174 = vunpack.c.l.b16 %v1117
      %v1175 = vpack.c.b16 %v1174, %v1173
      %v1177 = vsel %vm313, %v1175, 0
      %1179 = vmatprep.subr.bf16.mxu0 0
      %1180 = vmatpush1.bf16.msra.mxu0 %v1120
      %1181 = vmatprep.subr.bf16.mxu0 0
      %1182 = vmatpush1.bf16.msra.mxu0 0
      %1183 = vmatprep.subr.bf16.mxu0 0
      %1184 = vmatpush1.bf16.msra.mxu0 0
      %1185 = vmatprep.subr.bf16.mxu0 0
      %1186 = vmatpush1.bf16.msra.mxu0 0
      %1187 = vmatprep.subr.bf16.mxu0 0
      %1188 = vmatpush1.bf16.msra.mxu0 0
      %1189 = vmatprep.subr.bf16.mxu0 0
      %1190 = vmatpush1.bf16.msra.mxu0 0
      %1191 = vmatprep.subr.bf16.mxu0 0
      %1192 = vmatpush1.bf16.msra.mxu0 0
      %1193 = vmatprep.subr.bf16.mxu0 0
      %1194 = vmatpush1.bf16.msra.mxu0 0
      %1195 = vmatprep.subr.bf16.mxu0 0
      %1196 = vmatpush1.bf16.msra.mxu0 0
      %1197 = vmatprep.subr.bf16.mxu0 0
      %1198 = vmatpush1.bf16.msra.mxu0 0
      %1199 = vmatprep.subr.bf16.mxu0 0
      %1200 = vmatpush1.bf16.msra.mxu0 0
      %1201 = vmatprep.subr.bf16.mxu0 0
      %1202 = vmatpush1.bf16.msra.mxu0 0
      %1203 = vmatprep.subr.bf16.mxu0 0
      %1204 = vmatpush1.bf16.msra.mxu0 0
      %1205 = vmatprep.subr.bf16.mxu0 0
      %1206 = vmatpush1.bf16.msra.mxu0 0
      %1207 = vmatprep.subr.bf16.mxu0 0
      %1208 = vmatpush1.bf16.msra.mxu0 0
      %1209 = vmatprep.subr.bf16.mxu0 0
      %1210 = vmatpush1.bf16.msra.mxu0 0
      %1211 = vmatprep.mubr.bf16.mxu0 0
      %1212 = vmatmul.mubr.bf16.gmra.mrb[0].mxu0 %v1177
      %v1213 = vpop.f32.mrb[0].mxu0
      %v1214 = vadd.f32 %v1165, %v1213
      %v1215 = vpop.f32.mrb[0].mxu0
      %v1216 = vpop.f32.mrb[0].mxu0
      %v1217 = vadd.f32 %v1168, %v1216
      %v1218 = vpop.f32.mrb[0].mxu0
      %1219 = vdwg.mxu0
      %v1220 = vpack.c.bf16 %v1112, %v1111
      %v1223 = vunpack.c.l.b16 %v1118
      %v1224 = vunpack.c.l.b16 %v1119
      %v1225 = vpack.c.b16 %v1224, %v1223
      %v1227 = vsel %vm313, %v1225, 0
      %1229 = vmatprep.subr.bf16.mxu0 0
      %1230 = vmatpush1.bf16.msra.mxu0 %v1220
      %1231 = vmatprep.subr.bf16.mxu0 0
      %1232 = vmatpush1.bf16.msra.mxu0 0
      %1233 = vmatprep.subr.bf16.mxu0 0
      %1234 = vmatpush1.bf16.msra.mxu0 0
      %1235 = vmatprep.subr.bf16.mxu0 0
      %1236 = vmatpush1.bf16.msra.mxu0 0
      %1237 = vmatprep.subr.bf16.mxu0 0
      %1238 = vmatpush1.bf16.msra.mxu0 0
      %1239 = vmatprep.subr.bf16.mxu0 0
      %1240 = vmatpush1.bf16.msra.mxu0 0
      %1241 = vmatprep.subr.bf16.mxu0 0
      %1242 = vmatpush1.bf16.msra.mxu0 0
      %1243 = vmatprep.subr.bf16.mxu0 0
      %1244 = vmatpush1.bf16.msra.mxu0 0
      %1245 = vmatprep.subr.bf16.mxu0 0
      %1246 = vmatpush1.bf16.msra.mxu0 0
      %1247 = vmatprep.subr.bf16.mxu0 0
      %1248 = vmatpush1.bf16.msra.mxu0 0
      %1249 = vmatprep.subr.bf16.mxu0 0
      %1250 = vmatpush1.bf16.msra.mxu0 0
      %1251 = vmatprep.subr.bf16.mxu0 0
      %1252 = vmatpush1.bf16.msra.mxu0 0
      %1253 = vmatprep.subr.bf16.mxu0 0
      %1254 = vmatpush1.bf16.msra.mxu0 0
      %1255 = vmatprep.subr.bf16.mxu0 0
      %1256 = vmatpush1.bf16.msra.mxu0 0
      %1257 = vmatprep.subr.bf16.mxu0 0
      %1258 = vmatpush1.bf16.msra.mxu0 0
      %1259 = vmatprep.subr.bf16.mxu0 0
      %1260 = vmatpush1.bf16.msra.mxu0 0
      %1261 = vmatprep.mubr.bf16.mxu0 0
      %1262 = vmatmul.mubr.bf16.gmra.mrb[0].mxu0 %v1227
      %v1263 = vpop.f32.mrb[0].mxu0
      %v1264 = vadd.f32 0.0, %v1263
      %v1265 = vpop.f32.mrb[0].mxu0
      %v1266 = vpop.f32.mrb[0].mxu0
      %v1267 = vadd.f32 0.0, %v1266
      %v1268 = vpop.f32.mrb[0].mxu0
      %1269 = vdwg.mxu0
      %v1270 = vadd.f32 %v1214, %v1264
      %v1271 = vadd.f32 %v1217, %v1267
      %s1272 = scalar_lea.vmem %s2, 64
      %v1273 = vld [vmem:[%s1272] sm:$0xff]
      %v1274 = vld [vmem:[%s1272 + $0x8] sm:$0xff]
      %1276 = vset.pattern.permute.xlu0 0
      %1277 = vperm.xlu0 %1276, %v1273
      %v1278 = vpop.permute.xlu0 %1277
      %1281 = vset.pattern.permute.xlu0 0
      %1282 = vperm.xlu0 %1281, %v1274
      %v1283 = vpop.permute.xlu0 %1282
      %v1285 = vadd.f32 %v1270, %v1278
      %v1286 = vadd.f32 %v1271, %v1283
      %v1287 = vmax.f32 %v1285, 0.0
      %v1288 = vmax.f32 %v1286, 0.0
      %1289 = vst [vmem:[#allocation2 + $0x40] sm:$0xff] %v1287
      %1290 = vst [vmem:[#allocation2 + $0x48] sm:$0xff] %v1288
      %v1291 = vsel %vm284, %v1287, 0.0
      %v1292 = vsel %vm284, %v1288, 0.0
      %1293 = vadd.xlane.f32.xlu0 %v1291
      %v1294 = vpop.xlane.xlu0 %1293
      %1295 = vadd.xlane.f32.xlu0 %v1292
      %v1296 = vpop.xlane.xlu0 %1295
      %v1297 = vld [vmem:[%s273 + $0x28] sm:$0xf]
      %v1298 = vld [vmem:[%s273 + $0x2c] sm:$0xf]
      %v1299 = vunpack.c.l.bf16 %v1297
      %v1300 = vunpack.c.l.bf16 %v1298
      %v1301 = vadd.f32 %v1299, %v1287
      %v1302 = vadd.f32 %v1300, %v1288
      %1303 = vrot.lane.b32.xlu0 %v1301, 1
      %v1304 = vpop.permute.xlu0 %1303
      %1305 = vrot.lane.b32.xlu0 %v1302, 1
      %v1306 = vpop.permute.xlu0 %1305
      %v1307 = vsel %vm282, %v1304, 0.0
      %v1308 = vsel %vm282, %v1306, 0.0
      %1309 = vrot.lane.b32.xlu0 %v1301, 127
      %v1310 = vpop.permute.xlu0 %1309
      %1311 = vrot.lane.b32.xlu0 %v1302, 127
      %v1312 = vpop.permute.xlu0 %1311
      %v1313 = vsel %vm283, %v1310, 0.0
      %v1314 = vsel %vm283, %v1312, 0.0
      %s1315 = scalar_lea.vmem %s1, 120
      %v1316 = vld [vmem:[%s1315] sm:$0xf]
      %v1317 = vld [vmem:[%s1315 + $0x4] sm:$0xf]
      %v1318 = vld [vmem:[%s1315 + $0x8] sm:$0xf]
      %v1319 = vld [vmem:[%s1315 + $0xc] sm:$0xf]
      %v1320 = vld [vmem:[%s1315 + $0x10] sm:$0xf]
      %v1321 = vld [vmem:[%s1315 + $0x14] sm:$0xf]
      %v1322 = vpack.c.bf16 %v1302, %v1301
      %v1323 = vpack.c.bf16 %v1308, %v1307
      %v1326 = vunpack.c.l.b16 %v1316
      %v1327 = vunpack.c.l.b16 %v1317
      %v1328 = vpack.c.b16 %v1327, %v1326
      %v1330 = vsel %vm313, %v1328, 0
      %1332 = vmatprep.subr.bf16.mxu0 0
      %1333 = vmatpush1.bf16.msra.mxu0 %v1323
      %1334 = vmatprep.subr.bf16.mxu0 0
      %1335 = vmatpush1.bf16.msra.mxu0 0
      %1336 = vmatprep.subr.bf16.mxu0 0
      %1337 = vmatpush1.bf16.msra.mxu0 0
      %1338 = vmatprep.subr.bf16.mxu0 0
      %1339 = vmatpush1.bf16.msra.mxu0 0
      %1340 = vmatprep.subr.bf16.mxu0 0
      %1341 = vmatpush1.bf16.msra.mxu0 0
      %1342 = vmatprep.subr.bf16.mxu0 0
      %1343 = vmatpush1.bf16.msra.mxu0 0
      %1344 = vmatprep.subr.bf16.mxu0 0
      %1345 = vmatpush1.bf16.msra.mxu0 0
      %1346 = vmatprep.subr.bf16.mxu0 0
      %1347 = vmatpush1.bf16.msra.mxu0 0
      %1348 = vmatprep.subr.bf16.mxu0 0
      %1349 = vmatpush1.bf16.msra.mxu0 0
      %1350 = vmatprep.subr.bf16.mxu0 0
      %1351 = vmatpush1.bf16.msra.mxu0 0
      %1352 = vmatprep.subr.bf16.mxu0 0
      %1353 = vmatpush1.bf16.msra.mxu0 0
      %1354 = vmatprep.subr.bf16.mxu0 0
      %1355 = vmatpush1.bf16.msra.mxu0 0
      %1356 = vmatprep.subr.bf16.mxu0 0
      %1357 = vmatpush1.bf16.msra.mxu0 0
      %1358 = vmatprep.subr.bf16.mxu0 0
      %1359 = vmatpush1.bf16.msra.mxu0 0
      %1360 = vmatprep.subr.bf16.mxu0 0
      %1361 = vmatpush1.bf16.msra.mxu0 0
      %1362 = vmatprep.subr.bf16.mxu0 0
      %1363 = vmatpush1.bf16.msra.mxu0 0
      %1364 = vmatprep.mubr.bf16.mxu0 0
      %1365 = vmatmul.mubr.bf16.gmra.mrb[0].mxu0 %v1330
      %v1366 = vpop.f32.mrb[0].mxu0
      %v1367 = vadd.f32 0.0, %v1366
      %v1368 = vpop.f32.mrb[0].mxu0
      %v1369 = vpop.f32.mrb[0].mxu0
      %v1370 = vadd.f32 0.0, %v1369
      %v1371 = vpop.f32.mrb[0].mxu0
      %1372 = vdwg.mxu0
      %v1375 = vunpack.c.l.b16 %v1318
      %v1376 = vunpack.c.l.b16 %v1319
      %v1377 = vpack.c.b16 %v1376, %v1375
      %v1379 = vsel %vm313, %v1377, 0
      %1381 = vmatprep.subr.bf16.mxu0 0
      %1382 = vmatpush1.bf16.msra.mxu0 %v1322
      %1383 = vmatprep.subr.bf16.mxu0 0
      %1384 = vmatpush1.bf16.msra.mxu0 0
      %1385 = vmatprep.subr.bf16.mxu0 0
      %1386 = vmatpush1.bf16.msra.mxu0 0
      %1387 = vmatprep.subr.bf16.mxu0 0
      %1388 = vmatpush1.bf16.msra.mxu0 0
      %1389 = vmatprep.subr.bf16.mxu0 0
      %1390 = vmatpush1.bf16.msra.mxu0 0
      %1391 = vmatprep.subr.bf16.mxu0 0
      %1392 = vmatpush1.bf16.msra.mxu0 0
      %1393 = vmatprep.subr.bf16.mxu0 0
      %1394 = vmatpush1.bf16.msra.mxu0 0
      %1395 = vmatprep.subr.bf16.mxu0 0
      %1396 = vmatpush1.bf16.msra.mxu0 0
      %1397 = vmatprep.subr.bf16.mxu0 0
      %1398 = vmatpush1.bf16.msra.mxu0 0
      %1399 = vmatprep.subr.bf16.mxu0 0
      %1400 = vmatpush1.bf16.msra.mxu0 0
      %1401 = vmatprep.subr.bf16.mxu0 0
      %1402 = vmatpush1.bf16.msra.mxu0 0
      %1403 = vmatprep.subr.bf16.mxu0 0
      %1404 = vmatpush1.bf16.msra.mxu0 0
      %1405 = vmatprep.subr.bf16.mxu0 0
      %1406 = vmatpush1.bf16.msra.mxu0 0
      %1407 = vmatprep.subr.bf16.mxu0 0
      %1408 = vmatpush1.bf16.msra.mxu0 0
      %1409 = vmatprep.subr.bf16.mxu0 0
      %1410 = vmatpush1.bf16.msra.mxu0 0
      %1411 = vmatprep.subr.bf16.mxu0 0
      %1412 = vmatpush1.bf16.msra.mxu0 0
      %1413 = vmatprep.mubr.bf16.mxu0 0
      %1414 = vmatmul.mubr.bf16.gmra.mrb[0].mxu0 %v1379
      %v1415 = vpop.f32.mrb[0].mxu0
      %v1416 = vadd.f32 %v1367, %v1415
      %v1417 = vpop.f32.mrb[0].mxu0
      %v1418 = vpop.f32.mrb[0].mxu0
      %v1419 = vadd.f32 %v1370, %v1418
      %v1420 = vpop.f32.mrb[0].mxu0
      %1421 = vdwg.mxu0
      %v1422 = vpack.c.bf16 %v1314, %v1313
      %v1425 = vunpack.c.l.b16 %v1320
      %v1426 = vunpack.c.l.b16 %v1321
      %v1427 = vpack.c.b16 %v1426, %v1425
      %v1429 = vsel %vm313, %v1427, 0
      %1431 = vmatprep.subr.bf16.mxu0 0
      %1432 = vmatpush1.bf16.msra.mxu0 %v1422
      %1433 = vmatprep.subr.bf16.mxu0 0
      %1434 = vmatpush1.bf16.msra.mxu0 0
      %1435 = vmatprep.subr.bf16.mxu0 0
      %1436 = vmatpush1.bf16.msra.mxu0 0
      %1437 = vmatprep.subr.bf16.mxu0 0
      %1438 = vmatpush1.bf16.msra.mxu0 0
      %1439 = vmatprep.subr.bf16.mxu0 0
      %1440 = vmatpush1.bf16.msra.mxu0 0
      %1441 = vmatprep.subr.bf16.mxu0 0
      %1442 = vmatpush1.bf16.msra.mxu0 0
      %1443 = vmatprep.subr.bf16.mxu0 0
      %1444 = vmatpush1.bf16.msra.mxu0 0
      %1445 = vmatprep.subr.bf16.mxu0 0
      %1446 = vmatpush1.bf16.msra.mxu0 0
      %1447 = vmatprep.subr.bf16.mxu0 0
      %1448 = vmatpush1.bf16.msra.mxu0 0
      %1449 = vmatprep.subr.bf16.mxu0 0
      %1450 = vmatpush1.bf16.msra.mxu0 0
      %1451 = vmatprep.subr.bf16.mxu0 0
      %1452 = vmatpush1.bf16.msra.mxu0 0
      %1453 = vmatprep.subr.bf16.mxu0 0
      %1454 = vmatpush1.bf16.msra.mxu0 0
      %1455 = vmatprep.subr.bf16.mxu0 0
      %1456 = vmatpush1.bf16.msra.mxu0 0
      %1457 = vmatprep.subr.bf16.mxu0 0
      %1458 = vmatpush1.bf16.msra.mxu0 0
      %1459 = vmatprep.subr.bf16.mxu0 0
      %1460 = vmatpush1.bf16.msra.mxu0 0
      %1461 = vmatprep.subr.bf16.mxu0 0
      %1462 = vmatpush1.bf16.msra.mxu0 0
      %1463 = vmatprep.mubr.bf16.mxu0 0
      %1464 = vmatmul.mubr.bf16.gmra.mrb[0].mxu0 %v1429
      %v1465 = vpop.f32.mrb[0].mxu0
      %v1466 = vadd.f32 0.0, %v1465
      %v1467 = vpop.f32.mrb[0].mxu0
      %v1468 = vpop.f32.mrb[0].mxu0
      %v1469 = vadd.f32 0.0, %v1468
      %v1470 = vpop.f32.mrb[0].mxu0
      %1471 = vdwg.mxu0
      %v1472 = vadd.f32 %v1416, %v1466
      %v1473 = vadd.f32 %v1419, %v1469
      %s1474 = scalar_lea.vmem %s2, 80
      %v1475 = vld [vmem:[%s1474] sm:$0xff]
      %v1476 = vld [vmem:[%s1474 + $0x8] sm:$0xff]
      %1478 = vset.pattern.permute.xlu0 0
      %1479 = vperm.xlu0 %1478, %v1475
      %v1480 = vpop.permute.xlu0 %1479
      %1483 = vset.pattern.permute.xlu0 0
      %1484 = vperm.xlu0 %1483, %v1476
      %v1485 = vpop.permute.xlu0 %1484
      %v1487 = vadd.f32 %v1472, %v1480
      %v1488 = vadd.f32 %v1473, %v1485
      %v1489 = vmax.f32 %v1487, 0.0
      %v1490 = vmax.f32 %v1488, 0.0
      %1491 = vst [vmem:[#allocation2 + $0x50] sm:$0xff] %v1489
      %1492 = vst [vmem:[#allocation2 + $0x58] sm:$0xff] %v1490
      %v1493 = vsel %vm284, %v1489, 0.0
      %v1494 = vsel %vm284, %v1490, 0.0
      %1495 = vadd.xlane.f32.xlu0 %v1493
      %v1496 = vpop.xlane.xlu0 %1495
      %1497 = vadd.xlane.f32.xlu0 %v1494
      %v1498 = vpop.xlane.xlu0 %1497
      %v1499 = vld [vmem:[%s273 + $0x30] sm:$0xf]
      %v1500 = vld [vmem:[%s273 + $0x34] sm:$0xf]
      %v1501 = vunpack.c.l.bf16 %v1499
      %v1502 = vunpack.c.l.bf16 %v1500
      %v1503 = vadd.f32 %v1501, %v1489
      %v1504 = vadd.f32 %v1502, %v1490
      %1505 = vrot.lane.b32.xlu0 %v1503, 1
      %v1506 = vpop.permute.xlu0 %1505
      %1507 = vrot.lane.b32.xlu0 %v1504, 1
      %v1508 = vpop.permute.xlu0 %1507
      %v1509 = vsel %vm282, %v1506, 0.0
      %v1510 = vsel %vm282, %v1508, 0.0
      %1511 = vrot.lane.b32.xlu0 %v1503, 127
      %v1512 = vpop.permute.xlu0 %1511
      %1513 = vrot.lane.b32.xlu0 %v1504, 127
      %v1514 = vpop.permute.xlu0 %1513
      %v1515 = vsel %vm283, %v1512, 0.0
      %v1516 = vsel %vm283, %v1514, 0.0
      %s1517 = scalar_lea.vmem %s1, 144
      %v1518 = vld [vmem:[%s1517] sm:$0xf]
      %v1519 = vld [vmem:[%s1517 + $0x4] sm:$0xf]
      %v1520 = vld [vmem:[%s1517 + $0x8] sm:$0xf]
      %v1521 = vld [vmem:[%s1517 + $0xc] sm:$0xf]
      %v1522 = vld [vmem:[%s1517 + $0x10] sm:$0xf]
      %v1523 = vld [vmem:[%s1517 + $0x14] sm:$0xf]
      %v1524 = vpack.c.bf16 %v1504, %v1503
      %v1525 = vpack.c.bf16 %v1510, %v1509
      %v1528 = vunpack.c.l.b16 %v1518
      %v1529 = vunpack.c.l.b16 %v1519
      %v1530 = vpack.c.b16 %v1529, %v1528
      %v1532 = vsel %vm313, %v1530, 0
      %1534 = vmatprep.subr.bf16.mxu0 0
      %1535 = vmatpush1.bf16.msra.mxu0 %v1525
      %1536 = vmatprep.subr.bf16.mxu0 0
      %1537 = vmatpush1.bf16.msra.mxu0 0
      %1538 = vmatprep.subr.bf16.mxu0 0
      %1539 = vmatpush1.bf16.msra.mxu0 0
      %1540 = vmatprep.subr.bf16.mxu0 0
      %1541 = vmatpush1.bf16.msra.mxu0 0
      %1542 = vmatprep.subr.bf16.mxu0 0
      %1543 = vmatpush1.bf16.msra.mxu0 0
      %1544 = vmatprep.subr.bf16.mxu0 0
      %1545 = vmatpush1.bf16.msra.mxu0 0
      %1546 = vmatprep.subr.bf16.mxu0 0
      %1547 = vmatpush1.bf16.msra.mxu0 0
      %1548 = vmatprep.subr.bf16.mxu0 0
      %1549 = vmatpush1.bf16.msra.mxu0 0
      %1550 = vmatprep.subr.bf16.mxu0 0
      %1551 = vmatpush1.bf16.msra.mxu0 0
      %1552 = vmatprep.subr.bf16.mxu0 0
      %1553 = vmatpush1.bf16.msra.mxu0 0
      %1554 = vmatprep.subr.bf16.mxu0 0
      %1555 = vmatpush1.bf16.msra.mxu0 0
      %1556 = vmatprep.subr.bf16.mxu0 0
      %1557 = vmatpush1.bf16.msra.mxu0 0
      %1558 = vmatprep.subr.bf16.mxu0 0
      %1559 = vmatpush1.bf16.msra.mxu0 0
      %1560 = vmatprep.subr.bf16.mxu0 0
      %1561 = vmatpush1.bf16.msra.mxu0 0
      %1562 = vmatprep.subr.bf16.mxu0 0
      %1563 = vmatpush1.bf16.msra.mxu0 0
      %1564 = vmatprep.subr.bf16.mxu0 0
      %1565 = vmatpush1.bf16.msra.mxu0 0
      %1566 = vmatprep.mubr.bf16.mxu0 0
      %1567 = vmatmul.mubr.bf16.gmra.mrb[0].mxu0 %v1532
      %v1568 = vpop.f32.mrb[0].mxu0
      %v1569 = vadd.f32 0.0, %v1568
      %v1570 = vpop.f32.mrb[0].mxu0
      %v1571 = vpop.f32.mrb[0].mxu0
      %v1572 = vadd.f32 0.0, %v1571
      %v1573 = vpop.f32.mrb[0].mxu0
      %1574 = vdwg.mxu0
      %v1577 = vunpack.c.l.b16 %v1520
      %v1578 = vunpack.c.l.b16 %v1521
      %v1579 = vpack.c.b16 %v1578, %v1577
      %v1581 = vsel %vm313, %v1579, 0
      %1583 = vmatprep.subr.bf16.mxu0 0
      %1584 = vmatpush1.bf16.msra.mxu0 %v1524
      %1585 = vmatprep.subr.bf16.mxu0 0
      %1586 = vmatpush1.bf16.msra.mxu0 0
      %1587 = vmatprep.subr.bf16.mxu0 0
      %1588 = vmatpush1.bf16.msra.mxu0 0
      %1589 = vmatprep.subr.bf16.mxu0 0
      %1590 = vmatpush1.bf16.msra.mxu0 0
      %1591 = vmatprep.subr.bf16.mxu0 0
      %1592 = vmatpush1.bf16.msra.mxu0 0
      %1593 = vmatprep.subr.bf16.mxu0 0
      %1594 = vmatpush1.bf16.msra.mxu0 0
      %1595 = vmatprep.subr.bf16.mxu0 0
      %1596 = vmatpush1.bf16.msra.mxu0 0
      %1597 = vmatprep.subr.bf16.mxu0 0
      %1598 = vmatpush1.bf16.msra.mxu0 0
      %1599 = vmatprep.subr.bf16.mxu0 0
      %1600 = vmatpush1.bf16.msra.mxu0 0
      %1601 = vmatprep.subr.bf16.mxu0 0
      %1602 = vmatpush1.bf16.msra.mxu0 0
      %1603 = vmatprep.subr.bf16.mxu0 0
      %1604 = vmatpush1.bf16.msra.mxu0 0
      %1605 = vmatprep.subr.bf16.mxu0 0
      %1606 = vmatpush1.bf16.msra.mxu0 0
      %1607 = vmatprep.subr.bf16.mxu0 0
      %1608 = vmatpush1.bf16.msra.mxu0 0
      %1609 = vmatprep.subr.bf16.mxu0 0
      %1610 = vmatpush1.bf16.msra.mxu0 0
      %1611 = vmatprep.subr.bf16.mxu0 0
      %1612 = vmatpush1.bf16.msra.mxu0 0
      %1613 = vmatprep.subr.bf16.mxu0 0
      %1614 = vmatpush1.bf16.msra.mxu0 0
      %1615 = vmatprep.mubr.bf16.mxu0 0
      %1616 = vmatmul.mubr.bf16.gmra.mrb[0].mxu0 %v1581
      %v1617 = vpop.f32.mrb[0].mxu0
      %v1618 = vadd.f32 %v1569, %v1617
      %v1619 = vpop.f32.mrb[0].mxu0
      %v1620 = vpop.f32.mrb[0].mxu0
      %v1621 = vadd.f32 %v1572, %v1620
      %v1622 = vpop.f32.mrb[0].mxu0
      %1623 = vdwg.mxu0
      %v1624 = vpack.c.bf16 %v1516, %v1515
      %v1627 = vunpack.c.l.b16 %v1522
      %v1628 = vunpack.c.l.b16 %v1523
      %v1629 = vpack.c.b16 %v1628, %v1627
      %v1631 = vsel %vm313, %v1629, 0
      %1633 = vmatprep.subr.bf16.mxu0 0
      %1634 = vmatpush1.bf16.msra.mxu0 %v1624
      %1635 = vmatprep.subr.bf16.mxu0 0
      %1636 = vmatpush1.bf16.msra.mxu0 0
      %1637 = vmatprep.subr.bf16.mxu0 0
      %1638 = vmatpush1.bf16.msra.mxu0 0
      %1639 = vmatprep.subr.bf16.mxu0 0
      %1640 = vmatpush1.bf16.msra.mxu0 0
      %1641 = vmatprep.subr.bf16.mxu0 0
      %1642 = vmatpush1.bf16.msra.mxu0 0
      %1643 = vmatprep.subr.bf16.mxu0 0
      %1644 = vmatpush1.bf16.msra.mxu0 0
      %1645 = vmatprep.subr.bf16.mxu0 0
      %1646 = vmatpush1.bf16.msra.mxu0 0
      %1647 = vmatprep.subr.bf16.mxu0 0
      %1648 = vmatpush1.bf16.msra.mxu0 0
      %1649 = vmatprep.subr.bf16.mxu0 0
      %1650 = vmatpush1.bf16.msra.mxu0 0
      %1651 = vmatprep.subr.bf16.mxu0 0
      %1652 = vmatpush1.bf16.msra.mxu0 0
      %1653 = vmatprep.subr.bf16.mxu0 0
      %1654 = vmatpush1.bf16.msra.mxu0 0
      %1655 = vmatprep.subr.bf16.mxu0 0
      %1656 = vmatpush1.bf16.msra.mxu0 0
      %1657 = vmatprep.subr.bf16.mxu0 0
      %1658 = vmatpush1.bf16.msra.mxu0 0
      %1659 = vmatprep.subr.bf16.mxu0 0
      %1660 = vmatpush1.bf16.msra.mxu0 0
      %1661 = vmatprep.subr.bf16.mxu0 0
      %1662 = vmatpush1.bf16.msra.mxu0 0
      %1663 = vmatprep.subr.bf16.mxu0 0
      %1664 = vmatpush1.bf16.msra.mxu0 0
      %1665 = vmatprep.mubr.bf16.mxu0 0
      %1666 = vmatmul.mubr.bf16.gmra.mrb[0].mxu0 %v1631
      %v1667 = vpop.f32.mrb[0].mxu0
      %v1668 = vadd.f32 0.0, %v1667
      %v1669 = vpop.f32.mrb[0].mxu0
      %v1670 = vpop.f32.mrb[0].mxu0
      %v1671 = vadd.f32 0.0, %v1670
      %v1672 = vpop.f32.mrb[0].mxu0
      %1673 = vdwg.mxu0
      %v1674 = vadd.f32 %v1618, %v1668
      %v1675 = vadd.f32 %v1621, %v1671
      %s1676 = scalar_lea.vmem %s2, 96
      %v1677 = vld [vmem:[%s1676] sm:$0xff]
      %v1678 = vld [vmem:[%s1676 + $0x8] sm:$0xff]
      %1680 = vset.pattern.permute.xlu0 0
      %1681 = vperm.xlu0 %1680, %v1677
      %v1682 = vpop.permute.xlu0 %1681
      %1685 = vset.pattern.permute.xlu0 0
      %1686 = vperm.xlu0 %1685, %v1678
      %v1687 = vpop.permute.xlu0 %1686
      %v1689 = vadd.f32 %v1674, %v1682
      %v1690 = vadd.f32 %v1675, %v1687
      %v1691 = vmax.f32 %v1689, 0.0
      %v1692 = vmax.f32 %v1690, 0.0
      %1693 = vst [vmem:[#allocation2 + $0x60] sm:$0xff] %v1691
      %1694 = vst [vmem:[#allocation2 + $0x68] sm:$0xff] %v1692
      %v1695 = vsel %vm284, %v1691, 0.0
      %v1696 = vsel %vm284, %v1692, 0.0
      %1697 = vadd.xlane.f32.xlu0 %v1695
      %v1698 = vpop.xlane.xlu0 %1697
      %1699 = vadd.xlane.f32.xlu0 %v1696
      %v1700 = vpop.xlane.xlu0 %1699
      %v1701 = vld [vmem:[%s273 + $0x38] sm:$0xf]
      %v1702 = vld [vmem:[%s273 + $0x3c] sm:$0xf]
      %v1703 = vunpack.c.l.bf16 %v1701
      %v1704 = vunpack.c.l.bf16 %v1702
      %v1705 = vadd.f32 %v1703, %v1691
      %v1706 = vadd.f32 %v1704, %v1692
      %1707 = vrot.lane.b32.xlu0 %v1705, 1
      %v1708 = vpop.permute.xlu0 %1707
      %1709 = vrot.lane.b32.xlu0 %v1706, 1
      %v1710 = vpop.permute.xlu0 %1709
      %v1711 = vsel %vm282, %v1708, 0.0
      %v1712 = vsel %vm282, %v1710, 0.0
      %1713 = vrot.lane.b32.xlu0 %v1705, 127
      %v1714 = vpop.permute.xlu0 %1713
      %1715 = vrot.lane.b32.xlu0 %v1706, 127
      %v1716 = vpop.permute.xlu0 %1715
      %v1717 = vsel %vm283, %v1714, 0.0
      %v1718 = vsel %vm283, %v1716, 0.0
      %s1719 = scalar_lea.vmem %s1, 168
      %v1720 = vld [vmem:[%s1719] sm:$0xf]
      %v1721 = vld [vmem:[%s1719 + $0x4] sm:$0xf]
      %v1722 = vld [vmem:[%s1719 + $0x8] sm:$0xf]
      %v1723 = vld [vmem:[%s1719 + $0xc] sm:$0xf]
      %v1724 = vld [vmem:[%s1719 + $0x10] sm:$0xf]
      %v1725 = vld [vmem:[%s1719 + $0x14] sm:$0xf]
      %v1726 = vpack.c.bf16 %v1706, %v1705
      %v1727 = vpack.c.bf16 %v1712, %v1711
      %v1730 = vunpack.c.l.b16 %v1720
      %v1731 = vunpack.c.l.b16 %v1721
      %v1732 = vpack.c.b16 %v1731, %v1730
      %v1734 = vsel %vm313, %v1732, 0
      %1736 = vmatprep.subr.bf16.mxu0 0
      %1737 = vmatpush1.bf16.msra.mxu0 %v1727
      %1738 = vmatprep.subr.bf16.mxu0 0
      %1739 = vmatpush1.bf16.msra.mxu0 0
      %1740 = vmatprep.subr.bf16.mxu0 0
      %1741 = vmatpush1.bf16.msra.mxu0 0
      %1742 = vmatprep.subr.bf16.mxu0 0
      %1743 = vmatpush1.bf16.msra.mxu0 0
      %1744 = vmatprep.subr.bf16.mxu0 0
      %1745 = vmatpush1.bf16.msra.mxu0 0
      %1746 = vmatprep.subr.bf16.mxu0 0
      %1747 = vmatpush1.bf16.msra.mxu0 0
      %1748 = vmatprep.subr.bf16.mxu0 0
      %1749 = vmatpush1.bf16.msra.mxu0 0
      %1750 = vmatprep.subr.bf16.mxu0 0
      %1751 = vmatpush1.bf16.msra.mxu0 0
      %1752 = vmatprep.subr.bf16.mxu0 0
      %1753 = vmatpush1.bf16.msra.mxu0 0
      %1754 = vmatprep.subr.bf16.mxu0 0
      %1755 = vmatpush1.bf16.msra.mxu0 0
      %1756 = vmatprep.subr.bf16.mxu0 0
      %1757 = vmatpush1.bf16.msra.mxu0 0
      %1758 = vmatprep.subr.bf16.mxu0 0
      %1759 = vmatpush1.bf16.msra.mxu0 0
      %1760 = vmatprep.subr.bf16.mxu0 0
      %1761 = vmatpush1.bf16.msra.mxu0 0
      %1762 = vmatprep.subr.bf16.mxu0 0
      %1763 = vmatpush1.bf16.msra.mxu0 0
      %1764 = vmatprep.subr.bf16.mxu0 0
      %1765 = vmatpush1.bf16.msra.mxu0 0
      %1766 = vmatprep.subr.bf16.mxu0 0
      %1767 = vmatpush1.bf16.msra.mxu0 0
      %1768 = vmatprep.mubr.bf16.mxu0 0
      %1769 = vmatmul.mubr.bf16.gmra.mrb[0].mxu0 %v1734
      %v1770 = vpop.f32.mrb[0].mxu0
      %v1771 = vadd.f32 0.0, %v1770
      %v1772 = vpop.f32.mrb[0].mxu0
      %v1773 = vpop.f32.mrb[0].mxu0
      %v1774 = vadd.f32 0.0, %v1773
      %v1775 = vpop.f32.mrb[0].mxu0
      %1776 = vdwg.mxu0
      %v1779 = vunpack.c.l.b16 %v1722
      %v1780 = vunpack.c.l.b16 %v1723
      %v1781 = vpack.c.b16 %v1780, %v1779
      %v1783 = vsel %vm313, %v1781, 0
      %1785 = vmatprep.subr.bf16.mxu0 0
      %1786 = vmatpush1.bf16.msra.mxu0 %v1726
      %1787 = vmatprep.subr.bf16.mxu0 0
      %1788 = vmatpush1.bf16.msra.mxu0 0
      %1789 = vmatprep.subr.bf16.mxu0 0
      %1790 = vmatpush1.bf16.msra.mxu0 0
      %1791 = vmatprep.subr.bf16.mxu0 0
      %1792 = vmatpush1.bf16.msra.mxu0 0
      %1793 = vmatprep.subr.bf16.mxu0 0
      %1794 = vmatpush1.bf16.msra.mxu0 0
      %1795 = vmatprep.subr.bf16.mxu0 0
      %1796 = vmatpush1.bf16.msra.mxu0 0
      %1797 = vmatprep.subr.bf16.mxu0 0
      %1798 = vmatpush1.bf16.msra.mxu0 0
      %1799 = vmatprep.subr.bf16.mxu0 0
      %1800 = vmatpush1.bf16.msra.mxu0 0
      %1801 = vmatprep.subr.bf16.mxu0 0
      %1802 = vmatpush1.bf16.msra.mxu0 0
      %1803 = vmatprep.subr.bf16.mxu0 0
      %1804 = vmatpush1.bf16.msra.mxu0 0
      %1805 = vmatprep.subr.bf16.mxu0 0
      %1806 = vmatpush1.bf16.msra.mxu0 0
      %1807 = vmatprep.subr.bf16.mxu0 0
      %1808 = vmatpush1.bf16.msra.mxu0 0
      %1809 = vmatprep.subr.bf16.mxu0 0
      %1810 = vmatpush1.bf16.msra.mxu0 0
      %1811 = vmatprep.subr.bf16.mxu0 0
      %1812 = vmatpush1.bf16.msra.mxu0 0
      %1813 = vmatprep.subr.bf16.mxu0 0
      %1814 = vmatpush1.bf16.msra.mxu0 0
      %1815 = vmatprep.subr.bf16.mxu0 0
      %1816 = vmatpush1.bf16.msra.mxu0 0
      %1817 = vmatprep.mubr.bf16.mxu0 0
      %1818 = vmatmul.mubr.bf16.gmra.mrb[0].mxu0 %v1783
      %v1819 = vpop.f32.mrb[0].mxu0
      %v1820 = vadd.f32 %v1771, %v1819
      %v1821 = vpop.f32.mrb[0].mxu0
      %v1822 = vpop.f32.mrb[0].mxu0
      %v1823 = vadd.f32 %v1774, %v1822
      %v1824 = vpop.f32.mrb[0].mxu0
      %1825 = vdwg.mxu0
      %v1826 = vpack.c.bf16 %v1718, %v1717
      %v1829 = vunpack.c.l.b16 %v1724
      %v1830 = vunpack.c.l.b16 %v1725
      %v1831 = vpack.c.b16 %v1830, %v1829
      %v1833 = vsel %vm313, %v1831, 0
      %1835 = vmatprep.subr.bf16.mxu0 0
      %1836 = vmatpush1.bf16.msra.mxu0 %v1826
      %1837 = vmatprep.subr.bf16.mxu0 0
      %1838 = vmatpush1.bf16.msra.mxu0 0
      %1839 = vmatprep.subr.bf16.mxu0 0
      %1840 = vmatpush1.bf16.msra.mxu0 0
      %1841 = vmatprep.subr.bf16.mxu0 0
      %1842 = vmatpush1.bf16.msra.mxu0 0
      %1843 = vmatprep.subr.bf16.mxu0 0
      %1844 = vmatpush1.bf16.msra.mxu0 0
      %1845 = vmatprep.subr.bf16.mxu0 0
      %1846 = vmatpush1.bf16.msra.mxu0 0
      %1847 = vmatprep.subr.bf16.mxu0 0
      %1848 = vmatpush1.bf16.msra.mxu0 0
      %1849 = vmatprep.subr.bf16.mxu0 0
      %1850 = vmatpush1.bf16.msra.mxu0 0
      %1851 = vmatprep.subr.bf16.mxu0 0
      %1852 = vmatpush1.bf16.msra.mxu0 0
      %1853 = vmatprep.subr.bf16.mxu0 0
      %1854 = vmatpush1.bf16.msra.mxu0 0
      %1855 = vmatprep.subr.bf16.mxu0 0
      %1856 = vmatpush1.bf16.msra.mxu0 0
      %1857 = vmatprep.subr.bf16.mxu0 0
      %1858 = vmatpush1.bf16.msra.mxu0 0
      %1859 = vmatprep.subr.bf16.mxu0 0
      %1860 = vmatpush1.bf16.msra.mxu0 0
      %1861 = vmatprep.subr.bf16.mxu0 0
      %1862 = vmatpush1.bf16.msra.mxu0 0
      %1863 = vmatprep.subr.bf16.mxu0 0
      %1864 = vmatpush1.bf16.msra.mxu0 0
      %1865 = vmatprep.subr.bf16.mxu0 0
      %1866 = vmatpush1.bf16.msra.mxu0 0
      %1867 = vmatprep.mubr.bf16.mxu0 0
      %1868 = vmatmul.mubr.bf16.gmra.mrb[0].mxu0 %v1833
      %v1869 = vpop.f32.mrb[0].mxu0
      %v1870 = vadd.f32 0.0, %v1869
      %v1871 = vpop.f32.mrb[0].mxu0
      %v1872 = vpop.f32.mrb[0].mxu0
      %v1873 = vadd.f32 0.0, %v1872
      %v1874 = vpop.f32.mrb[0].mxu0
      %1875 = vdwg.mxu0
      %v1876 = vadd.f32 %v1820, %v1870
      %v1877 = vadd.f32 %v1823, %v1873
      %s1878 = scalar_lea.vmem %s2, 112
      %v1879 = vld [vmem:[%s1878] sm:$0xff]
      %v1880 = vld [vmem:[%s1878 + $0x8] sm:$0xff]
      %1882 = vset.pattern.permute.xlu0 0
      %1883 = vperm.xlu0 %1882, %v1879
      %v1884 = vpop.permute.xlu0 %1883
      %1887 = vset.pattern.permute.xlu0 0
      %1888 = vperm.xlu0 %1887, %v1880
      %v1889 = vpop.permute.xlu0 %1888
      %v1891 = vadd.f32 %v1876, %v1884
      %v1892 = vadd.f32 %v1877, %v1889
      %v1893 = vmax.f32 %v1891, 0.0
      %v1894 = vmax.f32 %v1892, 0.0
      %1895 = vst [vmem:[#allocation2 + $0x70] sm:$0xff] %v1893
      %1896 = vst [vmem:[#allocation2 + $0x78] sm:$0xff] %v1894
      %v1897 = vsel %vm284, %v1893, 0.0
      %v1898 = vsel %vm284, %v1894, 0.0
      %1899 = vadd.xlane.f32.xlu0 %v1897
      %v1900 = vpop.xlane.xlu0 %1899
      %1901 = vadd.xlane.f32.xlu0 %v1898
      %v1902 = vpop.xlane.xlu0 %1901
      %v1903 = vmul.f32 %v486, 0.0625
      %v1904 = vmul.f32 %v488, 0.0625
      %v1905 = vmul.f32 %v688, 0.0625
      %v1906 = vmul.f32 %v690, 0.0625
      %v1907 = vmul.f32 %v890, 0.0625
      %v1908 = vmul.f32 %v892, 0.0625
      %v1909 = vmul.f32 %v1092, 0.0625
      %v1910 = vmul.f32 %v1094, 0.0625
      %v1911 = vmul.f32 %v1294, 0.0625
      %v1912 = vmul.f32 %v1296, 0.0625
      %v1913 = vmul.f32 %v1496, 0.0625
      %v1914 = vmul.f32 %v1498, 0.0625
      %v1915 = vmul.f32 %v1698, 0.0625
      %v1916 = vmul.f32 %v1700, 0.0625
      %v1917 = vmul.f32 %v1900, 0.0625
      %v1918 = vmul.f32 %v1902, 0.0625
      %v1919 = vld [vmem:[%s3] sm:$0xff]
      %v1920 = vld [vmem:[%s3 + $0x8] sm:$0xff]
      %v1921 = vld [vmem:[%s3 + $0x10] sm:$0xff]
      %v1922 = vld [vmem:[%s3 + $0x18] sm:$0xff]
      %v1923 = vld [vmem:[%s3 + $0x20] sm:$0xff]
      %v1924 = vld [vmem:[%s3 + $0x28] sm:$0xff]
      %v1925 = vld [vmem:[%s3 + $0x30] sm:$0xff]
      %v1926 = vld [vmem:[%s3 + $0x38] sm:$0xff]
      %v1927 = vld [vmem:[%s3 + $0x40] sm:$0xff]
      %v1928 = vld [vmem:[%s3 + $0x48] sm:$0xff]
      %v1929 = vld [vmem:[%s3 + $0x50] sm:$0xff]
      %v1930 = vld [vmem:[%s3 + $0x58] sm:$0xff]
      %v1931 = vld [vmem:[%s3 + $0x60] sm:$0xff]
      %v1932 = vld [vmem:[%s3 + $0x68] sm:$0xff]
      %v1933 = vld [vmem:[%s3 + $0x70] sm:$0xff]
      %v1934 = vld [vmem:[%s3 + $0x78] sm:$0xff]
      %1936 = vset.pattern.permute.xlu0 0
      %1937 = vperm.xlu0 %1936, %v1903
      %v1938 = vpop.permute.xlu0 %1937
      %1941 = vset.pattern.permute.xlu0 0
      %1942 = vperm.xlu0 %1941, %v1904
      %v1943 = vpop.permute.xlu0 %1942
      %1946 = vset.pattern.permute.xlu0 0
      %1947 = vperm.xlu0 %1946, %v1905
      %v1948 = vpop.permute.xlu0 %1947
      %1951 = vset.pattern.permute.xlu0 0
      %1952 = vperm.xlu0 %1951, %v1906
      %v1953 = vpop.permute.xlu0 %1952
      %1956 = vset.pattern.permute.xlu0 0
      %1957 = vperm.xlu0 %1956, %v1907
      %v1958 = vpop.permute.xlu0 %1957
      %1961 = vset.pattern.permute.xlu0 0
      %1962 = vperm.xlu0 %1961, %v1908
      %v1963 = vpop.permute.xlu0 %1962
      %1966 = vset.pattern.permute.xlu0 0
      %1967 = vperm.xlu0 %1966, %v1909
      %v1968 = vpop.permute.xlu0 %1967
      %1971 = vset.pattern.permute.xlu0 0
      %1972 = vperm.xlu0 %1971, %v1910
      %v1973 = vpop.permute.xlu0 %1972
      %1976 = vset.pattern.permute.xlu0 0
      %1977 = vperm.xlu0 %1976, %v1911
      %v1978 = vpop.permute.xlu0 %1977
      %1981 = vset.pattern.permute.xlu0 0
      %1982 = vperm.xlu0 %1981, %v1912
      %v1983 = vpop.permute.xlu0 %1982
      %1986 = vset.pattern.permute.xlu0 0
      %1987 = vperm.xlu0 %1986, %v1913
      %v1988 = vpop.permute.xlu0 %1987
      %1991 = vset.pattern.permute.xlu0 0
      %1992 = vperm.xlu0 %1991, %v1914
      %v1993 = vpop.permute.xlu0 %1992
      %1996 = vset.pattern.permute.xlu0 0
      %1997 = vperm.xlu0 %1996, %v1915
      %v1998 = vpop.permute.xlu0 %1997
      %2001 = vset.pattern.permute.xlu0 0
      %2002 = vperm.xlu0 %2001, %v1916
      %v2003 = vpop.permute.xlu0 %2002
      %2006 = vset.pattern.permute.xlu0 0
      %2007 = vperm.xlu0 %2006, %v1917
      %v2008 = vpop.permute.xlu0 %2007
      %2011 = vset.pattern.permute.xlu0 0
      %2012 = vperm.xlu0 %2011, %v1918
      %v2013 = vpop.permute.xlu0 %2012
      %v2015 = vmul.f32 %v1919, %v1938
      %v2016 = vmul.f32 %v1920, %v1943
      %v2017 = vmul.f32 %v1921, %v1948
      %v2018 = vmul.f32 %v1922, %v1953
      %v2019 = vmul.f32 %v1923, %v1958
      %v2020 = vmul.f32 %v1924, %v1963
      %v2021 = vmul.f32 %v1925, %v1968
      %v2022 = vmul.f32 %v1926, %v1973
      %v2023 = vmul.f32 %v1927, %v1978
      %v2024 = vmul.f32 %v1928, %v1983
      %v2025 = vmul.f32 %v1929, %v1988
      %v2026 = vmul.f32 %v1930, %v1993
      %v2027 = vmul.f32 %v1931, %v1998
      %v2028 = vmul.f32 %v1932, %v2003
      %v2029 = vmul.f32 %v1933, %v2008
      %v2030 = vmul.f32 %v1934, %v2013
      %vm2031 = vcmask 261120
      %v2032 = vsel %vm2031, %v2015, 0.0
      %v2033 = vsel %vm2031, %v2016, 0.0
      %v2034 = vadd.f32 %v2032, %v2033
      %v2035 = vsel %vm2031, %v2017, 0.0
      %v2036 = vadd.f32 %v2034, %v2035
      %v2037 = vsel %vm2031, %v2018, 0.0
      %v2038 = vadd.f32 %v2036, %v2037
      %v2039 = vsel %vm2031, %v2019, 0.0
      %v2040 = vadd.f32 %v2038, %v2039
      %v2041 = vsel %vm2031, %v2020, 0.0
      %v2042 = vadd.f32 %v2040, %v2041
      %v2043 = vsel %vm2031, %v2021, 0.0
      %v2044 = vadd.f32 %v2042, %v2043
      %v2045 = vsel %vm2031, %v2022, 0.0
      %v2046 = vadd.f32 %v2044, %v2045
      %v2047 = vsel %vm2031, %v2023, 0.0
      %v2048 = vadd.f32 %v2046, %v2047
      %v2049 = vsel %vm2031, %v2024, 0.0
      %v2050 = vadd.f32 %v2048, %v2049
      %v2051 = vsel %vm2031, %v2025, 0.0
      %v2052 = vadd.f32 %v2050, %v2051
      %v2053 = vsel %vm2031, %v2026, 0.0
      %v2054 = vadd.f32 %v2052, %v2053
      %v2055 = vsel %vm2031, %v2027, 0.0
      %v2056 = vadd.f32 %v2054, %v2055
      %v2057 = vsel %vm2031, %v2028, 0.0
      %v2058 = vadd.f32 %v2056, %v2057
      %v2059 = vsel %vm2031, %v2029, 0.0
      %v2060 = vadd.f32 %v2058, %v2059
      %v2061 = vsel %vm2031, %v2030, 0.0
      %v2062 = vadd.f32 %v2060, %v2061
      %v2063 = vrot.slane %v2062, 4
      %v2064 = vadd.f32 %v2062, %v2063
      %v2065 = vrot.slane %v2064, 2
      %v2066 = vadd.f32 %v2064, %v2065
      %v2067 = vrot.slane %v2066, 1
      %v2068 = vadd.f32 %v2066, %v2067
      %v2069 = vld [vmem:[%s4] sm:$0x1]
      %v2070 = vadd.f32 %v2068, %v2069
      %v2071 = vmax.f32 %v2070, 0.0
      %v2072 = vld [vmem:[%s5] sm:$0xff]
      %v2073 = vld [vmem:[%s5 + $0x8] sm:$0xff]
      %v2074 = vld [vmem:[%s5 + $0x10] sm:$0xff]
      %v2075 = vld [vmem:[%s5 + $0x18] sm:$0xff]
      %v2076 = vld [vmem:[%s5 + $0x20] sm:$0xff]
      %v2077 = vld [vmem:[%s5 + $0x28] sm:$0xff]
      %v2078 = vld [vmem:[%s5 + $0x30] sm:$0xff]
      %v2079 = vld [vmem:[%s5 + $0x38] sm:$0xff]
      %v2080 = vld [vmem:[%s5 + $0x40] sm:$0xff]
      %v2081 = vld [vmem:[%s5 + $0x48] sm:$0xff]
      %v2082 = vld [vmem:[%s5 + $0x50] sm:$0xff]
      %v2083 = vld [vmem:[%s5 + $0x58] sm:$0xff]
      %v2084 = vld [vmem:[%s5 + $0x60] sm:$0xff]
      %v2085 = vld [vmem:[%s5 + $0x68] sm:$0xff]
      %v2086 = vld [vmem:[%s5 + $0x70] sm:$0xff]
      %v2087 = vld [vmem:[%s5 + $0x78] sm:$0xff]
      %v2088 = vlaneseq
      %v2089 = vshrl.u32 %v2088, 7
      %v2090 = vsub.s32 0, %v2089
      %v2091 = vrot.slane %v2071, %v2090
      %v2092 = vmul.f32 %v2072, %v2091
      %v2093 = vmul.f32 %v2073, %v2091
      %v2094 = vmul.f32 %v2074, %v2091
      %v2095 = vmul.f32 %v2075, %v2091
      %v2096 = vmul.f32 %v2076, %v2091
      %v2097 = vmul.f32 %v2077, %v2091
      %v2098 = vmul.f32 %v2078, %v2091
      %v2099 = vmul.f32 %v2079, %v2091
      %v2100 = vmul.f32 %v2080, %v2091
      %v2101 = vmul.f32 %v2081, %v2091
      %v2102 = vmul.f32 %v2082, %v2091
      %v2103 = vmul.f32 %v2083, %v2091
      %v2104 = vmul.f32 %v2084, %v2091
      %v2105 = vmul.f32 %v2085, %v2091
      %v2106 = vmul.f32 %v2086, %v2091
      %v2107 = vmul.f32 %v2087, %v2091
      %v2108 = vsel %vm2031, %v2092, 0.0
      %2109 = vadd.xlane.f32.xlu0 %v2108
      %v2110 = vpop.xlane.xlu0 %2109
      %v2111 = vsel %vm2031, %v2093, 0.0
      %2112 = vadd.xlane.f32.xlu0 %v2111
      %v2113 = vpop.xlane.xlu0 %2112
      %v2114 = vsel %vm2031, %v2094, 0.0
      %2115 = vadd.xlane.f32.xlu0 %v2114
      %v2116 = vpop.xlane.xlu0 %2115
      %v2117 = vsel %vm2031, %v2095, 0.0
      %2118 = vadd.xlane.f32.xlu0 %v2117
      %v2119 = vpop.xlane.xlu0 %2118
      %v2120 = vsel %vm2031, %v2096, 0.0
      %2121 = vadd.xlane.f32.xlu0 %v2120
      %v2122 = vpop.xlane.xlu0 %2121
      %v2123 = vsel %vm2031, %v2097, 0.0
      %2124 = vadd.xlane.f32.xlu0 %v2123
      %v2125 = vpop.xlane.xlu0 %2124
      %v2126 = vsel %vm2031, %v2098, 0.0
      %2127 = vadd.xlane.f32.xlu0 %v2126
      %v2128 = vpop.xlane.xlu0 %2127
      %v2129 = vsel %vm2031, %v2099, 0.0
      %2130 = vadd.xlane.f32.xlu0 %v2129
      %v2131 = vpop.xlane.xlu0 %2130
      %v2132 = vsel %vm2031, %v2100, 0.0
      %2133 = vadd.xlane.f32.xlu0 %v2132
      %v2134 = vpop.xlane.xlu0 %2133
      %v2135 = vsel %vm2031, %v2101, 0.0
      %2136 = vadd.xlane.f32.xlu0 %v2135
      %v2137 = vpop.xlane.xlu0 %2136
      %v2138 = vsel %vm2031, %v2102, 0.0
      %2139 = vadd.xlane.f32.xlu0 %v2138
      %v2140 = vpop.xlane.xlu0 %2139
      %v2141 = vsel %vm2031, %v2103, 0.0
      %2142 = vadd.xlane.f32.xlu0 %v2141
      %v2143 = vpop.xlane.xlu0 %2142
      %v2144 = vsel %vm2031, %v2104, 0.0
      %2145 = vadd.xlane.f32.xlu0 %v2144
      %v2146 = vpop.xlane.xlu0 %2145
      %v2147 = vsel %vm2031, %v2105, 0.0
      %2148 = vadd.xlane.f32.xlu0 %v2147
      %v2149 = vpop.xlane.xlu0 %2148
      %v2150 = vsel %vm2031, %v2106, 0.0
      %2151 = vadd.xlane.f32.xlu0 %v2150
      %v2152 = vpop.xlane.xlu0 %2151
      %v2153 = vsel %vm2031, %v2107, 0.0
      %2154 = vadd.xlane.f32.xlu0 %v2153
      %v2155 = vpop.xlane.xlu0 %2154
      %v2156 = vld [vmem:[%s6] sm:$0xff]
      %v2157 = vld [vmem:[%s6 + $0x8] sm:$0xff]
      %v2158 = vld [vmem:[%s6 + $0x10] sm:$0xff]
      %v2159 = vld [vmem:[%s6 + $0x18] sm:$0xff]
      %v2160 = vld [vmem:[%s6 + $0x20] sm:$0xff]
      %v2161 = vld [vmem:[%s6 + $0x28] sm:$0xff]
      %v2162 = vld [vmem:[%s6 + $0x30] sm:$0xff]
      %v2163 = vld [vmem:[%s6 + $0x38] sm:$0xff]
      %v2164 = vld [vmem:[%s6 + $0x40] sm:$0xff]
      %v2165 = vld [vmem:[%s6 + $0x48] sm:$0xff]
      %v2166 = vld [vmem:[%s6 + $0x50] sm:$0xff]
      %v2167 = vld [vmem:[%s6 + $0x58] sm:$0xff]
      %v2168 = vld [vmem:[%s6 + $0x60] sm:$0xff]
      %v2169 = vld [vmem:[%s6 + $0x68] sm:$0xff]
      %v2170 = vld [vmem:[%s6 + $0x70] sm:$0xff]
      %v2171 = vld [vmem:[%s6 + $0x78] sm:$0xff]
      %v2172 = vadd.f32 %v2110, %v2156
      %v2173 = vadd.f32 %v2113, %v2157
      %v2174 = vadd.f32 %v2116, %v2158
      %v2175 = vadd.f32 %v2119, %v2159
      %v2176 = vadd.f32 %v2122, %v2160
      %v2177 = vadd.f32 %v2125, %v2161
      %v2178 = vadd.f32 %v2128, %v2162
      %v2179 = vadd.f32 %v2131, %v2163
      %v2180 = vadd.f32 %v2134, %v2164
      %v2181 = vadd.f32 %v2137, %v2165
      %v2182 = vadd.f32 %v2140, %v2166
      %v2183 = vadd.f32 %v2143, %v2167
      %v2184 = vadd.f32 %v2146, %v2168
      %v2185 = vadd.f32 %v2149, %v2169
      %v2186 = vadd.f32 %v2152, %v2170
      %v2187 = vadd.f32 %v2155, %v2171
      %v2188 = vxor.u32 %v2172, 2147483648
      %v2189 = vxor.u32 %v2173, 2147483648
      %v2190 = vxor.u32 %v2174, 2147483648
      %v2191 = vxor.u32 %v2175, 2147483648
      %v2192 = vxor.u32 %v2176, 2147483648
      %v2193 = vxor.u32 %v2177, 2147483648
      %v2194 = vxor.u32 %v2178, 2147483648
      %v2195 = vxor.u32 %v2179, 2147483648
      %v2196 = vxor.u32 %v2180, 2147483648
      %v2197 = vxor.u32 %v2181, 2147483648
      %v2198 = vxor.u32 %v2182, 2147483648
      %v2199 = vxor.u32 %v2183, 2147483648
      %v2200 = vxor.u32 %v2184, 2147483648
      %v2201 = vxor.u32 %v2185, 2147483648
      %v2202 = vxor.u32 %v2186, 2147483648
      %v2203 = vxor.u32 %v2187, 2147483648
      %v2204 = vmul.f32 %v2188, 1.442695
      %v2205 = vpow.pop %v2204
      %v2206 = vmul.f32 %v2189, 1.442695
      %v2207 = vpow.pop %v2206
      %v2208 = vmul.f32 %v2190, 1.442695
      %v2209 = vpow.pop %v2208
      %v2210 = vmul.f32 %v2191, 1.442695
      %v2211 = vpow.pop %v2210
      %v2212 = vmul.f32 %v2192, 1.442695
      %v2213 = vpow.pop %v2212
      %v2214 = vmul.f32 %v2193, 1.442695
      %v2215 = vpow.pop %v2214
      %v2216 = vmul.f32 %v2194, 1.442695
      %v2217 = vpow.pop %v2216
      %v2218 = vmul.f32 %v2195, 1.442695
      %v2219 = vpow.pop %v2218
      %v2220 = vmul.f32 %v2196, 1.442695
      %v2221 = vpow.pop %v2220
      %v2222 = vmul.f32 %v2197, 1.442695
      %v2223 = vpow.pop %v2222
      %v2224 = vmul.f32 %v2198, 1.442695
      %v2225 = vpow.pop %v2224
      %v2226 = vmul.f32 %v2199, 1.442695
      %v2227 = vpow.pop %v2226
      %v2228 = vmul.f32 %v2200, 1.442695
      %v2229 = vpow.pop %v2228
      %v2230 = vmul.f32 %v2201, 1.442695
      %v2231 = vpow.pop %v2230
      %v2232 = vmul.f32 %v2202, 1.442695
      %v2233 = vpow.pop %v2232
      %v2234 = vmul.f32 %v2203, 1.442695
      %v2235 = vpow.pop %v2234
      %v2236 = vadd.f32 %v2205, 1.0
      %v2237 = vadd.f32 %v2207, 1.0
      %v2238 = vadd.f32 %v2209, 1.0
      %v2239 = vadd.f32 %v2211, 1.0
      %v2240 = vadd.f32 %v2213, 1.0
      %v2241 = vadd.f32 %v2215, 1.0
      %v2242 = vadd.f32 %v2217, 1.0
      %v2243 = vadd.f32 %v2219, 1.0
      %v2244 = vadd.f32 %v2221, 1.0
      %v2245 = vadd.f32 %v2223, 1.0
      %v2246 = vadd.f32 %v2225, 1.0
      %v2247 = vadd.f32 %v2227, 1.0
      %v2248 = vadd.f32 %v2229, 1.0
      %v2249 = vadd.f32 %v2231, 1.0
      %v2250 = vadd.f32 %v2233, 1.0
      %v2251 = vadd.f32 %v2235, 1.0
      %v2252 = vrcp.pop %v2236
      %v2253 = vmul.f32 1.0, %v2252
      %v2254 = vrcp.pop %v2237
      %v2255 = vmul.f32 1.0, %v2254
      %v2256 = vrcp.pop %v2238
      %v2257 = vmul.f32 1.0, %v2256
      %v2258 = vrcp.pop %v2239
      %v2259 = vmul.f32 1.0, %v2258
      %v2260 = vrcp.pop %v2240
      %v2261 = vmul.f32 1.0, %v2260
      %v2262 = vrcp.pop %v2241
      %v2263 = vmul.f32 1.0, %v2262
      %v2264 = vrcp.pop %v2242
      %v2265 = vmul.f32 1.0, %v2264
      %v2266 = vrcp.pop %v2243
      %v2267 = vmul.f32 1.0, %v2266
      %v2268 = vrcp.pop %v2244
      %v2269 = vmul.f32 1.0, %v2268
      %v2270 = vrcp.pop %v2245
      %v2271 = vmul.f32 1.0, %v2270
      %v2272 = vrcp.pop %v2246
      %v2273 = vmul.f32 1.0, %v2272
      %v2274 = vrcp.pop %v2247
      %v2275 = vmul.f32 1.0, %v2274
      %v2276 = vrcp.pop %v2248
      %v2277 = vmul.f32 1.0, %v2276
      %v2278 = vrcp.pop %v2249
      %v2279 = vmul.f32 1.0, %v2278
      %v2280 = vrcp.pop %v2250
      %v2281 = vmul.f32 1.0, %v2280
      %v2282 = vrcp.pop %v2251
      %v2283 = vmul.f32 1.0, %v2282
      %v2284 = vld [vmem:[#allocation2] sm:$0xff]
      %v2285 = vld [vmem:[#allocation2 + $0x8] sm:$0xff]
      %v2286 = vld [vmem:[#allocation2 + $0x10] sm:$0xff]
      %v2287 = vld [vmem:[#allocation2 + $0x18] sm:$0xff]
      %v2288 = vld [vmem:[#allocation2 + $0x20] sm:$0xff]
      %v2289 = vld [vmem:[#allocation2 + $0x28] sm:$0xff]
      %v2290 = vld [vmem:[#allocation2 + $0x30] sm:$0xff]
      %v2291 = vld [vmem:[#allocation2 + $0x38] sm:$0xff]
      %v2292 = vld [vmem:[#allocation2 + $0x40] sm:$0xff]
      %v2293 = vld [vmem:[#allocation2 + $0x48] sm:$0xff]
      %v2294 = vld [vmem:[#allocation2 + $0x50] sm:$0xff]
      %v2295 = vld [vmem:[#allocation2 + $0x58] sm:$0xff]
      %v2296 = vld [vmem:[#allocation2 + $0x60] sm:$0xff]
      %v2297 = vld [vmem:[#allocation2 + $0x68] sm:$0xff]
      %v2298 = vld [vmem:[#allocation2 + $0x70] sm:$0xff]
      %v2299 = vld [vmem:[#allocation2 + $0x78] sm:$0xff]
      %2301 = vset.pattern.permute.xlu0 0
      %2302 = vperm.xlu0 %2301, %v2253
      %v2303 = vpop.permute.xlu0 %2302
      %2306 = vset.pattern.permute.xlu0 0
      %2307 = vperm.xlu0 %2306, %v2255
      %v2308 = vpop.permute.xlu0 %2307
      %2311 = vset.pattern.permute.xlu0 0
      %2312 = vperm.xlu0 %2311, %v2257
      %v2313 = vpop.permute.xlu0 %2312
      %2316 = vset.pattern.permute.xlu0 0
      %2317 = vperm.xlu0 %2316, %v2259
      %v2318 = vpop.permute.xlu0 %2317
      %2321 = vset.pattern.permute.xlu0 0
      %2322 = vperm.xlu0 %2321, %v2261
      %v2323 = vpop.permute.xlu0 %2322
      %2326 = vset.pattern.permute.xlu0 0
      %2327 = vperm.xlu0 %2326, %v2263
      %v2328 = vpop.permute.xlu0 %2327
      %2331 = vset.pattern.permute.xlu0 0
      %2332 = vperm.xlu0 %2331, %v2265
      %v2333 = vpop.permute.xlu0 %2332
      %2336 = vset.pattern.permute.xlu0 0
      %2337 = vperm.xlu0 %2336, %v2267
      %v2338 = vpop.permute.xlu0 %2337
      %2341 = vset.pattern.permute.xlu0 0
      %2342 = vperm.xlu0 %2341, %v2269
      %v2343 = vpop.permute.xlu0 %2342
      %2346 = vset.pattern.permute.xlu0 0
      %2347 = vperm.xlu0 %2346, %v2271
      %v2348 = vpop.permute.xlu0 %2347
      %2351 = vset.pattern.permute.xlu0 0
      %2352 = vperm.xlu0 %2351, %v2273
      %v2353 = vpop.permute.xlu0 %2352
      %2356 = vset.pattern.permute.xlu0 0
      %2357 = vperm.xlu0 %2356, %v2275
      %v2358 = vpop.permute.xlu0 %2357
      %2361 = vset.pattern.permute.xlu0 0
      %2362 = vperm.xlu0 %2361, %v2277
      %v2363 = vpop.permute.xlu0 %2362
      %2366 = vset.pattern.permute.xlu0 0
      %2367 = vperm.xlu0 %2366, %v2279
      %v2368 = vpop.permute.xlu0 %2367
      %2371 = vset.pattern.permute.xlu0 0
      %2372 = vperm.xlu0 %2371, %v2281
      %v2373 = vpop.permute.xlu0 %2372
      %2376 = vset.pattern.permute.xlu0 0
      %2377 = vperm.xlu0 %2376, %v2283
      %v2378 = vpop.permute.xlu0 %2377
      %v2380 = vmul.f32 %v2284, %v2303
      %v2381 = vmul.f32 %v2285, %v2308
      %v2382 = vmul.f32 %v2286, %v2313
      %v2383 = vmul.f32 %v2287, %v2318
      %v2384 = vmul.f32 %v2288, %v2323
      %v2385 = vmul.f32 %v2289, %v2328
      %v2386 = vmul.f32 %v2290, %v2333
      %v2387 = vmul.f32 %v2291, %v2338
      %v2388 = vmul.f32 %v2292, %v2343
      %v2389 = vmul.f32 %v2293, %v2348
      %v2390 = vmul.f32 %v2294, %v2353
      %v2391 = vmul.f32 %v2295, %v2358
      %v2392 = vmul.f32 %v2296, %v2363
      %v2393 = vmul.f32 %v2297, %v2368
      %v2394 = vmul.f32 %v2298, %v2373
      %v2395 = vmul.f32 %v2299, %v2378
      %v2396 = vld [vmem:[%s273] sm:$0xf]
      %v2397 = vld [vmem:[%s273 + $0x4] sm:$0xf]
      %v2398 = vld [vmem:[%s273 + $0x8] sm:$0xf]
      %v2399 = vld [vmem:[%s273 + $0xc] sm:$0xf]
      %v2400 = vld [vmem:[%s273 + $0x10] sm:$0xf]
      %v2401 = vld [vmem:[%s273 + $0x14] sm:$0xf]
      %v2402 = vld [vmem:[%s273 + $0x18] sm:$0xf]
      %v2403 = vld [vmem:[%s273 + $0x1c] sm:$0xf]
      %v2404 = vld [vmem:[%s273 + $0x20] sm:$0xf]
      %v2405 = vld [vmem:[%s273 + $0x24] sm:$0xf]
      %v2406 = vld [vmem:[%s273 + $0x28] sm:$0xf]
      %v2407 = vld [vmem:[%s273 + $0x2c] sm:$0xf]
      %v2408 = vld [vmem:[%s273 + $0x30] sm:$0xf]
      %v2409 = vld [vmem:[%s273 + $0x34] sm:$0xf]
      %v2410 = vld [vmem:[%s273 + $0x38] sm:$0xf]
      %v2411 = vld [vmem:[%s273 + $0x3c] sm:$0xf]
      %v2412 = vunpack.c.l.bf16 %v2396
      %v2413 = vunpack.c.l.bf16 %v2397
      %v2414 = vunpack.c.l.bf16 %v2398
      %v2415 = vunpack.c.l.bf16 %v2399
      %v2416 = vunpack.c.l.bf16 %v2400
      %v2417 = vunpack.c.l.bf16 %v2401
      %v2418 = vunpack.c.l.bf16 %v2402
      %v2419 = vunpack.c.l.bf16 %v2403
      %v2420 = vunpack.c.l.bf16 %v2404
      %v2421 = vunpack.c.l.bf16 %v2405
      %v2422 = vunpack.c.l.bf16 %v2406
      %v2423 = vunpack.c.l.bf16 %v2407
      %v2424 = vunpack.c.l.bf16 %v2408
      %v2425 = vunpack.c.l.bf16 %v2409
      %v2426 = vunpack.c.l.bf16 %v2410
      %v2427 = vunpack.c.l.bf16 %v2411
      %v2428 = vadd.f32 %v2380, %v2412
      %v2429 = vadd.f32 %v2381, %v2413
      %v2430 = vadd.f32 %v2382, %v2414
      %v2431 = vadd.f32 %v2383, %v2415
      %v2432 = vadd.f32 %v2384, %v2416
      %v2433 = vadd.f32 %v2385, %v2417
      %v2434 = vadd.f32 %v2386, %v2418
      %v2435 = vadd.f32 %v2387, %v2419
      %v2436 = vadd.f32 %v2388, %v2420
      %v2437 = vadd.f32 %v2389, %v2421
      %v2438 = vadd.f32 %v2390, %v2422
      %v2439 = vadd.f32 %v2391, %v2423
      %v2440 = vadd.f32 %v2392, %v2424
      %v2441 = vadd.f32 %v2393, %v2425
      %v2442 = vadd.f32 %v2394, %v2426
      %v2443 = vadd.f32 %v2395, %v2427
      %v2444 = vpack.c.bf16 %v2429, %v2428
      %v2445 = vpack.c.bf16 %v2431, %v2430
      %v2446 = vpack.c.bf16 %v2433, %v2432
      %v2447 = vpack.c.bf16 %v2435, %v2434
      %v2448 = vpack.c.bf16 %v2437, %v2436
      %v2449 = vpack.c.bf16 %v2439, %v2438
      %v2450 = vpack.c.bf16 %v2441, %v2440
      %v2451 = vpack.c.bf16 %v2443, %v2442
      %v2460 = vunpack.c.l.b16 %v2444
      %v2461 = vunpack.c.h.b16 %v2444
      %v2462 = vunpack.c.l.b16 %v2445
      %v2463 = vunpack.c.h.b16 %v2445
      %v2464 = vunpack.c.l.b16 %v2446
      %v2465 = vunpack.c.h.b16 %v2446
      %v2466 = vunpack.c.l.b16 %v2447
      %v2467 = vunpack.c.h.b16 %v2447
      %v2468 = vunpack.c.l.b16 %v2448
      %v2469 = vunpack.c.h.b16 %v2448
      %v2470 = vunpack.c.l.b16 %v2449
      %v2471 = vunpack.c.h.b16 %v2449
      %v2472 = vunpack.c.l.b16 %v2450
      %v2473 = vunpack.c.h.b16 %v2450
      %v2474 = vunpack.c.l.b16 %v2451
      %v2475 = vunpack.c.h.b16 %v2451
      %v2476 = vpack.c.b16 %v2460, %v2460
      %v2477 = vpack.c.b16 %v2461, %v2461
      %v2478 = vpack.c.b16 %v2462, %v2462
      %v2479 = vpack.c.b16 %v2463, %v2463
      %v2480 = vpack.c.b16 %v2464, %v2464
      %v2481 = vpack.c.b16 %v2465, %v2465
      %v2482 = vpack.c.b16 %v2466, %v2466
      %v2483 = vpack.c.b16 %v2467, %v2467
      %v2484 = vpack.c.b16 %v2468, %v2468
      %v2485 = vpack.c.b16 %v2469, %v2469
      %v2486 = vpack.c.b16 %v2470, %v2470
      %v2487 = vpack.c.b16 %v2471, %v2471
      %v2488 = vpack.c.b16 %v2472, %v2472
      %v2489 = vpack.c.b16 %v2473, %v2473
      %v2490 = vpack.c.b16 %v2474, %v2474
      %v2491 = vpack.c.b16 %v2475, %v2475
      %vm2508 = vcmask 125952
      %2509 = vst.msk [vmem:[%s278] sm:$0xf] %vm2508, %v2476
      %2510 = vst.msk [vmem:[%s278 + $0x4] sm:$0xf] %vm2508, %v2477
      %2511 = vst.msk [vmem:[%s278 + $0x8] sm:$0xf] %vm2508, %v2478
      %2512 = vst.msk [vmem:[%s278 + $0xc] sm:$0xf] %vm2508, %v2479
      %2513 = vst.msk [vmem:[%s278 + $0x10] sm:$0xf] %vm2508, %v2480
      %2514 = vst.msk [vmem:[%s278 + $0x14] sm:$0xf] %vm2508, %v2481
      %2515 = vst.msk [vmem:[%s278 + $0x18] sm:$0xf] %vm2508, %v2482
      %2516 = vst.msk [vmem:[%s278 + $0x1c] sm:$0xf] %vm2508, %v2483
      %2517 = vst.msk [vmem:[%s278 + $0x20] sm:$0xf] %vm2508, %v2484
      %2518 = vst.msk [vmem:[%s278 + $0x24] sm:$0xf] %vm2508, %v2485
      %2519 = vst.msk [vmem:[%s278 + $0x28] sm:$0xf] %vm2508, %v2486
      %2520 = vst.msk [vmem:[%s278 + $0x2c] sm:$0xf] %vm2508, %v2487
      %2521 = vst.msk [vmem:[%s278 + $0x30] sm:$0xf] %vm2508, %v2488
      %2522 = vst.msk [vmem:[%s278 + $0x34] sm:$0xf] %vm2508, %v2489
      %2523 = vst.msk [vmem:[%s278 + $0x38] sm:$0xf] %vm2508, %v2490
      %2524 = vst.msk [vmem:[%s278 + $0x3c] sm:$0xf] %vm2508, %v2491
      %p2525 = scmp.lt.s32.totalorder %s18, 1
      %s2526 = scalar_select %p2525, %s18, 1
      %s2527 = smul.addr %s2526, 16
      %s2528 = smul.addr %s2527, 4
      %s2529 = scalar_lea.vmem %s7, %s2528
      // Predicated region
      $region49: #{tpu_custom_call.1} parent=47 // pred_check
        %p2530 = pneg %p188
      $region50: #{tpu_custom_call.1} parent=47 // pred_check_branch
        %2532 = sbr.rel (%p2530) target = $region52
      $region51: #{tpu_custom_call.1} parent=47 // pred_region
        _
      $region52: #{tpu_custom_call.1} parent=47 // pred_fallthru
        _
    $region48: #{tpu_custom_call.1} parent=5 // pred_fallthru
      _
    %p2533 = scmp.le.s32.totalorder 2, %s13
    // Predicated region
    $region53: #{tpu_custom_call.1} parent=5 // pred_check
      %p2534 = pneg %p2533
    $region54: #{tpu_custom_call.1} parent=5 // pred_check_branch
      %2536 = sbr.rel (%p2534) target = $region56
    $region55: #{tpu_custom_call.1} parent=5 // pred_region
      %s2537 = ssub.s32 %s13, 2
      // Predicated region
      $region57: #{tpu_custom_call.1} parent=55 // pred_check
        %p2538 = pneg %p194
      $region58: #{tpu_custom_call.1} parent=55 // pred_check_branch
        %2540 = sbr.rel (%p2538) target = $region60
      $region59: #{tpu_custom_call.1} parent=55 // pred_region
        %p2541 = scmp.lt.s32.totalorder %s19, 1
        %s2542 = scalar_select %p2541, %s19, 1
        %s2543 = smul.addr %s2542, 16
        %s2544 = smul.addr %s2543, 4
        %s2545 = scalar_lea.vmem %s7, %s2544
      $region60: #{tpu_custom_call.1} parent=55 // pred_fallthru
        _
    $region56: #{tpu_custom_call.1} parent=5 // pred_fallthru
      _
  $region6: #{tpu_custom_call.1} parent=0 // loop_footer
    %s17 = sadd.s32 1, %s13
  $region7: #{tpu_custom_call.1} parent=0 // loop_footer_branch
    %12 = sbr.rel target = $region3
  $region8: #{tpu_custom_call.1} parent=0 // loop_exit
    _

</llo_original>
